<compile_context>
chip_gen: v5e
topology: v5e:2x2
jax: 0.10.0
libtpu: 0.0.40
codegen_flags: <defaults>
</compile_context>

<pallas_src>
import numpy as np
import jax
import jax.numpy as jnp
from jax import lax
from jax.experimental import pallas as pl
from jax.experimental.pallas import tpu as pltpu

# ---- small config consistent with the reference module's structure ----
N_EMBD = 128                  # reference: 768
N_HEAD = 4                    # reference: 12
HEAD_SIZE = N_EMBD // N_HEAD  # even, as asserted in the reference
N_LAYER = 2                   # reference: 8
BLOCK_SIZE = 16               # reference: 142
VOCAB = 64
VPAD = 128                    # LM-head output padded to full lane width, sliced in wrapper
EPS = 1e-5                    # torch.nn.LayerNorm default

# Matmul input dtype.  f32 keeps numerics bit-comparable with the torch reference;
# flip to jnp.bfloat16 on v6e/v7x for full-rate MXU (accumulation stays f32, all
# VPU elementwise math — softmax/LayerNorm/ReLU — stays f32 either way).
MATMUL_DTYPE = jnp.float32


def _mm(a, b):
    return jnp.dot(a.astype(MATMUL_DTYPE), b.astype(MATMUL_DTYPE),
                   preferred_element_type=jnp.float32)


def _mm_nt(a, b):
    # a @ b.T (contract last dims) without a physical transpose.
    return lax.dot_general(a.astype(MATMUL_DTYPE), b.astype(MATMUL_DTYPE),
                           (((1,), (1,)), ((), ())),
                           preferred_element_type=jnp.float32)


def _layernorm(x, g, b):
    mean = jnp.mean(x, axis=-1, keepdims=True)
    xc = x - mean
    var = jnp.mean(xc * xc, axis=-1, keepdims=True)   # biased variance, like torch
    return xc * lax.rsqrt(var + EPS) * g + b


# --------------------------- fused model kernel ---------------------------

def _lm_fused_kernel(x_ref, bias_ref, cos_ref, sin_ref, perm_ref,
                     wk_ref, wv_ref, pw_ref, pb_ref,
                     w1_ref, b1_ref, w2_ref, b2_ref,
                     ln1g_ref, ln1b_ref, ln2g_ref, ln2b_ref,
                     lnfg_ref, lnfb_ref, lmw_ref, lmb_ref,
                     o_ref):
    # x:(1,T,C)  bias:(1,1,T)  cos/sin:(T,C)  perm:(C,C)
    # wk/wv/pw:(L,C,C)  pb/b2/ln*:(L,1,C)  w1:(L,C,4C)  b1:(L,1,4C)  w2:(L,4C,C)
    # lnf g/b:(1,C)  lmw:(C,VPAD)  lmb:(1,VPAD)  o:(1,T,VPAD)
    x = x_ref[0]                                   # (T, C)
    T, C = x.shape
    scale = C ** (-0.5)                            # reference: n_embd ** -0.5

    # Causal + padding-mask additive bias, built ONCE (hoisted out of head/layer loops).
    rows = lax.broadcasted_iota(jnp.int32, (T, T), 0)
    cols = lax.broadcasted_iota(jnp.int32, (T, T), 1)
    mask_add = jnp.where(cols <= rows, jnp.float32(0.0), jnp.float32(-jnp.inf))
    mask_add = mask_add + bias_ref[0]              # (T, T)

    cos = cos_ref[...]
    sin = sin_ref[...]
    perm = perm_ref[...]

    for l in range(N_LAYER):
        # ---- attention sub-block: LN1 + fused K/V proj + RoPE + per-head attn + proj + residual
        xn = _layernorm(x, ln1g_ref[l], ln1b_ref[l])
        k = _mm(xn, wk_ref[l])                     # (T, C) — all heads in one matmul
        v = _mm(xn, wv_ref[l])                     # (T, C)
        rk = k * cos + _mm(k, perm) * sin          # RoPE at full lane width
        # Reference bug reproduced: q = rot(k); the query projection is discarded.
        pw_l = pw_ref[l]                           # (C, C), loaded once per layer
        acc = jnp.zeros((T, C), jnp.float32)
        for h in range(N_HEAD):
            s = h * HEAD_SIZE
            rk_h = rk[:, s:s + HEAD_SIZE]          # (T, H)
            wei = _mm_nt(rk_h, rk_h) * scale + mask_add
            m = jnp.max(wei, axis=-1, keepdims=True)
            p = jnp.exp(wei - m)
            probs = p * pl.reciprocal(jnp.sum(p, axis=-1, keepdims=True),
                                      approx=True)
            o_h = _mm(probs, v[:, s:s + HEAD_SIZE])            # (T, H)
            # Fold head output straight into the output projection:
            # cat(heads) @ Wp == sum_h head_h @ Wp[hH:(h+1)H, :]  (lane-dense output)
            acc = acc + _mm(o_h, pw_l[s:s + HEAD_SIZE, :])
        x = x + acc + pb_ref[l]

        # ---- FFN sub-block: LN2 + Linear/ReLU/Linear + residual
        xn = _layernorm(x, ln2g_ref[l], ln2b_ref[l])
        h1 = jnp.maximum(_mm(xn, w1_ref[l]) + b1_ref[l], 0.0)
        x = x + _mm(h1, w2_ref[l]) + b2_ref[l]

    # ---- final LayerNorm + LM head (output padded to 128 lanes)
    xf = _layernorm(x, lnfg_ref[...], lnfb_ref[...])
    o_ref[0] = _mm(xf, lmw_ref[...]) + lmb_ref[...]


def lm_forward_fused(x, bias, cos, sin, perm, p):
    B, T, C = x.shape
    L = N_LAYER
    H4 = 4 * C
    out = pl.pallas_call(
        _lm_fused_kernel,
        out_shape=jax.ShapeDtypeStruct((B, T, VPAD), jnp.float32),
        grid=(B,),
        in_specs=[
            pl.BlockSpec((1, T, C), lambda b: (b, 0, 0)),     # x
            pl.BlockSpec((1, 1, T), lambda b: (b, 0, 0)),     # attn-mask bias
            pl.BlockSpec((T, C), lambda b: (0, 0)),           # cos
            pl.BlockSpec((T, C), lambda b: (0, 0)),           # sin
            pl.BlockSpec((C, C), lambda b: (0, 0)),           # rot_half permutation
            pl.BlockSpec((L, C, C), lambda b: (0, 0, 0)),     # wk (heads packed)
            pl.BlockSpec((L, C, C), lambda b: (0, 0, 0)),     # wv (heads packed)
            pl.BlockSpec((L, C, C), lambda b: (0, 0, 0)),     # proj w
            pl.BlockSpec((L, 1, C), lambda b: (0, 0, 0)),     # proj b
            pl.BlockSpec((L, C, H4), lambda b: (0, 0, 0)),    # ffn w1
            pl.BlockSpec((L, 1, H4), lambda b: (0, 0, 0)),    # ffn b1
            pl.BlockSpec((L, H4, C), lambda b: (0, 0, 0)),    # ffn w2
            pl.BlockSpec((L, 1, C), lambda b: (0, 0, 0)),     # ffn b2
            pl.BlockSpec((L, 1, C), lambda b: (0, 0, 0)),     # ln1 gamma
            pl.BlockSpec((L, 1, C), lambda b: (0, 0, 0)),     # ln1 beta
            pl.BlockSpec((L, 1, C), lambda b: (0, 0, 0)),     # ln2 gamma
            pl.BlockSpec((L, 1, C), lambda b: (0, 0, 0)),     # ln2 beta
            pl.BlockSpec((1, C), lambda b: (0, 0)),           # final ln gamma
            pl.BlockSpec((1, C), lambda b: (0, 0)),           # final ln beta
            pl.BlockSpec((C, VPAD), lambda b: (0, 0)),        # lm head w (padded)
            pl.BlockSpec((1, VPAD), lambda b: (0, 0)),        # lm head b (padded)
        ],
        out_specs=pl.BlockSpec((1, T, VPAD), lambda b: (b, 0, 0)),
        compiler_params=pltpu.CompilerParams(
            dimension_semantics=("parallel",)),               # v7x: 2 TCs share batches
    )(x, bias, cos, sin, perm,
      p["wk"], p["wv"], p["proj_w"], p["proj_b"],
      p["w1"], p["b1"], p["w2"], p["b2"],
      p["ln1_g"], p["ln1_b"], p["ln2_g"], p["ln2_b"],
      p["lnf_g"], p["lnf_b"], p["lm_w"], p["lm_b"])
    return out


# ------------------------- parameters / constants -------------------------

def rope_tables(T):
    theta = 1.0 / (10000.0 ** (np.arange(0, HEAD_SIZE, 2, dtype=np.float32)
                               / HEAD_SIZE))
    pos = np.arange(BLOCK_SIZE, dtype=np.float32)
    freqs = pos[:, None] * theta[None, :]          # (block_size, H/2)
    freqs = np.repeat(freqs, 2, axis=1)[:T]        # pairwise duplicate -> (T, H)
    freqs = np.tile(freqs, (1, N_HEAD))            # replicate per head -> (T, C)
    return jnp.asarray(np.cos(freqs)), jnp.asarray(np.sin(freqs))


def rot_half_matrix():
    # Signed pairwise permutation over all C lanes (block-diagonal per head since
    # HEAD_SIZE is even): out[2i] = -x[2i+1], out[2i+1] = x[2i].  Exact in f32.
    P = np.zeros((N_EMBD, N_EMBD), np.float32)
    for i in range(N_EMBD // 2):
        P[2 * i + 1, 2 * i] = -1.0
        P[2 * i, 2 * i + 1] = 1.0
    return jnp.asarray(P)


def init_params(key):
    keys = jax.random.split(key, 2 + N_LAYER)

    def dense(k, fan_in, fan_out):
        k1, k2 = jax.random.split(k)
        bound = 1.0 / np.sqrt(fan_in)
        w = jax.random.uniform(k1, (fan_in, fan_out), jnp.float32, -bound, bound)
        b = jax.random.uniform(k2, (fan_out,), jnp.float32, -bound, bound)
        return w, b

    wk, wv, pw, pb, w1, b1, w2, b2 = ([] for _ in range(8))
    for l in range(N_LAYER):
        ks = jax.random.split(keys[1 + l], 5)
        # Per-head (NH, C, H) key/value projections, packed head-major into (C, C)
        # so column order matches torch.cat([head outputs], dim=-1).
        wkh = jax.random.normal(ks[0], (N_HEAD, N_EMBD, HEAD_SIZE),
                                jnp.float32) / np.sqrt(N_EMBD)
        wvh = jax.random.normal(ks[1], (N_HEAD, N_EMBD, HEAD_SIZE),
                                jnp.float32) / np.sqrt(N_EMBD)
        wk.append(jnp.transpose(wkh, (1, 0, 2)).reshape(N_EMBD, N_EMBD))
        wv.append(jnp.transpose(wvh, (1, 0, 2)).reshape(N_EMBD, N_EMBD))
        w, b = dense(ks[2], N_EMBD, N_EMBD);      pw.append(w); pb.append(b[None, :])
        w, b = dense(ks[3], N_EMBD, 4 * N_EMBD);  w1.append(w); b1.append(b[None, :])
        w, b = dense(ks[4], 4 * N_EMBD, N_EMBD);  w2.append(w); b2.append(b[None, :])

    lm_w, lm_b = dense(keys[1 + N_LAYER], N_EMBD, VOCAB)
    lm_w_pad = jnp.zeros((N_EMBD, VPAD), jnp.float32).at[:, :VOCAB].set(lm_w)
    lm_b_pad = jnp.zeros((1, VPAD), jnp.float32).at[:, :VOCAB].set(lm_b)

    ones = jnp.ones((N_LAYER, 1, N_EMBD), jnp.float32)
    zeros = jnp.zeros((N_LAYER, 1, N_EMBD), jnp.float32)
    return dict(
        embed=jax.random.normal(keys[0], (VOCAB, N_EMBD), jnp.float32),
        wk=jnp.stack(wk), wv=jnp.stack(wv),
        proj_w=jnp.stack(pw), proj_b=jnp.stack(pb),
        w1=jnp.stack(w1), b1=jnp.stack(b1),
        w2=jnp.stack(w2), b2=jnp.stack(b2),
        ln1_g=ones, ln1_b=zeros, ln2_g=ones, ln2_b=zeros,
        lnf_g=jnp.ones((1, N_EMBD), jnp.float32),
        lnf_b=jnp.zeros((1, N_EMBD), jnp.float32),
        lm_w=lm_w_pad, lm_b=lm_b_pad,
    )


# ------------------------------- forward ----------------------------------

def language_model_forward(params, idx, attn_mask=None):
    B, T = idx.shape
    # Embedding lookup: plain-JAX glue (gather has no clean BlockSpec expression).
    x = params["embed"][idx]                                   # (B, T, C)
    if attn_mask is None:
        bias = jnp.zeros((B, 1, T), jnp.float32)
    else:
        m = attn_mask.astype(jnp.float32)[:, None, :]
        bias = jnp.where(m == 0, jnp.float32(-jnp.inf), jnp.float32(0.0))
    cos, sin = rope_tables(T)
    perm = rot_half_matrix()

    logits_padded = lm_forward_fused(x, bias, cos, sin, perm, params)
    logits = logits_padded[..., :VOCAB]                        # drop lane padding
    # TODO(synk): targets/cross-entropy path and generate() sampling not implemented.
    return logits, None


if __name__ == "__main__":
    key = jax.random.PRNGKey(0)
    pkey, ikey = jax.random.split(key)
    params = init_params(pkey)

    B, T = 2, 8
    idx = jax.random.randint(ikey, (B, T), 0, VOCAB)
    # attention mask: 1 = keep, 0 = masked (last position of batch 0 masked)
    attn_mask = jnp.ones((B, T), jnp.int32).at[0, T - 1].set(0)

    fwd = jax.jit(language_model_forward)
    logits, loss = fwd(params, idx, attn_mask)
    logits = jax.block_until_ready(logits)
    assert logits.shape == (B, T, VOCAB)
    assert bool(jnp.all(jnp.isfinite(logits)))
    print("KERNEL_OK")
</pallas_src>

<mosaic_0001>
module attributes {stable_mosaic.version = 11 : i64} {
  func.func @_lm_fused_kernel(%arg0: i32, %arg1: memref<1x8x128xf32, #tpu.memory_space<vmem>>, %arg2: memref<1x1x8xf32, #tpu.memory_space<vmem>>, %arg3: memref<8x128xf32, #tpu.memory_space<vmem>>, %arg4: memref<8x128xf32, #tpu.memory_space<vmem>>, %arg5: memref<128x128xf32, #tpu.memory_space<vmem>>, %arg6: memref<2x128x128xf32, #tpu.memory_space<vmem>>, %arg7: memref<2x128x128xf32, #tpu.memory_space<vmem>>, %arg8: memref<2x128x128xf32, #tpu.memory_space<vmem>>, %arg9: memref<2x1x128xf32, #tpu.memory_space<vmem>>, %arg10: memref<2x128x512xf32, #tpu.memory_space<vmem>>, %arg11: memref<2x1x512xf32, #tpu.memory_space<vmem>>, %arg12: memref<2x512x128xf32, #tpu.memory_space<vmem>>, %arg13: memref<2x1x128xf32, #tpu.memory_space<vmem>>, %arg14: memref<2x1x128xf32, #tpu.memory_space<vmem>>, %arg15: memref<2x1x128xf32, #tpu.memory_space<vmem>>, %arg16: memref<2x1x128xf32, #tpu.memory_space<vmem>>, %arg17: memref<2x1x128xf32, #tpu.memory_space<vmem>>, %arg18: memref<1x128xf32, #tpu.memory_space<vmem>>, %arg19: memref<1x128xf32, #tpu.memory_space<vmem>>, %arg20: memref<128x128xf32, #tpu.memory_space<vmem>>, %arg21: memref<1x128xf32, #tpu.memory_space<vmem>>, %arg22: memref<1x8x128xf32, #tpu.memory_space<vmem>>) attributes {dimension_semantics = [#tpu.dimension_semantics<parallel>], iteration_bounds = array<i64: 2>, scalar_prefetch = 0 : i64, scratch_operands = 0 : i64, tpu.core_type = #tpu.core_type<tc>, window_params = [{transform_indices = @transform_0, window_bounds = array<i64: 1, 8, 128>}, {transform_indices = @transform_1, window_bounds = array<i64: 1, 1, 8>}, {pipeline_mode = #tpu.pipeline_mode<synchronous>, transform_indices = @transform_2, window_bounds = array<i64: 8, 128>}, {pipeline_mode = #tpu.pipeline_mode<synchronous>, transform_indices = @transform_3, window_bounds = array<i64: 8, 128>}, {pipeline_mode = #tpu.pipeline_mode<synchronous>, transform_indices = @transform_4, window_bounds = array<i64: 128, 128>}, {pipeline_mode = #tpu.pipeline_mode<synchronous>, transform_indices = @transform_5, window_bounds = array<i64: 2, 128, 128>}, {pipeline_mode = #tpu.pipeline_mode<synchronous>, transform_indices = @transform_6, window_bounds = array<i64: 2, 128, 128>}, {pipeline_mode = #tpu.pipeline_mode<synchronous>, transform_indices = @transform_7, window_bounds = array<i64: 2, 128, 128>}, {pipeline_mode = #tpu.pipeline_mode<synchronous>, transform_indices = @transform_8, window_bounds = array<i64: 2, 1, 128>}, {pipeline_mode = #tpu.pipeline_mode<synchronous>, transform_indices = @transform_9, window_bounds = array<i64: 2, 128, 512>}, {pipeline_mode = #tpu.pipeline_mode<synchronous>, transform_indices = @transform_10, window_bounds = array<i64: 2, 1, 512>}, {pipeline_mode = #tpu.pipeline_mode<synchronous>, transform_indices = @transform_11, window_bounds = array<i64: 2, 512, 128>}, {pipeline_mode = #tpu.pipeline_mode<synchronous>, transform_indices = @transform_12, window_bounds = array<i64: 2, 1, 128>}, {pipeline_mode = #tpu.pipeline_mode<synchronous>, transform_indices = @transform_13, window_bounds = array<i64: 2, 1, 128>}, {pipeline_mode = #tpu.pipeline_mode<synchronous>, transform_indices = @transform_14, window_bounds = array<i64: 2, 1, 128>}, {pipeline_mode = #tpu.pipeline_mode<synchronous>, transform_indices = @transform_15, window_bounds = array<i64: 2, 1, 128>}, {pipeline_mode = #tpu.pipeline_mode<synchronous>, transform_indices = @transform_16, window_bounds = array<i64: 2, 1, 128>}, {pipeline_mode = #tpu.pipeline_mode<synchronous>, transform_indices = @transform_17, window_bounds = array<i64: 1, 128>}, {pipeline_mode = #tpu.pipeline_mode<synchronous>, transform_indices = @transform_18, window_bounds = array<i64: 1, 128>}, {pipeline_mode = #tpu.pipeline_mode<synchronous>, transform_indices = @transform_19, window_bounds = array<i64: 128, 128>}, {pipeline_mode = #tpu.pipeline_mode<synchronous>, transform_indices = @transform_20, window_bounds = array<i64: 1, 128>}, {transform_indices = @transform_21, window_bounds = array<i64: 1, 8, 128>}]} {
    %c0 = arith.constant 0 : index
    %c0_0 = arith.constant 0 : index
    %c0_1 = arith.constant 0 : index
    %0 = vector.load %arg1[%c0, %c0_0, %c0_1] : memref<1x8x128xf32, #tpu.memory_space<vmem>>, vector<1x8x128xf32>
    %1 = vector.shape_cast %0 : vector<1x8x128xf32> to vector<8x128xf32>
    %2 = tpu.iota {dimensions = array<i32: 0>} : vector<8x8xi32>
    %3 = tpu.iota {dimensions = array<i32: 1>} : vector<8x8xi32>
    %4 = arith.cmpi sle, %3, %2 : vector<8x8xi32>
    %cst = arith.constant 0.000000e+00 : f32
    %cst_2 = arith.constant 0xFF800000 : f32
    %5 = vector.broadcast %cst : f32 to vector<8x8xf32>
    %6 = vector.broadcast %cst_2 : f32 to vector<8x8xf32>
    %7 = arith.select %4, %5, %6 : vector<8x8xi1>, vector<8x8xf32>
    %c0_3 = arith.constant 0 : index
    %c0_4 = arith.constant 0 : index
    %c0_5 = arith.constant 0 : index
    %8 = vector.load %arg2[%c0_3, %c0_4, %c0_5] : memref<1x1x8xf32, #tpu.memory_space<vmem>>, vector<1x1x8xf32>
    %9 = vector.shape_cast %8 : vector<1x1x8xf32> to vector<1x8xf32>
    %10 = vector.broadcast %9 : vector<1x8xf32> to vector<8x8xf32>
    %11 = arith.addf %7, %10 : vector<8x8xf32>
    %c0_6 = arith.constant 0 : index
    %c0_7 = arith.constant 0 : index
    %12 = vector.load %arg3[%c0_6, %c0_7] : memref<8x128xf32, #tpu.memory_space<vmem>>, vector<8x128xf32>
    %c0_8 = arith.constant 0 : index
    %c0_9 = arith.constant 0 : index
    %13 = vector.load %arg4[%c0_8, %c0_9] : memref<8x128xf32, #tpu.memory_space<vmem>>, vector<8x128xf32>
    %c0_10 = arith.constant 0 : index
    %c0_11 = arith.constant 0 : index
    %14 = vector.load %arg5[%c0_10, %c0_11] : memref<128x128xf32, #tpu.memory_space<vmem>>, vector<128x128xf32>
    %c0_12 = arith.constant 0 : index
    %c0_13 = arith.constant 0 : index
    %c0_14 = arith.constant 0 : index
    %15 = vector.load %arg14[%c0_12, %c0_13, %c0_14] : memref<2x1x128xf32, #tpu.memory_space<vmem>>, vector<1x1x128xf32>
    %16 = vector.shape_cast %15 : vector<1x1x128xf32> to vector<1x128xf32>
    %c0_15 = arith.constant 0 : index
    %c0_16 = arith.constant 0 : index
    %c0_17 = arith.constant 0 : index
    %17 = vector.load %arg15[%c0_15, %c0_16, %c0_17] : memref<2x1x128xf32, #tpu.memory_space<vmem>>, vector<1x1x128xf32>
    %18 = vector.shape_cast %17 : vector<1x1x128xf32> to vector<1x128xf32>
    %cst_18 = arith.constant dense<0.000000e+00> : vector<8xf32>
    %19 = vector.multi_reduction <add>, %1, %cst_18 [1] : vector<8x128xf32> to vector<8xf32>
    %20 = vector.shape_cast %19 : vector<8xf32> to vector<8x1xf32>
    %cst_19 = arith.constant 1.280000e+02 : f32
    %21 = vector.broadcast %cst_19 : f32 to vector<8x1xf32>
    %22 = arith.divf %20, %21 : vector<8x1xf32>
    %23 = vector.broadcast %22 : vector<8x1xf32> to vector<8x128xf32>
    %24 = arith.subf %1, %23 : vector<8x128xf32>
    %25 = arith.mulf %24, %24 : vector<8x128xf32>
    %cst_20 = arith.constant dense<0.000000e+00> : vector<8xf32>
    %26 = vector.multi_reduction <add>, %25, %cst_20 [1] : vector<8x128xf32> to vector<8xf32>
    %27 = vector.shape_cast %26 : vector<8xf32> to vector<8x1xf32>
    %cst_21 = arith.constant 1.280000e+02 : f32
    %28 = vector.broadcast %cst_21 : f32 to vector<8x1xf32>
    %29 = arith.divf %27, %28 : vector<8x1xf32>
    %cst_22 = arith.constant 9.99999974E-6 : f32
    %30 = vector.broadcast %cst_22 : f32 to vector<8x1xf32>
    %31 = arith.addf %29, %30 : vector<8x1xf32>
    %32 = math.rsqrt %31 : vector<8x1xf32>
    %33 = vector.broadcast %32 : vector<8x1xf32> to vector<8x128xf32>
    %34 = arith.mulf %24, %33 : vector<8x128xf32>
    %35 = vector.broadcast %16 : vector<1x128xf32> to vector<8x128xf32>
    %36 = arith.mulf %34, %35 : vector<8x128xf32>
    %37 = vector.broadcast %18 : vector<1x128xf32> to vector<8x128xf32>
    %38 = arith.addf %36, %37 : vector<8x128xf32>
    %c0_23 = arith.constant 0 : index
    %c0_24 = arith.constant 0 : index
    %c0_25 = arith.constant 0 : index
    %39 = vector.load %arg6[%c0_23, %c0_24, %c0_25] : memref<2x128x128xf32, #tpu.memory_space<vmem>>, vector<1x128x128xf32>
    %40 = vector.shape_cast %39 : vector<1x128x128xf32> to vector<128x128xf32>
    %cst_26 = arith.constant dense<0.000000e+00> : vector<8x128xf32>
    %41 = tpu.matmul %38, %40, %cst_26 {dimension_numbers = #tpu.dot_dimension_numbers<[1], [0], [0], [1], [0, 0, 1, 1], [], []>} : vector<8x128xf32>, vector<128x128xf32>, vector<8x128xf32> -> vector<8x128xf32>
    %c0_27 = arith.constant 0 : index
    %c0_28 = arith.constant 0 : index
    %c0_29 = arith.constant 0 : index
    %42 = vector.load %arg7[%c0_27, %c0_28, %c0_29] : memref<2x128x128xf32, #tpu.memory_space<vmem>>, vector<1x128x128xf32>
    %43 = vector.shape_cast %42 : vector<1x128x128xf32> to vector<128x128xf32>
    %cst_30 = arith.constant dense<0.000000e+00> : vector<8x128xf32>
    %44 = tpu.matmul %38, %43, %cst_30 {dimension_numbers = #tpu.dot_dimension_numbers<[1], [0], [0], [1], [0, 0, 1, 1], [], []>} : vector<8x128xf32>, vector<128x128xf32>, vector<8x128xf32> -> vector<8x128xf32>
    %45 = arith.mulf %41, %12 : vector<8x128xf32>
    %cst_31 = arith.constant dense<0.000000e+00> : vector<8x128xf32>
    %46 = tpu.matmul %41, %14, %cst_31 {dimension_numbers = #tpu.dot_dimension_numbers<[1], [0], [0], [1], [0, 0, 1, 1], [], []>} : vector<8x128xf32>, vector<128x128xf32>, vector<8x128xf32> -> vector<8x128xf32>
    %47 = arith.mulf %46, %13 : vector<8x128xf32>
    %48 = arith.addf %45, %47 : vector<8x128xf32>
    %c0_32 = arith.constant 0 : index
    %c0_33 = arith.constant 0 : index
    %c0_34 = arith.constant 0 : index
    %49 = vector.load %arg8[%c0_32, %c0_33, %c0_34] : memref<2x128x128xf32, #tpu.memory_space<vmem>>, vector<1x128x128xf32>
    %50 = vector.shape_cast %49 : vector<1x128x128xf32> to vector<128x128xf32>
    %cst_35 = arith.constant 0.000000e+00 : f32
    %51 = vector.broadcast %cst_35 : f32 to vector<8x128xf32>
    %52 = vector.extract_strided_slice %48 {offsets = [0, 0], sizes = [8, 32], strides = [1, 1]} : vector<8x128xf32> to vector<8x32xf32>
    %cst_36 = arith.constant dense<0.000000e+00> : vector<8x8xf32>
    %53 = tpu.matmul %52, %52, %cst_36 {dimension_numbers = #tpu.dot_dimension_numbers<[1], [1], [0], [0], [0, 0, 1, 0], [], []>} : vector<8x32xf32>, vector<8x32xf32>, vector<8x8xf32> -> vector<8x8xf32>
    %cst_37 = arith.constant 0.0883883461 : f32
    %54 = vector.broadcast %cst_37 : f32 to vector<8x8xf32>
    %55 = arith.mulf %53, %54 : vector<8x8xf32>
    %56 = arith.addf %55, %11 : vector<8x8xf32>
    %cst_38 = arith.constant dense<0xFF800000> : vector<8xf32>
    %57 = vector.multi_reduction <maximumf>, %56, %cst_38 [1] : vector<8x8xf32> to vector<8xf32>
    %58 = vector.shape_cast %57 : vector<8xf32> to vector<8x1xf32>
    %59 = vector.broadcast %58 : vector<8x1xf32> to vector<8x8xf32>
    %60 = arith.subf %56, %59 : vector<8x8xf32>
    %61 = math.exp %60 : vector<8x8xf32>
    %cst_39 = arith.constant dense<0.000000e+00> : vector<8xf32>
    %62 = vector.multi_reduction <add>, %61, %cst_39 [1] : vector<8x8xf32> to vector<8xf32>
    %63 = vector.shape_cast %62 : vector<8xf32> to vector<8x1xf32>
    %64 = tpu.reciprocal %63 {approx = true} : vector<8x1xf32> -> vector<8x1xf32>
    %65 = vector.broadcast %64 : vector<8x1xf32> to vector<8x8xf32>
    %66 = arith.mulf %61, %65 : vector<8x8xf32>
    %67 = vector.extract_strided_slice %44 {offsets = [0, 0], sizes = [8, 32], strides = [1, 1]} : vector<8x128xf32> to vector<8x32xf32>
    %cst_40 = arith.constant dense<0.000000e+00> : vector<8x32xf32>
    %68 = tpu.matmul %66, %67, %cst_40 {dimension_numbers = #tpu.dot_dimension_numbers<[1], [0], [0], [1], [0, 0, 1, 1], [], []>} : vector<8x8xf32>, vector<8x32xf32>, vector<8x32xf32> -> vector<8x32xf32>
    %69 = vector.extract_strided_slice %50 {offsets = [0, 0], sizes = [32, 128], strides = [1, 1]} : vector<128x128xf32> to vector<32x128xf32>
    %cst_41 = arith.constant dense<0.000000e+00> : vector<8x128xf32>
    %70 = tpu.matmul %68, %69, %cst_41 {dimension_numbers = #tpu.dot_dimension_numbers<[1], [0], [0], [1], [0, 0, 1, 1], [], []>} : vector<8x32xf32>, vector<32x128xf32>, vector<8x128xf32> -> vector<8x128xf32>
    %71 = arith.addf %51, %70 : vector<8x128xf32>
    %72 = vector.extract_strided_slice %48 {offsets = [0, 32], sizes = [8, 32], strides = [1, 1]} : vector<8x128xf32> to vector<8x32xf32>
    %cst_42 = arith.constant dense<0.000000e+00> : vector<8x8xf32>
    %73 = tpu.matmul %72, %72, %cst_42 {dimension_numbers = #tpu.dot_dimension_numbers<[1], [1], [0], [0], [0, 0, 1, 0], [], []>} : vector<8x32xf32>, vector<8x32xf32>, vector<8x8xf32> -> vector<8x8xf32>
    %cst_43 = arith.constant 0.0883883461 : f32
    %74 = vector.broadcast %cst_43 : f32 to vector<8x8xf32>
    %75 = arith.mulf %73, %74 : vector<8x8xf32>
    %76 = arith.addf %75, %11 : vector<8x8xf32>
    %cst_44 = arith.constant dense<0xFF800000> : vector<8xf32>
    %77 = vector.multi_reduction <maximumf>, %76, %cst_44 [1] : vector<8x8xf32> to vector<8xf32>
    %78 = vector.shape_cast %77 : vector<8xf32> to vector<8x1xf32>
    %79 = vector.broadcast %78 : vector<8x1xf32> to vector<8x8xf32>
    %80 = arith.subf %76, %79 : vector<8x8xf32>
    %81 = math.exp %80 : vector<8x8xf32>
    %cst_45 = arith.constant dense<0.000000e+00> : vector<8xf32>
    %82 = vector.multi_reduction <add>, %81, %cst_45 [1] : vector<8x8xf32> to vector<8xf32>
    %83 = vector.shape_cast %82 : vector<8xf32> to vector<8x1xf32>
    %84 = tpu.reciprocal %83 {approx = true} : vector<8x1xf32> -> vector<8x1xf32>
    %85 = vector.broadcast %84 : vector<8x1xf32> to vector<8x8xf32>
    %86 = arith.mulf %81, %85 : vector<8x8xf32>
    %87 = vector.extract_strided_slice %44 {offsets = [0, 32], sizes = [8, 32], strides = [1, 1]} : vector<8x128xf32> to vector<8x32xf32>
    %cst_46 = arith.constant dense<0.000000e+00> : vector<8x32xf32>
    %88 = tpu.matmul %86, %87, %cst_46 {dimension_numbers = #tpu.dot_dimension_numbers<[1], [0], [0], [1], [0, 0, 1, 1], [], []>} : vector<8x8xf32>, vector<8x32xf32>, vector<8x32xf32> -> vector<8x32xf32>
    %89 = vector.extract_strided_slice %50 {offsets = [32, 0], sizes = [32, 128], strides = [1, 1]} : vector<128x128xf32> to vector<32x128xf32>
    %cst_47 = arith.constant dense<0.000000e+00> : vector<8x128xf32>
    %90 = tpu.matmul %88, %89, %cst_47 {dimension_numbers = #tpu.dot_dimension_numbers<[1], [0], [0], [1], [0, 0, 1, 1], [], []>} : vector<8x32xf32>, vector<32x128xf32>, vector<8x128xf32> -> vector<8x128xf32>
    %91 = arith.addf %71, %90 : vector<8x128xf32>
    %92 = vector.extract_strided_slice %48 {offsets = [0, 64], sizes = [8, 32], strides = [1, 1]} : vector<8x128xf32> to vector<8x32xf32>
    %cst_48 = arith.constant dense<0.000000e+00> : vector<8x8xf32>
    %93 = tpu.matmul %92, %92, %cst_48 {dimension_numbers = #tpu.dot_dimension_numbers<[1], [1], [0], [0], [0, 0, 1, 0], [], []>} : vector<8x32xf32>, vector<8x32xf32>, vector<8x8xf32> -> vector<8x8xf32>
    %cst_49 = arith.constant 0.0883883461 : f32
    %94 = vector.broadcast %cst_49 : f32 to vector<8x8xf32>
    %95 = arith.mulf %93, %94 : vector<8x8xf32>
    %96 = arith.addf %95, %11 : vector<8x8xf32>
    %cst_50 = arith.constant dense<0xFF800000> : vector<8xf32>
    %97 = vector.multi_reduction <maximumf>, %96, %cst_50 [1] : vector<8x8xf32> to vector<8xf32>
    %98 = vector.shape_cast %97 : vector<8xf32> to vector<8x1xf32>
    %99 = vector.broadcast %98 : vector<8x1xf32> to vector<8x8xf32>
    %100 = arith.subf %96, %99 : vector<8x8xf32>
    %101 = math.exp %100 : vector<8x8xf32>
    %cst_51 = arith.constant dense<0.000000e+00> : vector<8xf32>
    %102 = vector.multi_reduction <add>, %101, %cst_51 [1] : vector<8x8xf32> to vector<8xf32>
    %103 = vector.shape_cast %102 : vector<8xf32> to vector<8x1xf32>
    %104 = tpu.reciprocal %103 {approx = true} : vector<8x1xf32> -> vector<8x1xf32>
    %105 = vector.broadcast %104 : vector<8x1xf32> to vector<8x8xf32>
    %106 = arith.mulf %101, %105 : vector<8x8xf32>
    %107 = vector.extract_strided_slice %44 {offsets = [0, 64], sizes = [8, 32], strides = [1, 1]} : vector<8x128xf32> to vector<8x32xf32>
    %cst_52 = arith.constant dense<0.000000e+00> : vector<8x32xf32>
    %108 = tpu.matmul %106, %107, %cst_52 {dimension_numbers = #tpu.dot_dimension_numbers<[1], [0], [0], [1], [0, 0, 1, 1], [], []>} : vector<8x8xf32>, vector<8x32xf32>, vector<8x32xf32> -> vector<8x32xf32>
    %109 = vector.extract_strided_slice %50 {offsets = [64, 0], sizes = [32, 128], strides = [1, 1]} : vector<128x128xf32> to vector<32x128xf32>
    %cst_53 = arith.constant dense<0.000000e+00> : vector<8x128xf32>
    %110 = tpu.matmul %108, %109, %cst_53 {dimension_numbers = #tpu.dot_dimension_numbers<[1], [0], [0], [1], [0, 0, 1, 1], [], []>} : vector<8x32xf32>, vector<32x128xf32>, vector<8x128xf32> -> vector<8x128xf32>
    %111 = arith.addf %91, %110 : vector<8x128xf32>
    %112 = vector.extract_strided_slice %48 {offsets = [0, 96], sizes = [8, 32], strides = [1, 1]} : vector<8x128xf32> to vector<8x32xf32>
    %cst_54 = arith.constant dense<0.000000e+00> : vector<8x8xf32>
    %113 = tpu.matmul %112, %112, %cst_54 {dimension_numbers = #tpu.dot_dimension_numbers<[1], [1], [0], [0], [0, 0, 1, 0], [], []>} : vector<8x32xf32>, vector<8x32xf32>, vector<8x8xf32> -> vector<8x8xf32>
    %cst_55 = arith.constant 0.0883883461 : f32
    %114 = vector.broadcast %cst_55 : f32 to vector<8x8xf32>
    %115 = arith.mulf %113, %114 : vector<8x8xf32>
    %116 = arith.addf %115, %11 : vector<8x8xf32>
    %cst_56 = arith.constant dense<0xFF800000> : vector<8xf32>
    %117 = vector.multi_reduction <maximumf>, %116, %cst_56 [1] : vector<8x8xf32> to vector<8xf32>
    %118 = vector.shape_cast %117 : vector<8xf32> to vector<8x1xf32>
    %119 = vector.broadcast %118 : vector<8x1xf32> to vector<8x8xf32>
    %120 = arith.subf %116, %119 : vector<8x8xf32>
    %121 = math.exp %120 : vector<8x8xf32>
    %cst_57 = arith.constant dense<0.000000e+00> : vector<8xf32>
    %122 = vector.multi_reduction <add>, %121, %cst_57 [1] : vector<8x8xf32> to vector<8xf32>
    %123 = vector.shape_cast %122 : vector<8xf32> to vector<8x1xf32>
    %124 = tpu.reciprocal %123 {approx = true} : vector<8x1xf32> -> vector<8x1xf32>
    %125 = vector.broadcast %124 : vector<8x1xf32> to vector<8x8xf32>
    %126 = arith.mulf %121, %125 : vector<8x8xf32>
    %127 = vector.extract_strided_slice %44 {offsets = [0, 96], sizes = [8, 32], strides = [1, 1]} : vector<8x128xf32> to vector<8x32xf32>
    %cst_58 = arith.constant dense<0.000000e+00> : vector<8x32xf32>
    %128 = tpu.matmul %126, %127, %cst_58 {dimension_numbers = #tpu.dot_dimension_numbers<[1], [0], [0], [1], [0, 0, 1, 1], [], []>} : vector<8x8xf32>, vector<8x32xf32>, vector<8x32xf32> -> vector<8x32xf32>
    %129 = vector.extract_strided_slice %50 {offsets = [96, 0], sizes = [32, 128], strides = [1, 1]} : vector<128x128xf32> to vector<32x128xf32>
    %cst_59 = arith.constant dense<0.000000e+00> : vector<8x128xf32>
    %130 = tpu.matmul %128, %129, %cst_59 {dimension_numbers = #tpu.dot_dimension_numbers<[1], [0], [0], [1], [0, 0, 1, 1], [], []>} : vector<8x32xf32>, vector<32x128xf32>, vector<8x128xf32> -> vector<8x128xf32>
    %131 = arith.addf %111, %130 : vector<8x128xf32>
    %132 = arith.addf %1, %131 : vector<8x128xf32>
    %c0_60 = arith.constant 0 : index
    %c0_61 = arith.constant 0 : index
    %c0_62 = arith.constant 0 : index
    %133 = vector.load %arg9[%c0_60, %c0_61, %c0_62] : memref<2x1x128xf32, #tpu.memory_space<vmem>>, vector<1x1x128xf32>
    %134 = vector.shape_cast %133 : vector<1x1x128xf32> to vector<1x128xf32>
    %135 = vector.broadcast %134 : vector<1x128xf32> to vector<8x128xf32>
    %136 = arith.addf %132, %135 : vector<8x128xf32>
    %c0_63 = arith.constant 0 : index
    %c0_64 = arith.constant 0 : index
    %c0_65 = arith.constant 0 : index
    %137 = vector.load %arg16[%c0_63, %c0_64, %c0_65] : memref<2x1x128xf32, #tpu.memory_space<vmem>>, vector<1x1x128xf32>
    %138 = vector.shape_cast %137 : vector<1x1x128xf32> to vector<1x128xf32>
    %c0_66 = arith.constant 0 : index
    %c0_67 = arith.constant 0 : index
    %c0_68 = arith.constant 0 : index
    %139 = vector.load %arg17[%c0_66, %c0_67, %c0_68] : memref<2x1x128xf32, #tpu.memory_space<vmem>>, vector<1x1x128xf32>
    %140 = vector.shape_cast %139 : vector<1x1x128xf32> to vector<1x128xf32>
    %cst_69 = arith.constant dense<0.000000e+00> : vector<8xf32>
    %141 = vector.multi_reduction <add>, %136, %cst_69 [1] : vector<8x128xf32> to vector<8xf32>
    %142 = vector.shape_cast %141 : vector<8xf32> to vector<8x1xf32>
    %cst_70 = arith.constant 1.280000e+02 : f32
    %143 = vector.broadcast %cst_70 : f32 to vector<8x1xf32>
    %144 = arith.divf %142, %143 : vector<8x1xf32>
    %145 = vector.broadcast %144 : vector<8x1xf32> to vector<8x128xf32>
    %146 = arith.subf %136, %145 : vector<8x128xf32>
    %147 = arith.mulf %146, %146 : vector<8x128xf32>
    %cst_71 = arith.constant dense<0.000000e+00> : vector<8xf32>
    %148 = vector.multi_reduction <add>, %147, %cst_71 [1] : vector<8x128xf32> to vector<8xf32>
    %149 = vector.shape_cast %148 : vector<8xf32> to vector<8x1xf32>
    %cst_72 = arith.constant 1.280000e+02 : f32
    %150 = vector.broadcast %cst_72 : f32 to vector<8x1xf32>
    %151 = arith.divf %149, %150 : vector<8x1xf32>
    %cst_73 = arith.constant 9.99999974E-6 : f32
    %152 = vector.broadcast %cst_73 : f32 to vector<8x1xf32>
    %153 = arith.addf %151, %152 : vector<8x1xf32>
    %154 = math.rsqrt %153 : vector<8x1xf32>
    %155 = vector.broadcast %154 : vector<8x1xf32> to vector<8x128xf32>
    %156 = arith.mulf %146, %155 : vector<8x128xf32>
    %157 = vector.broadcast %138 : vector<1x128xf32> to vector<8x128xf32>
    %158 = arith.mulf %156, %157 : vector<8x128xf32>
    %159 = vector.broadcast %140 : vector<1x128xf32> to vector<8x128xf32>
    %160 = arith.addf %158, %159 : vector<8x128xf32>
    %c0_74 = arith.constant 0 : index
    %c0_75 = arith.constant 0 : index
    %c0_76 = arith.constant 0 : index
    %161 = vector.load %arg10[%c0_74, %c0_75, %c0_76] : memref<2x128x512xf32, #tpu.memory_space<vmem>>, vector<1x128x512xf32>
    %162 = vector.shape_cast %161 : vector<1x128x512xf32> to vector<128x512xf32>
    %cst_77 = arith.constant dense<0.000000e+00> : vector<8x512xf32>
    %163 = tpu.matmul %160, %162, %cst_77 {dimension_numbers = #tpu.dot_dimension_numbers<[1], [0], [0], [1], [0, 0, 1, 1], [], []>} : vector<8x128xf32>, vector<128x512xf32>, vector<8x512xf32> -> vector<8x512xf32>
    %c0_78 = arith.constant 0 : index
    %c0_79 = arith.constant 0 : index
    %c0_80 = arith.constant 0 : index
    %164 = vector.load %arg11[%c0_78, %c0_79, %c0_80] : memref<2x1x512xf32, #tpu.memory_space<vmem>>, vector<1x1x512xf32>
    %165 = vector.shape_cast %164 : vector<1x1x512xf32> to vector<1x512xf32>
    %166 = vector.broadcast %165 : vector<1x512xf32> to vector<8x512xf32>
    %167 = arith.addf %163, %166 : vector<8x512xf32>
    %cst_81 = arith.constant 0.000000e+00 : f32
    %168 = vector.broadcast %cst_81 : f32 to vector<8x512xf32>
    %169 = arith.maximumf %167, %168 : vector<8x512xf32>
    %c0_82 = arith.constant 0 : index
    %c0_83 = arith.constant 0 : index
    %c0_84 = arith.constant 0 : index
    %170 = vector.load %arg12[%c0_82, %c0_83, %c0_84] : memref<2x512x128xf32, #tpu.memory_space<vmem>>, vector<1x512x128xf32>
    %171 = vector.shape_cast %170 : vector<1x512x128xf32> to vector<512x128xf32>
    %cst_85 = arith.constant dense<0.000000e+00> : vector<8x128xf32>
    %172 = tpu.matmul %169, %171, %cst_85 {dimension_numbers = #tpu.dot_dimension_numbers<[1], [0], [0], [1], [0, 0, 1, 1], [], []>} : vector<8x512xf32>, vector<512x128xf32>, vector<8x128xf32> -> vector<8x128xf32>
    %173 = arith.addf %136, %172 : vector<8x128xf32>
    %c0_86 = arith.constant 0 : index
    %c0_87 = arith.constant 0 : index
    %c0_88 = arith.constant 0 : index
    %174 = vector.load %arg13[%c0_86, %c0_87, %c0_88] : memref<2x1x128xf32, #tpu.memory_space<vmem>>, vector<1x1x128xf32>
    %175 = vector.shape_cast %174 : vector<1x1x128xf32> to vector<1x128xf32>
    %176 = vector.broadcast %175 : vector<1x128xf32> to vector<8x128xf32>
    %177 = arith.addf %173, %176 : vector<8x128xf32>
    %c1 = arith.constant 1 : index
    %c0_89 = arith.constant 0 : index
    %c0_90 = arith.constant 0 : index
    %178 = vector.load %arg14[%c1, %c0_89, %c0_90] : memref<2x1x128xf32, #tpu.memory_space<vmem>>, vector<1x1x128xf32>
    %179 = vector.shape_cast %178 : vector<1x1x128xf32> to vector<1x128xf32>
    %c1_91 = arith.constant 1 : index
    %c0_92 = arith.constant 0 : index
    %c0_93 = arith.constant 0 : index
    %180 = vector.load %arg15[%c1_91, %c0_92, %c0_93] : memref<2x1x128xf32, #tpu.memory_space<vmem>>, vector<1x1x128xf32>
    %181 = vector.shape_cast %180 : vector<1x1x128xf32> to vector<1x128xf32>
    %cst_94 = arith.constant dense<0.000000e+00> : vector<8xf32>
    %182 = vector.multi_reduction <add>, %177, %cst_94 [1] : vector<8x128xf32> to vector<8xf32>
    %183 = vector.shape_cast %182 : vector<8xf32> to vector<8x1xf32>
    %cst_95 = arith.constant 1.280000e+02 : f32
    %184 = vector.broadcast %cst_95 : f32 to vector<8x1xf32>
    %185 = arith.divf %183, %184 : vector<8x1xf32>
    %186 = vector.broadcast %185 : vector<8x1xf32> to vector<8x128xf32>
    %187 = arith.subf %177, %186 : vector<8x128xf32>
    %188 = arith.mulf %187, %187 : vector<8x128xf32>
    %cst_96 = arith.constant dense<0.000000e+00> : vector<8xf32>
    %189 = vector.multi_reduction <add>, %188, %cst_96 [1] : vector<8x128xf32> to vector<8xf32>
    %190 = vector.shape_cast %189 : vector<8xf32> to vector<8x1xf32>
    %cst_97 = arith.constant 1.280000e+02 : f32
    %191 = vector.broadcast %cst_97 : f32 to vector<8x1xf32>
    %192 = arith.divf %190, %191 : vector<8x1xf32>
    %cst_98 = arith.constant 9.99999974E-6 : f32
    %193 = vector.broadcast %cst_98 : f32 to vector<8x1xf32>
    %194 = arith.addf %192, %193 : vector<8x1xf32>
    %195 = math.rsqrt %194 : vector<8x1xf32>
    %196 = vector.broadcast %195 : vector<8x1xf32> to vector<8x128xf32>
    %197 = arith.mulf %187, %196 : vector<8x128xf32>
    %198 = vector.broadcast %179 : vector<1x128xf32> to vector<8x128xf32>
    %199 = arith.mulf %197, %198 : vector<8x128xf32>
    %200 = vector.broadcast %181 : vector<1x128xf32> to vector<8x128xf32>
    %201 = arith.addf %199, %200 : vector<8x128xf32>
    %c1_99 = arith.constant 1 : index
    %c0_100 = arith.constant 0 : index
    %c0_101 = arith.constant 0 : index
    %202 = vector.load %arg6[%c1_99, %c0_100, %c0_101] : memref<2x128x128xf32, #tpu.memory_space<vmem>>, vector<1x128x128xf32>
    %203 = vector.shape_cast %202 : vector<1x128x128xf32> to vector<128x128xf32>
    %cst_102 = arith.constant dense<0.000000e+00> : vector<8x128xf32>
    %204 = tpu.matmul %201, %203, %cst_102 {dimension_numbers = #tpu.dot_dimension_numbers<[1], [0], [0], [1], [0, 0, 1, 1], [], []>} : vector<8x128xf32>, vector<128x128xf32>, vector<8x128xf32> -> vector<8x128xf32>
    %c1_103 = arith.constant 1 : index
    %c0_104 = arith.constant 0 : index
    %c0_105 = arith.constant 0 : index
    %205 = vector.load %arg7[%c1_103, %c0_104, %c0_105] : memref<2x128x128xf32, #tpu.memory_space<vmem>>, vector<1x128x128xf32>
    %206 = vector.shape_cast %205 : vector<1x128x128xf32> to vector<128x128xf32>
    %cst_106 = arith.constant dense<0.000000e+00> : vector<8x128xf32>
    %207 = tpu.matmul %201, %206, %cst_106 {dimension_numbers = #tpu.dot_dimension_numbers<[1], [0], [0], [1], [0, 0, 1, 1], [], []>} : vector<8x128xf32>, vector<128x128xf32>, vector<8x128xf32> -> vector<8x128xf32>
    %208 = arith.mulf %204, %12 : vector<8x128xf32>
    %cst_107 = arith.constant dense<0.000000e+00> : vector<8x128xf32>
    %209 = tpu.matmul %204, %14, %cst_107 {dimension_numbers = #tpu.dot_dimension_numbers<[1], [0], [0], [1], [0, 0, 1, 1], [], []>} : vector<8x128xf32>, vector<128x128xf32>, vector<8x128xf32> -> vector<8x128xf32>
    %210 = arith.mulf %209, %13 : vector<8x128xf32>
    %211 = arith.addf %208, %210 : vector<8x128xf32>
    %c1_108 = arith.constant 1 : index
    %c0_109 = arith.constant 0 : index
    %c0_110 = arith.constant 0 : index
    %212 = vector.load %arg8[%c1_108, %c0_109, %c0_110] : memref<2x128x128xf32, #tpu.memory_space<vmem>>, vector<1x128x128xf32>
    %213 = vector.shape_cast %212 : vector<1x128x128xf32> to vector<128x128xf32>
    %cst_111 = arith.constant 0.000000e+00 : f32
    %214 = vector.broadcast %cst_111 : f32 to vector<8x128xf32>
    %215 = vector.extract_strided_slice %211 {offsets = [0, 0], sizes = [8, 32], strides = [1, 1]} : vector<8x128xf32> to vector<8x32xf32>
    %cst_112 = arith.constant dense<0.000000e+00> : vector<8x8xf32>
    %216 = tpu.matmul %215, %215, %cst_112 {dimension_numbers = #tpu.dot_dimension_numbers<[1], [1], [0], [0], [0, 0, 1, 0], [], []>} : vector<8x32xf32>, vector<8x32xf32>, vector<8x8xf32> -> vector<8x8xf32>
    %cst_113 = arith.constant 0.0883883461 : f32
    %217 = vector.broadcast %cst_113 : f32 to vector<8x8xf32>
    %218 = arith.mulf %216, %217 : vector<8x8xf32>
    %219 = arith.addf %218, %11 : vector<8x8xf32>
    %cst_114 = arith.constant dense<0xFF800000> : vector<8xf32>
    %220 = vector.multi_reduction <maximumf>, %219, %cst_114 [1] : vector<8x8xf32> to vector<8xf32>
    %221 = vector.shape_cast %220 : vector<8xf32> to vector<8x1xf32>
    %222 = vector.broadcast %221 : vector<8x1xf32> to vector<8x8xf32>
    %223 = arith.subf %219, %222 : vector<8x8xf32>
    %224 = math.exp %223 : vector<8x8xf32>
    %cst_115 = arith.constant dense<0.000000e+00> : vector<8xf32>
    %225 = vector.multi_reduction <add>, %224, %cst_115 [1] : vector<8x8xf32> to vector<8xf32>
    %226 = vector.shape_cast %225 : vector<8xf32> to vector<8x1xf32>
    %227 = tpu.reciprocal %226 {approx = true} : vector<8x1xf32> -> vector<8x1xf32>
    %228 = vector.broadcast %227 : vector<8x1xf32> to vector<8x8xf32>
    %229 = arith.mulf %224, %228 : vector<8x8xf32>
    %230 = vector.extract_strided_slice %207 {offsets = [0, 0], sizes = [8, 32], strides = [1, 1]} : vector<8x128xf32> to vector<8x32xf32>
    %cst_116 = arith.constant dense<0.000000e+00> : vector<8x32xf32>
    %231 = tpu.matmul %229, %230, %cst_116 {dimension_numbers = #tpu.dot_dimension_numbers<[1], [0], [0], [1], [0, 0, 1, 1], [], []>} : vector<8x8xf32>, vector<8x32xf32>, vector<8x32xf32> -> vector<8x32xf32>
    %232 = vector.extract_strided_slice %213 {offsets = [0, 0], sizes = [32, 128], strides = [1, 1]} : vector<128x128xf32> to vector<32x128xf32>
    %cst_117 = arith.constant dense<0.000000e+00> : vector<8x128xf32>
    %233 = tpu.matmul %231, %232, %cst_117 {dimension_numbers = #tpu.dot_dimension_numbers<[1], [0], [0], [1], [0, 0, 1, 1], [], []>} : vector<8x32xf32>, vector<32x128xf32>, vector<8x128xf32> -> vector<8x128xf32>
    %234 = arith.addf %214, %233 : vector<8x128xf32>
    %235 = vector.extract_strided_slice %211 {offsets = [0, 32], sizes = [8, 32], strides = [1, 1]} : vector<8x128xf32> to vector<8x32xf32>
    %cst_118 = arith.constant dense<0.000000e+00> : vector<8x8xf32>
    %236 = tpu.matmul %235, %235, %cst_118 {dimension_numbers = #tpu.dot_dimension_numbers<[1], [1], [0], [0], [0, 0, 1, 0], [], []>} : vector<8x32xf32>, vector<8x32xf32>, vector<8x8xf32> -> vector<8x8xf32>
    %cst_119 = arith.constant 0.0883883461 : f32
    %237 = vector.broadcast %cst_119 : f32 to vector<8x8xf32>
    %238 = arith.mulf %236, %237 : vector<8x8xf32>
    %239 = arith.addf %238, %11 : vector<8x8xf32>
    %cst_120 = arith.constant dense<0xFF800000> : vector<8xf32>
    %240 = vector.multi_reduction <maximumf>, %239, %cst_120 [1] : vector<8x8xf32> to vector<8xf32>
    %241 = vector.shape_cast %240 : vector<8xf32> to vector<8x1xf32>
    %242 = vector.broadcast %241 : vector<8x1xf32> to vector<8x8xf32>
    %243 = arith.subf %239, %242 : vector<8x8xf32>
    %244 = math.exp %243 : vector<8x8xf32>
    %cst_121 = arith.constant dense<0.000000e+00> : vector<8xf32>
    %245 = vector.multi_reduction <add>, %244, %cst_121 [1] : vector<8x8xf32> to vector<8xf32>
    %246 = vector.shape_cast %245 : vector<8xf32> to vector<8x1xf32>
    %247 = tpu.reciprocal %246 {approx = true} : vector<8x1xf32> -> vector<8x1xf32>
    %248 = vector.broadcast %247 : vector<8x1xf32> to vector<8x8xf32>
    %249 = arith.mulf %244, %248 : vector<8x8xf32>
    %250 = vector.extract_strided_slice %207 {offsets = [0, 32], sizes = [8, 32], strides = [1, 1]} : vector<8x128xf32> to vector<8x32xf32>
    %cst_122 = arith.constant dense<0.000000e+00> : vector<8x32xf32>
    %251 = tpu.matmul %249, %250, %cst_122 {dimension_numbers = #tpu.dot_dimension_numbers<[1], [0], [0], [1], [0, 0, 1, 1], [], []>} : vector<8x8xf32>, vector<8x32xf32>, vector<8x32xf32> -> vector<8x32xf32>
    %252 = vector.extract_strided_slice %213 {offsets = [32, 0], sizes = [32, 128], strides = [1, 1]} : vector<128x128xf32> to vector<32x128xf32>
    %cst_123 = arith.constant dense<0.000000e+00> : vector<8x128xf32>
    %253 = tpu.matmul %251, %252, %cst_123 {dimension_numbers = #tpu.dot_dimension_numbers<[1], [0], [0], [1], [0, 0, 1, 1], [], []>} : vector<8x32xf32>, vector<32x128xf32>, vector<8x128xf32> -> vector<8x128xf32>
    %254 = arith.addf %234, %253 : vector<8x128xf32>
    %255 = vector.extract_strided_slice %211 {offsets = [0, 64], sizes = [8, 32], strides = [1, 1]} : vector<8x128xf32> to vector<8x32xf32>
    %cst_124 = arith.constant dense<0.000000e+00> : vector<8x8xf32>
    %256 = tpu.matmul %255, %255, %cst_124 {dimension_numbers = #tpu.dot_dimension_numbers<[1], [1], [0], [0], [0, 0, 1, 0], [], []>} : vector<8x32xf32>, vector<8x32xf32>, vector<8x8xf32> -> vector<8x8xf32>
    %cst_125 = arith.constant 0.0883883461 : f32
    %257 = vector.broadcast %cst_125 : f32 to vector<8x8xf32>
    %258 = arith.mulf %256, %257 : vector<8x8xf32>
    %259 = arith.addf %258, %11 : vector<8x8xf32>
    %cst_126 = arith.constant dense<0xFF800000> : vector<8xf32>
    %260 = vector.multi_reduction <maximumf>, %259, %cst_126 [1] : vector<8x8xf32> to vector<8xf32>
    %261 = vector.shape_cast %260 : vector<8xf32> to vector<8x1xf32>
    %262 = vector.broadcast %261 : vector<8x1xf32> to vector<8x8xf32>
    %263 = arith.subf %259, %262 : vector<8x8xf32>
    %264 = math.exp %263 : vector<8x8xf32>
    %cst_127 = arith.constant dense<0.000000e+00> : vector<8xf32>
    %265 = vector.multi_reduction <add>, %264, %cst_127 [1] : vector<8x8xf32> to vector<8xf32>
    %266 = vector.shape_cast %265 : vector<8xf32> to vector<8x1xf32>
    %267 = tpu.reciprocal %266 {approx = true} : vector<8x1xf32> -> vector<8x1xf32>
    %268 = vector.broadcast %267 : vector<8x1xf32> to vector<8x8xf32>
    %269 = arith.mulf %264, %268 : vector<8x8xf32>
    %270 = vector.extract_strided_slice %207 {offsets = [0, 64], sizes = [8, 32], strides = [1, 1]} : vector<8x128xf32> to vector<8x32xf32>
    %cst_128 = arith.constant dense<0.000000e+00> : vector<8x32xf32>
    %271 = tpu.matmul %269, %270, %cst_128 {dimension_numbers = #tpu.dot_dimension_numbers<[1], [0], [0], [1], [0, 0, 1, 1], [], []>} : vector<8x8xf32>, vector<8x32xf32>, vector<8x32xf32> -> vector<8x32xf32>
    %272 = vector.extract_strided_slice %213 {offsets = [64, 0], sizes = [32, 128], strides = [1, 1]} : vector<128x128xf32> to vector<32x128xf32>
    %cst_129 = arith.constant dense<0.000000e+00> : vector<8x128xf32>
    %273 = tpu.matmul %271, %272, %cst_129 {dimension_numbers = #tpu.dot_dimension_numbers<[1], [0], [0], [1], [0, 0, 1, 1], [], []>} : vector<8x32xf32>, vector<32x128xf32>, vector<8x128xf32> -> vector<8x128xf32>
    %274 = arith.addf %254, %273 : vector<8x128xf32>
    %275 = vector.extract_strided_slice %211 {offsets = [0, 96], sizes = [8, 32], strides = [1, 1]} : vector<8x128xf32> to vector<8x32xf32>
    %cst_130 = arith.constant dense<0.000000e+00> : vector<8x8xf32>
    %276 = tpu.matmul %275, %275, %cst_130 {dimension_numbers = #tpu.dot_dimension_numbers<[1], [1], [0], [0], [0, 0, 1, 0], [], []>} : vector<8x32xf32>, vector<8x32xf32>, vector<8x8xf32> -> vector<8x8xf32>
    %cst_131 = arith.constant 0.0883883461 : f32
    %277 = vector.broadcast %cst_131 : f32 to vector<8x8xf32>
    %278 = arith.mulf %276, %277 : vector<8x8xf32>
    %279 = arith.addf %278, %11 : vector<8x8xf32>
    %cst_132 = arith.constant dense<0xFF800000> : vector<8xf32>
    %280 = vector.multi_reduction <maximumf>, %279, %cst_132 [1] : vector<8x8xf32> to vector<8xf32>
    %281 = vector.shape_cast %280 : vector<8xf32> to vector<8x1xf32>
    %282 = vector.broadcast %281 : vector<8x1xf32> to vector<8x8xf32>
    %283 = arith.subf %279, %282 : vector<8x8xf32>
    %284 = math.exp %283 : vector<8x8xf32>
    %cst_133 = arith.constant dense<0.000000e+00> : vector<8xf32>
    %285 = vector.multi_reduction <add>, %284, %cst_133 [1] : vector<8x8xf32> to vector<8xf32>
    %286 = vector.shape_cast %285 : vector<8xf32> to vector<8x1xf32>
    %287 = tpu.reciprocal %286 {approx = true} : vector<8x1xf32> -> vector<8x1xf32>
    %288 = vector.broadcast %287 : vector<8x1xf32> to vector<8x8xf32>
    %289 = arith.mulf %284, %288 : vector<8x8xf32>
    %290 = vector.extract_strided_slice %207 {offsets = [0, 96], sizes = [8, 32], strides = [1, 1]} : vector<8x128xf32> to vector<8x32xf32>
    %cst_134 = arith.constant dense<0.000000e+00> : vector<8x32xf32>
    %291 = tpu.matmul %289, %290, %cst_134 {dimension_numbers = #tpu.dot_dimension_numbers<[1], [0], [0], [1], [0, 0, 1, 1], [], []>} : vector<8x8xf32>, vector<8x32xf32>, vector<8x32xf32> -> vector<8x32xf32>
    %292 = vector.extract_strided_slice %213 {offsets = [96, 0], sizes = [32, 128], strides = [1, 1]} : vector<128x128xf32> to vector<32x128xf32>
    %cst_135 = arith.constant dense<0.000000e+00> : vector<8x128xf32>
    %293 = tpu.matmul %291, %292, %cst_135 {dimension_numbers = #tpu.dot_dimension_numbers<[1], [0], [0], [1], [0, 0, 1, 1], [], []>} : vector<8x32xf32>, vector<32x128xf32>, vector<8x128xf32> -> vector<8x128xf32>
    %294 = arith.addf %274, %293 : vector<8x128xf32>
    %295 = arith.addf %177, %294 : vector<8x128xf32>
    %c1_136 = arith.constant 1 : index
    %c0_137 = arith.constant 0 : index
    %c0_138 = arith.constant 0 : index
    %296 = vector.load %arg9[%c1_136, %c0_137, %c0_138] : memref<2x1x128xf32, #tpu.memory_space<vmem>>, vector<1x1x128xf32>
    %297 = vector.shape_cast %296 : vector<1x1x128xf32> to vector<1x128xf32>
    %298 = vector.broadcast %297 : vector<1x128xf32> to vector<8x128xf32>
    %299 = arith.addf %295, %298 : vector<8x128xf32>
    %c1_139 = arith.constant 1 : index
    %c0_140 = arith.constant 0 : index
    %c0_141 = arith.constant 0 : index
    %300 = vector.load %arg16[%c1_139, %c0_140, %c0_141] : memref<2x1x128xf32, #tpu.memory_space<vmem>>, vector<1x1x128xf32>
    %301 = vector.shape_cast %300 : vector<1x1x128xf32> to vector<1x128xf32>
    %c1_142 = arith.constant 1 : index
    %c0_143 = arith.constant 0 : index
    %c0_144 = arith.constant 0 : index
    %302 = vector.load %arg17[%c1_142, %c0_143, %c0_144] : memref<2x1x128xf32, #tpu.memory_space<vmem>>, vector<1x1x128xf32>
    %303 = vector.shape_cast %302 : vector<1x1x128xf32> to vector<1x128xf32>
    %cst_145 = arith.constant dense<0.000000e+00> : vector<8xf32>
    %304 = vector.multi_reduction <add>, %299, %cst_145 [1] : vector<8x128xf32> to vector<8xf32>
    %305 = vector.shape_cast %304 : vector<8xf32> to vector<8x1xf32>
    %cst_146 = arith.constant 1.280000e+02 : f32
    %306 = vector.broadcast %cst_146 : f32 to vector<8x1xf32>
    %307 = arith.divf %305, %306 : vector<8x1xf32>
    %308 = vector.broadcast %307 : vector<8x1xf32> to vector<8x128xf32>
    %309 = arith.subf %299, %308 : vector<8x128xf32>
    %310 = arith.mulf %309, %309 : vector<8x128xf32>
    %cst_147 = arith.constant dense<0.000000e+00> : vector<8xf32>
    %311 = vector.multi_reduction <add>, %310, %cst_147 [1] : vector<8x128xf32> to vector<8xf32>
    %312 = vector.shape_cast %311 : vector<8xf32> to vector<8x1xf32>
    %cst_148 = arith.constant 1.280000e+02 : f32
    %313 = vector.broadcast %cst_148 : f32 to vector<8x1xf32>
    %314 = arith.divf %312, %313 : vector<8x1xf32>
    %cst_149 = arith.constant 9.99999974E-6 : f32
    %315 = vector.broadcast %cst_149 : f32 to vector<8x1xf32>
    %316 = arith.addf %314, %315 : vector<8x1xf32>
    %317 = math.rsqrt %316 : vector<8x1xf32>
    %318 = vector.broadcast %317 : vector<8x1xf32> to vector<8x128xf32>
    %319 = arith.mulf %309, %318 : vector<8x128xf32>
    %320 = vector.broadcast %301 : vector<1x128xf32> to vector<8x128xf32>
    %321 = arith.mulf %319, %320 : vector<8x128xf32>
    %322 = vector.broadcast %303 : vector<1x128xf32> to vector<8x128xf32>
    %323 = arith.addf %321, %322 : vector<8x128xf32>
    %c1_150 = arith.constant 1 : index
    %c0_151 = arith.constant 0 : index
    %c0_152 = arith.constant 0 : index
    %324 = vector.load %arg10[%c1_150, %c0_151, %c0_152] : memref<2x128x512xf32, #tpu.memory_space<vmem>>, vector<1x128x512xf32>
    %325 = vector.shape_cast %324 : vector<1x128x512xf32> to vector<128x512xf32>
    %cst_153 = arith.constant dense<0.000000e+00> : vector<8x512xf32>
    %326 = tpu.matmul %323, %325, %cst_153 {dimension_numbers = #tpu.dot_dimension_numbers<[1], [0], [0], [1], [0, 0, 1, 1], [], []>} : vector<8x128xf32>, vector<128x512xf32>, vector<8x512xf32> -> vector<8x512xf32>
    %c1_154 = arith.constant 1 : index
    %c0_155 = arith.constant 0 : index
    %c0_156 = arith.constant 0 : index
    %327 = vector.load %arg11[%c1_154, %c0_155, %c0_156] : memref<2x1x512xf32, #tpu.memory_space<vmem>>, vector<1x1x512xf32>
    %328 = vector.shape_cast %327 : vector<1x1x512xf32> to vector<1x512xf32>
    %329 = vector.broadcast %328 : vector<1x512xf32> to vector<8x512xf32>
    %330 = arith.addf %326, %329 : vector<8x512xf32>
    %cst_157 = arith.constant 0.000000e+00 : f32
    %331 = vector.broadcast %cst_157 : f32 to vector<8x512xf32>
    %332 = arith.maximumf %330, %331 : vector<8x512xf32>
    %c1_158 = arith.constant 1 : index
    %c0_159 = arith.constant 0 : index
    %c0_160 = arith.constant 0 : index
    %333 = vector.load %arg12[%c1_158, %c0_159, %c0_160] : memref<2x512x128xf32, #tpu.memory_space<vmem>>, vector<1x512x128xf32>
    %334 = vector.shape_cast %333 : vector<1x512x128xf32> to vector<512x128xf32>
    %cst_161 = arith.constant dense<0.000000e+00> : vector<8x128xf32>
    %335 = tpu.matmul %332, %334, %cst_161 {dimension_numbers = #tpu.dot_dimension_numbers<[1], [0], [0], [1], [0, 0, 1, 1], [], []>} : vector<8x512xf32>, vector<512x128xf32>, vector<8x128xf32> -> vector<8x128xf32>
    %336 = arith.addf %299, %335 : vector<8x128xf32>
    %c1_162 = arith.constant 1 : index
    %c0_163 = arith.constant 0 : index
    %c0_164 = arith.constant 0 : index
    %337 = vector.load %arg13[%c1_162, %c0_163, %c0_164] : memref<2x1x128xf32, #tpu.memory_space<vmem>>, vector<1x1x128xf32>
    %338 = vector.shape_cast %337 : vector<1x1x128xf32> to vector<1x128xf32>
    %339 = vector.broadcast %338 : vector<1x128xf32> to vector<8x128xf32>
    %340 = arith.addf %336, %339 : vector<8x128xf32>
    %c0_165 = arith.constant 0 : index
    %c0_166 = arith.constant 0 : index
    %341 = vector.load %arg18[%c0_165, %c0_166] : memref<1x128xf32, #tpu.memory_space<vmem>>, vector<1x128xf32>
    %c0_167 = arith.constant 0 : index
    %c0_168 = arith.constant 0 : index
    %342 = vector.load %arg19[%c0_167, %c0_168] : memref<1x128xf32, #tpu.memory_space<vmem>>, vector<1x128xf32>
    %cst_169 = arith.constant dense<0.000000e+00> : vector<8xf32>
    %343 = vector.multi_reduction <add>, %340, %cst_169 [1] : vector<8x128xf32> to vector<8xf32>
    %344 = vector.shape_cast %343 : vector<8xf32> to vector<8x1xf32>
    %cst_170 = arith.constant 1.280000e+02 : f32
    %345 = vector.broadcast %cst_170 : f32 to vector<8x1xf32>
    %346 = arith.divf %344, %345 : vector<8x1xf32>
    %347 = vector.broadcast %346 : vector<8x1xf32> to vector<8x128xf32>
    %348 = arith.subf %340, %347 : vector<8x128xf32>
    %349 = arith.mulf %348, %348 : vector<8x128xf32>
    %cst_171 = arith.constant dense<0.000000e+00> : vector<8xf32>
    %350 = vector.multi_reduction <add>, %349, %cst_171 [1] : vector<8x128xf32> to vector<8xf32>
    %351 = vector.shape_cast %350 : vector<8xf32> to vector<8x1xf32>
    %cst_172 = arith.constant 1.280000e+02 : f32
    %352 = vector.broadcast %cst_172 : f32 to vector<8x1xf32>
    %353 = arith.divf %351, %352 : vector<8x1xf32>
    %cst_173 = arith.constant 9.99999974E-6 : f32
    %354 = vector.broadcast %cst_173 : f32 to vector<8x1xf32>
    %355 = arith.addf %353, %354 : vector<8x1xf32>
    %356 = math.rsqrt %355 : vector<8x1xf32>
    %357 = vector.broadcast %356 : vector<8x1xf32> to vector<8x128xf32>
    %358 = arith.mulf %348, %357 : vector<8x128xf32>
    %359 = vector.broadcast %341 : vector<1x128xf32> to vector<8x128xf32>
    %360 = arith.mulf %358, %359 : vector<8x128xf32>
    %361 = vector.broadcast %342 : vector<1x128xf32> to vector<8x128xf32>
    %362 = arith.addf %360, %361 : vector<8x128xf32>
    %c0_174 = arith.constant 0 : index
    %c0_175 = arith.constant 0 : index
    %363 = vector.load %arg20[%c0_174, %c0_175] : memref<128x128xf32, #tpu.memory_space<vmem>>, vector<128x128xf32>
    %cst_176 = arith.constant dense<0.000000e+00> : vector<8x128xf32>
    %364 = tpu.matmul %362, %363, %cst_176 {dimension_numbers = #tpu.dot_dimension_numbers<[1], [0], [0], [1], [0, 0, 1, 1], [], []>} : vector<8x128xf32>, vector<128x128xf32>, vector<8x128xf32> -> vector<8x128xf32>
    %c0_177 = arith.constant 0 : index
    %c0_178 = arith.constant 0 : index
    %365 = vector.load %arg21[%c0_177, %c0_178] : memref<1x128xf32, #tpu.memory_space<vmem>>, vector<1x128xf32>
    %366 = vector.broadcast %365 : vector<1x128xf32> to vector<8x128xf32>
    %367 = arith.addf %364, %366 : vector<8x128xf32>
    %c0_179 = arith.constant 0 : index
    %c0_180 = arith.constant 0 : index
    %c0_181 = arith.constant 0 : index
    %368 = vector.load %arg22[%c0_179, %c0_180, %c0_181] : memref<1x8x128xf32, #tpu.memory_space<vmem>>, vector<1x8x128xf32>
    %369 = vector.shape_cast %368 : vector<1x8x128xf32> to vector<8x128xf32>
    %370 = vector.shape_cast %367 : vector<8x128xf32> to vector<1x8x128xf32>
    tpu.vector_store %arg22[%c0_179, %c0_180, %c0_181], %370 {strides = array<i32>} : memref<1x8x128xf32, #tpu.memory_space<vmem>>, vector<1x8x128xf32>,
    return
  }
  func.func @transform_0(%arg0: i32) -> (i32, i32, i32) {
    %c0_i32 = arith.constant 0 : i32
    %c0_i32_0 = arith.constant 0 : i32
    %c0_i32_1 = arith.constant 0 : i32
    return %arg0, %c0_i32, %c0_i32_0 : i32, i32, i32
  }
  func.func @transform_1(%arg0: i32) -> (i32, i32, i32) {
    %c0_i32 = arith.constant 0 : i32
    %c0_i32_0 = arith.constant 0 : i32
    %c0_i32_1 = arith.constant 0 : i32
    return %arg0, %c0_i32, %c0_i32_0 : i32, i32, i32
  }
  func.func @transform_2(%arg0: i32) -> (i32, i32) {
    %c0_i32 = arith.constant 0 : i32
    %c0_i32_0 = arith.constant 0 : i32
    %c0_i32_1 = arith.constant 0 : i32
    return %c0_i32, %c0_i32_0 : i32, i32
  }
  func.func @transform_3(%arg0: i32) -> (i32, i32) {
    %c0_i32 = arith.constant 0 : i32
    %c0_i32_0 = arith.constant 0 : i32
    %c0_i32_1 = arith.constant 0 : i32
    return %c0_i32, %c0_i32_0 : i32, i32
  }
  func.func @transform_4(%arg0: i32) -> (i32, i32) {
    %c0_i32 = arith.constant 0 : i32
    %c0_i32_0 = arith.constant 0 : i32
    %c0_i32_1 = arith.constant 0 : i32
    return %c0_i32, %c0_i32_0 : i32, i32
  }
  func.func @transform_5(%arg0: i32) -> (i32, i32, i32) {
    %c0_i32 = arith.constant 0 : i32
    %c0_i32_0 = arith.constant 0 : i32
    %c0_i32_1 = arith.constant 0 : i32
    %c0_i32_2 = arith.constant 0 : i32
    return %c0_i32, %c0_i32_0, %c0_i32_1 : i32, i32, i32
  }
  func.func @transform_6(%arg0: i32) -> (i32, i32, i32) {
    %c0_i32 = arith.constant 0 : i32
    %c0_i32_0 = arith.constant 0 : i32
    %c0_i32_1 = arith.constant 0 : i32
    %c0_i32_2 = arith.constant 0 : i32
    return %c0_i32, %c0_i32_0, %c0_i32_1 : i32, i32, i32
  }
  func.func @transform_7(%arg0: i32) -> (i32, i32, i32) {
    %c0_i32 = arith.constant 0 : i32
    %c0_i32_0 = arith.constant 0 : i32
    %c0_i32_1 = arith.constant 0 : i32
    %c0_i32_2 = arith.constant 0 : i32
    return %c0_i32, %c0_i32_0, %c0_i32_1 : i32, i32, i32
  }
  func.func @transform_8(%arg0: i32) -> (i32, i32, i32) {
    %c0_i32 = arith.constant 0 : i32
    %c0_i32_0 = arith.constant 0 : i32
    %c0_i32_1 = arith.constant 0 : i32
    %c0_i32_2 = arith.constant 0 : i32
    return %c0_i32, %c0_i32_0, %c0_i32_1 : i32, i32, i32
  }
  func.func @transform_9(%arg0: i32) -> (i32, i32, i32) {
    %c0_i32 = arith.constant 0 : i32
    %c0_i32_0 = arith.constant 0 : i32
    %c0_i32_1 = arith.constant 0 : i32
    %c0_i32_2 = arith.constant 0 : i32
    return %c0_i32, %c0_i32_0, %c0_i32_1 : i32, i32, i32
  }
  func.func @transform_10(%arg0: i32) -> (i32, i32, i32) {
    %c0_i32 = arith.constant 0 : i32
    %c0_i32_0 = arith.constant 0 : i32
    %c0_i32_1 = arith.constant 0 : i32
    %c0_i32_2 = arith.constant 0 : i32
    return %c0_i32, %c0_i32_0, %c0_i32_1 : i32, i32, i32
  }
  func.func @transform_11(%arg0: i32) -> (i32, i32, i32) {
    %c0_i32 = arith.constant 0 : i32
    %c0_i32_0 = arith.constant 0 : i32
    %c0_i32_1 = arith.constant 0 : i32
    %c0_i32_2 = arith.constant 0 : i32
    return %c0_i32, %c0_i32_0, %c0_i32_1 : i32, i32, i32
  }
  func.func @transform_12(%arg0: i32) -> (i32, i32, i32) {
    %c0_i32 = arith.constant 0 : i32
    %c0_i32_0 = arith.constant 0 : i32
    %c0_i32_1 = arith.constant 0 : i32
    %c0_i32_2 = arith.constant 0 : i32
    return %c0_i32, %c0_i32_0, %c0_i32_1 : i32, i32, i32
  }
  func.func @transform_13(%arg0: i32) -> (i32, i32, i32) {
    %c0_i32 = arith.constant 0 : i32
    %c0_i32_0 = arith.constant 0 : i32
    %c0_i32_1 = arith.constant 0 : i32
    %c0_i32_2 = arith.constant 0 : i32
    return %c0_i32, %c0_i32_0, %c0_i32_1 : i32, i32, i32
  }
  func.func @transform_14(%arg0: i32) -> (i32, i32, i32) {
    %c0_i32 = arith.constant 0 : i32
    %c0_i32_0 = arith.constant 0 : i32
    %c0_i32_1 = arith.constant 0 : i32
    %c0_i32_2 = arith.constant 0 : i32
    return %c0_i32, %c0_i32_0, %c0_i32_1 : i32, i32, i32
  }
  func.func @transform_15(%arg0: i32) -> (i32, i32, i32) {
    %c0_i32 = arith.constant 0 : i32
    %c0_i32_0 = arith.constant 0 : i32
    %c0_i32_1 = arith.constant 0 : i32
    %c0_i32_2 = arith.constant 0 : i32
    return %c0_i32, %c0_i32_0, %c0_i32_1 : i32, i32, i32
  }
  func.func @transform_16(%arg0: i32) -> (i32, i32, i32) {
    %c0_i32 = arith.constant 0 : i32
    %c0_i32_0 = arith.constant 0 : i32
    %c0_i32_1 = arith.constant 0 : i32
    %c0_i32_2 = arith.constant 0 : i32
    return %c0_i32, %c0_i32_0, %c0_i32_1 : i32, i32, i32
  }
  func.func @transform_17(%arg0: i32) -> (i32, i32) {
    %c0_i32 = arith.constant 0 : i32
    %c0_i32_0 = arith.constant 0 : i32
    %c0_i32_1 = arith.constant 0 : i32
    return %c0_i32, %c0_i32_0 : i32, i32
  }
  func.func @transform_18(%arg0: i32) -> (i32, i32) {
    %c0_i32 = arith.constant 0 : i32
    %c0_i32_0 = arith.constant 0 : i32
    %c0_i32_1 = arith.constant 0 : i32
    return %c0_i32, %c0_i32_0 : i32, i32
  }
  func.func @transform_19(%arg0: i32) -> (i32, i32) {
    %c0_i32 = arith.constant 0 : i32
    %c0_i32_0 = arith.constant 0 : i32
    %c0_i32_1 = arith.constant 0 : i32
    return %c0_i32, %c0_i32_0 : i32, i32
  }
  func.func @transform_20(%arg0: i32) -> (i32, i32) {
    %c0_i32 = arith.constant 0 : i32
    %c0_i32_0 = arith.constant 0 : i32
    %c0_i32_1 = arith.constant 0 : i32
    return %c0_i32, %c0_i32_0 : i32, i32
  }
  func.func @transform_21(%arg0: i32) -> (i32, i32, i32) {
    %c0_i32 = arith.constant 0 : i32
    %c0_i32_0 = arith.constant 0 : i32
    %c0_i32_1 = arith.constant 0 : i32
    return %arg0, %c0_i32, %c0_i32_0 : i32, i32, i32
  }
}

</mosaic_0001>

<llo_original>
// kernel: language_model_forward.1
$region0: #{language_model_forward.1}
  #allocation0 [shape = 'u32[]', space=smem, size = 0x4, offset = 0x4, fixed_abs, tag = 'smem constant byte address 0x4 - core index']
  #allocation1 [shape = 'u32[72,128]{1,0:T(1,128)}', space=vmem, size = 0x9000, scoped, tag = 'internal scratch']
  %s0 = inlined_call_operand.vmem [shape: f32[2,8,128], index: 0, kind: input, shape index: {}]
  %s1 = inlined_call_operand.vmem [shape: f32[2,1,8], index: 1, kind: input, shape index: {}]
  %s2 = inlined_call_operand.vmem [shape: f32[8,128], index: 2, kind: input, shape index: {}]
  %s3 = inlined_call_operand.vmem [shape: f32[8,128], index: 3, kind: input, shape index: {}]
  %s4 = inlined_call_operand.hbm [shape: f32[128,128], index: 4, kind: input, shape index: {}]
  %s5 = inlined_call_operand.hbm [shape: f32[2,128,128], index: 5, kind: input, shape index: {}]
  %s6 = inlined_call_operand.hbm [shape: f32[2,128,128], index: 6, kind: input, shape index: {}]
  %s7 = inlined_call_operand.hbm [shape: f32[2,128,128], index: 7, kind: input, shape index: {}]
  %s8 = inlined_call_operand.vmem [shape: f32[2,1,128], index: 8, kind: input, shape index: {}]
  %s9 = inlined_call_operand.hbm [shape: f32[2,128,512], index: 9, kind: input, shape index: {}]
  %s10 = inlined_call_operand.vmem [shape: f32[2,1,512], index: 10, kind: input, shape index: {}]
  %s11 = inlined_call_operand.hbm [shape: f32[2,512,128], index: 11, kind: input, shape index: {}]
  %s12 = inlined_call_operand.vmem [shape: f32[2,1,128], index: 12, kind: input, shape index: {}]
  %s13 = inlined_call_operand.vmem [shape: f32[2,1,128], index: 13, kind: input, shape index: {}]
  %s14 = inlined_call_operand.vmem [shape: f32[2,1,128], index: 14, kind: input, shape index: {}]
  %s15 = inlined_call_operand.vmem [shape: f32[2,1,128], index: 15, kind: input, shape index: {}]
  %s16 = inlined_call_operand.vmem [shape: f32[2,1,128], index: 16, kind: input, shape index: {}]
  %s17 = inlined_call_operand.vmem [shape: f32[1,128], index: 17, kind: input, shape index: {}]
  %s18 = inlined_call_operand.vmem [shape: f32[1,128], index: 18, kind: input, shape index: {}]
  %s19 = inlined_call_operand.vmem [shape: f32[128,128], index: 19, kind: input, shape index: {}]
  %s20 = inlined_call_operand.vmem [shape: f32[1,128], index: 20, kind: input, shape index: {}]
  %s21 = inlined_call_operand.hbm [shape: f32[2,8,128], index: 21, kind: output, shape index: {}]
  %s22 = sld [smem:[#allocation0]]
  $region141: #{language_model_forward.1} parent=0
    _
  %s24 = ssub.s32 1, %s22
  %s25 = scalar_select 0, %s24, %s22
  $region1: #{language_model_forward.1} parent=0
    #allocation2 [shape = 'u8[65536]{0}', space=vmem, size = 0x10000, scoped, tag = 'input window, operand 4, single buffered']
    #allocation3 [shape = 's32[2]{0}', space=sflag, size = 0x8, scoped, tag = 'scoped memory for language_model_forward.1']
    #allocation4 [shape = 's32[2]{0}', space=sflag, size = 0x8, scoped, tag = 'scoped memory for language_model_forward.1']
    #allocation5 [shape = 'u8[131072]{0}', space=vmem, size = 0x20000, scoped, tag = 'input window, operand 5, single buffered']
    #allocation6 [shape = 's32[1]{0}', space=sflag, size = 0x4, scoped, tag = 'scoped memory for language_model_forward.1']
    #allocation7 [shape = 'u8[131072]{0}', space=vmem, size = 0x20000, scoped, tag = 'input window, operand 6, single buffered']
    #allocation8 [shape = 'u8[131072]{0}', space=vmem, size = 0x20000, scoped, tag = 'input window, operand 7, single buffered']
    #allocation9 [shape = 's32[1]{0}', space=sflag, size = 0x4, scoped, tag = 'scoped memory for language_model_forward.1']
    #allocation10 [shape = 'u8[524288]{0}', space=vmem, size = 0x80000, scoped, tag = 'input window, operand 9, single buffered']
    #allocation11 [shape = 'u8[524288]{0}', space=vmem, size = 0x80000, scoped, tag = 'input window, operand 11, single buffered']
    #allocation12 [shape = 's32[1]{0}', space=sflag, size = 0x4, scoped, tag = 'scoped memory for language_model_forward.1']
    #allocation13 [shape = 'u8[8192]{0}', space=vmem, size = 0x2000, scoped, tag = 'output window, operand 0']
    %26 = vsyncpa [#allocation3], 0
    %27 = vsyncpa [#allocation6], 0
    %28 = vsyncpa [#allocation9], 0
    %29 = vsyncpa [#allocation12], 0
    %30 = vsyncpa [#allocation4], 0
    %s31 = scalar_lea.sflag [#allocation4], 1
    %32 = vsyncpa %s31, 0
    loop: start=0, step=1, limit=4
    $region2: #{language_model_forward.1} parent=1 // loop_pre_header
      _
    $region3: #{language_model_forward.1} parent=1 // loop_header
      %s34 = sphi 0, %s38
      %p35 = scmp.ge.s32.totalorder %s34, 4
      %s44 = sphi 0, %s46
      %s47 = sphi 0, %s44
      %s48 = sphi 0, %s47
      %s64 = sphi 0, %s48
      %s70 = sphi 0, %s72
      %s73 = sphi 0, %s70
      %s74 = sphi 0, %s73
      %s90 = sphi 0, %s74
      %s94 = sphi 0, %s94
      %s96 = sphi 0, %s94
      %s97 = sphi 0, %s96
      %s111 = sphi 0, %s97
      %s115 = sphi 0, %s115
      %s117 = sphi 0, %s115
      %s118 = sphi 0, %s117
      %s132 = sphi 0, %s118
      %s136 = sphi 0, %s136
      %s138 = sphi 0, %s136
      %s139 = sphi 0, %s138
      %s153 = sphi 0, %s139
      %s157 = sphi 0, %s157
      %s159 = sphi 0, %s157
      %s160 = sphi 0, %s159
      %s174 = sphi 0, %s160
      %s178 = sphi 0, %s178
      %s180 = sphi 0, %s178
      %s181 = sphi 0, %s180
      %s195 = sphi 0, %s181
      %s199 = sphi 0, %s199
      %s201 = sphi 0, %s199
      %s202 = sphi 0, %s201
      %s216 = sphi 0, %s202
      %s220 = sphi 0, %s220
      %s222 = sphi 0, %s220
      %s223 = sphi 0, %s222
      %s237 = sphi 0, %s223
      %s241 = sphi 0, %s241
      %s243 = sphi 0, %s241
      %s244 = sphi 0, %s243
      %s258 = sphi 0, %s244
      %s262 = sphi 0, %s262
      %s264 = sphi 0, %s262
      %s265 = sphi 0, %s264
      %s279 = sphi 0, %s265
      %s283 = sphi 0, %s283
      %s285 = sphi 0, %s283
      %s286 = sphi 0, %s285
      %s300 = sphi 0, %s286
      %s304 = sphi 0, %s304
      %s306 = sphi 0, %s304
      %s307 = sphi 0, %s306
      %s321 = sphi 0, %s307
      %s325 = sphi 0, %s325
      %s327 = sphi 0, %s325
      %s328 = sphi 0, %s327
      %s342 = sphi 0, %s328
      %s346 = sphi 0, %s346
      %s348 = sphi 0, %s346
      %s349 = sphi 0, %s348
      %s363 = sphi 0, %s349
      %s367 = sphi 0, %s367
      %s369 = sphi 0, %s367
      %s370 = sphi 0, %s369
      %s384 = sphi 0, %s370
      %s388 = sphi 0, %s388
      %s390 = sphi 0, %s388
      %s391 = sphi 0, %s390
      %s405 = sphi 0, %s391
      %s409 = sphi 0, %s409
      %s411 = sphi 0, %s409
      %s412 = sphi 0, %s411
      %s426 = sphi 0, %s412
      %s430 = sphi 0, %s430
      %s432 = sphi 0, %s430
      %s433 = sphi 0, %s432
      %s447 = sphi 0, %s433
      %s451 = sphi 0, %s451
      %s453 = sphi 0, %s451
      %s454 = sphi 0, %s453
      %s468 = sphi 0, %s454
      %s472 = sphi 0, %s472
      %s474 = sphi 0, %s472
      %s475 = sphi 0, %s474
      %s489 = sphi 0, %s475
      %s495 = sphi 0, %s497
      %s498 = sphi 0, %s495
      %s499 = sphi 0, %s498
      %s515 = sphi 0, %s499
    $region4: #{language_model_forward.1} parent=1 // loop_header_branch
      %37 = sbr.rel (%p35) target = $region8
    $region5: #{language_model_forward.1} parent=1 // loop_body
      %s39 = ssub.s32 %s34, 1
      %s40 = ssub.s32 %s34, 2
      %s41 = sadd.s32 %s34, 1
      %s42 = ssub.s32 %s34, %s41
      %p43 = scmp.eq.s32.totalorder %s42, 0
      %s45 = sadd.s32 %s44, 1
      %s46 = scalar_select %p43, %s44, %s45
      %p49 = pneg %p43
      %p50 = scmp.eq.s32.totalorder %s34, 1
      %p51 = por %p49, %p50
      %p52 = scmp.ne.s32.totalorder %s44, %s47
      %p53 = scmp.eq.s32.totalorder %s34, 0
      %p54 = por %p52, %p53
      %p55 = scmp.ne.s32.totalorder %s44, %s47
      %p56 = scmp.eq.s32.totalorder %s39, 1
      %p57 = por %p55, %p56
      %p58 = scmp.ne.s32.totalorder %s47, %s48
      %p59 = scmp.eq.s32.totalorder %s39, 0
      %p60 = por %p58, %p59
      %p61 = scmp.ne.s32.totalorder %s47, %s48
      %p62 = scmp.eq.s32.totalorder %s40, 1
      %p63 = por %p61, %p62
      %p65 = scmp.ne.s32.totalorder %s48, %s64
      %p66 = scmp.eq.s32.totalorder %s40, 0
      %p67 = por %p65, %p66
      %s68 = ssub.s32 %s34, %s41
      %p69 = scmp.eq.s32.totalorder %s68, 0
      %s71 = sadd.s32 %s70, 1
      %s72 = scalar_select %p69, %s70, %s71
      %p75 = pneg %p69
      %p76 = scmp.eq.s32.totalorder %s34, 1
      %p77 = por %p75, %p76
      %p78 = scmp.ne.s32.totalorder %s70, %s73
      %p79 = scmp.eq.s32.totalorder %s34, 0
      %p80 = por %p78, %p79
      %p81 = scmp.ne.s32.totalorder %s70, %s73
      %p82 = scmp.eq.s32.totalorder %s39, 1
      %p83 = por %p81, %p82
      %p84 = scmp.ne.s32.totalorder %s73, %s74
      %p85 = scmp.eq.s32.totalorder %s39, 0
      %p86 = por %p84, %p85
      %p87 = scmp.ne.s32.totalorder %s73, %s74
      %p88 = scmp.eq.s32.totalorder %s40, 1
      %p89 = por %p87, %p88
      %p91 = scmp.ne.s32.totalorder %s74, %s90
      %p92 = scmp.eq.s32.totalorder %s40, 0
      %p93 = por %p91, %p92
      %s95 = sadd.s32 %s94, 1
      %p98 = scmp.eq.s32.totalorder %s34, 1
      %p99 = scmp.ne.s32.totalorder %s94, %s96
      %p100 = scmp.eq.s32.totalorder %s34, 0
      %p101 = por %p99, %p100
      %p102 = scmp.ne.s32.totalorder %s94, %s96
      %p103 = scmp.eq.s32.totalorder %s39, 1
      %p104 = por %p102, %p103
      %p105 = scmp.ne.s32.totalorder %s96, %s97
      %p106 = scmp.eq.s32.totalorder %s39, 0
      %p107 = por %p105, %p106
      %p108 = scmp.ne.s32.totalorder %s96, %s97
      %p109 = scmp.eq.s32.totalorder %s40, 1
      %p110 = por %p108, %p109
      %p112 = scmp.ne.s32.totalorder %s97, %s111
      %p113 = scmp.eq.s32.totalorder %s40, 0
      %p114 = por %p112, %p113
      %s116 = sadd.s32 %s115, 1
      %p119 = scmp.eq.s32.totalorder %s34, 1
      %p120 = scmp.ne.s32.totalorder %s115, %s117
      %p121 = scmp.eq.s32.totalorder %s34, 0
      %p122 = por %p120, %p121
      %p123 = scmp.ne.s32.totalorder %s115, %s117
      %p124 = scmp.eq.s32.totalorder %s39, 1
      %p125 = por %p123, %p124
      %p126 = scmp.ne.s32.totalorder %s117, %s118
      %p127 = scmp.eq.s32.totalorder %s39, 0
      %p128 = por %p126, %p127
      %p129 = scmp.ne.s32.totalorder %s117, %s118
      %p130 = scmp.eq.s32.totalorder %s40, 1
      %p131 = por %p129, %p130
      %p133 = scmp.ne.s32.totalorder %s118, %s132
      %p134 = scmp.eq.s32.totalorder %s40, 0
      %p135 = por %p133, %p134
      %s137 = sadd.s32 %s136, 1
      %p140 = scmp.eq.s32.totalorder %s34, 1
      %p141 = scmp.ne.s32.totalorder %s136, %s138
      %p142 = scmp.eq.s32.totalorder %s34, 0
      %p143 = por %p141, %p142
      %p144 = scmp.ne.s32.totalorder %s136, %s138
      %p145 = scmp.eq.s32.totalorder %s39, 1
      %p146 = por %p144, %p145
      %p147 = scmp.ne.s32.totalorder %s138, %s139
      %p148 = scmp.eq.s32.totalorder %s39, 0
      %p149 = por %p147, %p148
      %p150 = scmp.ne.s32.totalorder %s138, %s139
      %p151 = scmp.eq.s32.totalorder %s40, 1
      %p152 = por %p150, %p151
      %p154 = scmp.ne.s32.totalorder %s139, %s153
      %p155 = scmp.eq.s32.totalorder %s40, 0
      %p156 = por %p154, %p155
      %s158 = sadd.s32 %s157, 1
      %p161 = scmp.eq.s32.totalorder %s34, 1
      %p162 = scmp.ne.s32.totalorder %s157, %s159
      %p163 = scmp.eq.s32.totalorder %s34, 0
      %p164 = por %p162, %p163
      %p165 = scmp.ne.s32.totalorder %s157, %s159
      %p166 = scmp.eq.s32.totalorder %s39, 1
      %p167 = por %p165, %p166
      %p168 = scmp.ne.s32.totalorder %s159, %s160
      %p169 = scmp.eq.s32.totalorder %s39, 0
      %p170 = por %p168, %p169
      %p171 = scmp.ne.s32.totalorder %s159, %s160
      %p172 = scmp.eq.s32.totalorder %s40, 1
      %p173 = por %p171, %p172
      %p175 = scmp.ne.s32.totalorder %s160, %s174
      %p176 = scmp.eq.s32.totalorder %s40, 0
      %p177 = por %p175, %p176
      %s179 = sadd.s32 %s178, 1
      %p182 = scmp.eq.s32.totalorder %s34, 1
      %p183 = scmp.ne.s32.totalorder %s178, %s180
      %p184 = scmp.eq.s32.totalorder %s34, 0
      %p185 = por %p183, %p184
      %p186 = scmp.ne.s32.totalorder %s178, %s180
      %p187 = scmp.eq.s32.totalorder %s39, 1
      %p188 = por %p186, %p187
      %p189 = scmp.ne.s32.totalorder %s180, %s181
      %p190 = scmp.eq.s32.totalorder %s39, 0
      %p191 = por %p189, %p190
      %p192 = scmp.ne.s32.totalorder %s180, %s181
      %p193 = scmp.eq.s32.totalorder %s40, 1
      %p194 = por %p192, %p193
      %p196 = scmp.ne.s32.totalorder %s181, %s195
      %p197 = scmp.eq.s32.totalorder %s40, 0
      %p198 = por %p196, %p197
      %s200 = sadd.s32 %s199, 1
      %p203 = scmp.eq.s32.totalorder %s34, 1
      %p204 = scmp.ne.s32.totalorder %s199, %s201
      %p205 = scmp.eq.s32.totalorder %s34, 0
      %p206 = por %p204, %p205
      %p207 = scmp.ne.s32.totalorder %s199, %s201
      %p208 = scmp.eq.s32.totalorder %s39, 1
      %p209 = por %p207, %p208
      %p210 = scmp.ne.s32.totalorder %s201, %s202
      %p211 = scmp.eq.s32.totalorder %s39, 0
      %p212 = por %p210, %p211
      %p213 = scmp.ne.s32.totalorder %s201, %s202
      %p214 = scmp.eq.s32.totalorder %s40, 1
      %p215 = por %p213, %p214
      %p217 = scmp.ne.s32.totalorder %s202, %s216
      %p218 = scmp.eq.s32.totalorder %s40, 0
      %p219 = por %p217, %p218
      %s221 = sadd.s32 %s220, 1
      %p224 = scmp.eq.s32.totalorder %s34, 1
      %p225 = scmp.ne.s32.totalorder %s220, %s222
      %p226 = scmp.eq.s32.totalorder %s34, 0
      %p227 = por %p225, %p226
      %p228 = scmp.ne.s32.totalorder %s220, %s222
      %p229 = scmp.eq.s32.totalorder %s39, 1
      %p230 = por %p228, %p229
      %p231 = scmp.ne.s32.totalorder %s222, %s223
      %p232 = scmp.eq.s32.totalorder %s39, 0
      %p233 = por %p231, %p232
      %p234 = scmp.ne.s32.totalorder %s222, %s223
      %p235 = scmp.eq.s32.totalorder %s40, 1
      %p236 = por %p234, %p235
      %p238 = scmp.ne.s32.totalorder %s223, %s237
      %p239 = scmp.eq.s32.totalorder %s40, 0
      %p240 = por %p238, %p239
      %s242 = sadd.s32 %s241, 1
      %p245 = scmp.eq.s32.totalorder %s34, 1
      %p246 = scmp.ne.s32.totalorder %s241, %s243
      %p247 = scmp.eq.s32.totalorder %s34, 0
      %p248 = por %p246, %p247
      %p249 = scmp.ne.s32.totalorder %s241, %s243
      %p250 = scmp.eq.s32.totalorder %s39, 1
      %p251 = por %p249, %p250
      %p252 = scmp.ne.s32.totalorder %s243, %s244
      %p253 = scmp.eq.s32.totalorder %s39, 0
      %p254 = por %p252, %p253
      %p255 = scmp.ne.s32.totalorder %s243, %s244
      %p256 = scmp.eq.s32.totalorder %s40, 1
      %p257 = por %p255, %p256
      %p259 = scmp.ne.s32.totalorder %s244, %s258
      %p260 = scmp.eq.s32.totalorder %s40, 0
      %p261 = por %p259, %p260
      %s263 = sadd.s32 %s262, 1
      %p266 = scmp.eq.s32.totalorder %s34, 1
      %p267 = scmp.ne.s32.totalorder %s262, %s264
      %p268 = scmp.eq.s32.totalorder %s34, 0
      %p269 = por %p267, %p268
      %p270 = scmp.ne.s32.totalorder %s262, %s264
      %p271 = scmp.eq.s32.totalorder %s39, 1
      %p272 = por %p270, %p271
      %p273 = scmp.ne.s32.totalorder %s264, %s265
      %p274 = scmp.eq.s32.totalorder %s39, 0
      %p275 = por %p273, %p274
      %p276 = scmp.ne.s32.totalorder %s264, %s265
      %p277 = scmp.eq.s32.totalorder %s40, 1
      %p278 = por %p276, %p277
      %p280 = scmp.ne.s32.totalorder %s265, %s279
      %p281 = scmp.eq.s32.totalorder %s40, 0
      %p282 = por %p280, %p281
      %s284 = sadd.s32 %s283, 1
      %p287 = scmp.eq.s32.totalorder %s34, 1
      %p288 = scmp.ne.s32.totalorder %s283, %s285
      %p289 = scmp.eq.s32.totalorder %s34, 0
      %p290 = por %p288, %p289
      %p291 = scmp.ne.s32.totalorder %s283, %s285
      %p292 = scmp.eq.s32.totalorder %s39, 1
      %p293 = por %p291, %p292
      %p294 = scmp.ne.s32.totalorder %s285, %s286
      %p295 = scmp.eq.s32.totalorder %s39, 0
      %p296 = por %p294, %p295
      %p297 = scmp.ne.s32.totalorder %s285, %s286
      %p298 = scmp.eq.s32.totalorder %s40, 1
      %p299 = por %p297, %p298
      %p301 = scmp.ne.s32.totalorder %s286, %s300
      %p302 = scmp.eq.s32.totalorder %s40, 0
      %p303 = por %p301, %p302
      %s305 = sadd.s32 %s304, 1
      %p308 = scmp.eq.s32.totalorder %s34, 1
      %p309 = scmp.ne.s32.totalorder %s304, %s306
      %p310 = scmp.eq.s32.totalorder %s34, 0
      %p311 = por %p309, %p310
      %p312 = scmp.ne.s32.totalorder %s304, %s306
      %p313 = scmp.eq.s32.totalorder %s39, 1
      %p314 = por %p312, %p313
      %p315 = scmp.ne.s32.totalorder %s306, %s307
      %p316 = scmp.eq.s32.totalorder %s39, 0
      %p317 = por %p315, %p316
      %p318 = scmp.ne.s32.totalorder %s306, %s307
      %p319 = scmp.eq.s32.totalorder %s40, 1
      %p320 = por %p318, %p319
      %p322 = scmp.ne.s32.totalorder %s307, %s321
      %p323 = scmp.eq.s32.totalorder %s40, 0
      %p324 = por %p322, %p323
      %s326 = sadd.s32 %s325, 1
      %p329 = scmp.eq.s32.totalorder %s34, 1
      %p330 = scmp.ne.s32.totalorder %s325, %s327
      %p331 = scmp.eq.s32.totalorder %s34, 0
      %p332 = por %p330, %p331
      %p333 = scmp.ne.s32.totalorder %s325, %s327
      %p334 = scmp.eq.s32.totalorder %s39, 1
      %p335 = por %p333, %p334
      %p336 = scmp.ne.s32.totalorder %s327, %s328
      %p337 = scmp.eq.s32.totalorder %s39, 0
      %p338 = por %p336, %p337
      %p339 = scmp.ne.s32.totalorder %s327, %s328
      %p340 = scmp.eq.s32.totalorder %s40, 1
      %p341 = por %p339, %p340
      %p343 = scmp.ne.s32.totalorder %s328, %s342
      %p344 = scmp.eq.s32.totalorder %s40, 0
      %p345 = por %p343, %p344
      %s347 = sadd.s32 %s346, 1
      %p350 = scmp.eq.s32.totalorder %s34, 1
      %p351 = scmp.ne.s32.totalorder %s346, %s348
      %p352 = scmp.eq.s32.totalorder %s34, 0
      %p353 = por %p351, %p352
      %p354 = scmp.ne.s32.totalorder %s346, %s348
      %p355 = scmp.eq.s32.totalorder %s39, 1
      %p356 = por %p354, %p355
      %p357 = scmp.ne.s32.totalorder %s348, %s349
      %p358 = scmp.eq.s32.totalorder %s39, 0
      %p359 = por %p357, %p358
      %p360 = scmp.ne.s32.totalorder %s348, %s349
      %p361 = scmp.eq.s32.totalorder %s40, 1
      %p362 = por %p360, %p361
      %p364 = scmp.ne.s32.totalorder %s349, %s363
      %p365 = scmp.eq.s32.totalorder %s40, 0
      %p366 = por %p364, %p365
      %s368 = sadd.s32 %s367, 1
      %p371 = scmp.eq.s32.totalorder %s34, 1
      %p372 = scmp.ne.s32.totalorder %s367, %s369
      %p373 = scmp.eq.s32.totalorder %s34, 0
      %p374 = por %p372, %p373
      %p375 = scmp.ne.s32.totalorder %s367, %s369
      %p376 = scmp.eq.s32.totalorder %s39, 1
      %p377 = por %p375, %p376
      %p378 = scmp.ne.s32.totalorder %s369, %s370
      %p379 = scmp.eq.s32.totalorder %s39, 0
      %p380 = por %p378, %p379
      %p381 = scmp.ne.s32.totalorder %s369, %s370
      %p382 = scmp.eq.s32.totalorder %s40, 1
      %p383 = por %p381, %p382
      %p385 = scmp.ne.s32.totalorder %s370, %s384
      %p386 = scmp.eq.s32.totalorder %s40, 0
      %p387 = por %p385, %p386
      %s389 = sadd.s32 %s388, 1
      %p392 = scmp.eq.s32.totalorder %s34, 1
      %p393 = scmp.ne.s32.totalorder %s388, %s390
      %p394 = scmp.eq.s32.totalorder %s34, 0
      %p395 = por %p393, %p394
      %p396 = scmp.ne.s32.totalorder %s388, %s390
      %p397 = scmp.eq.s32.totalorder %s39, 1
      %p398 = por %p396, %p397
      %p399 = scmp.ne.s32.totalorder %s390, %s391
      %p400 = scmp.eq.s32.totalorder %s39, 0
      %p401 = por %p399, %p400
      %p402 = scmp.ne.s32.totalorder %s390, %s391
      %p403 = scmp.eq.s32.totalorder %s40, 1
      %p404 = por %p402, %p403
      %p406 = scmp.ne.s32.totalorder %s391, %s405
      %p407 = scmp.eq.s32.totalorder %s40, 0
      %p408 = por %p406, %p407
      %s410 = sadd.s32 %s409, 1
      %p413 = scmp.eq.s32.totalorder %s34, 1
      %p414 = scmp.ne.s32.totalorder %s409, %s411
      %p415 = scmp.eq.s32.totalorder %s34, 0
      %p416 = por %p414, %p415
      %p417 = scmp.ne.s32.totalorder %s409, %s411
      %p418 = scmp.eq.s32.totalorder %s39, 1
      %p419 = por %p417, %p418
      %p420 = scmp.ne.s32.totalorder %s411, %s412
      %p421 = scmp.eq.s32.totalorder %s39, 0
      %p422 = por %p420, %p421
      %p423 = scmp.ne.s32.totalorder %s411, %s412
      %p424 = scmp.eq.s32.totalorder %s40, 1
      %p425 = por %p423, %p424
      %p427 = scmp.ne.s32.totalorder %s412, %s426
      %p428 = scmp.eq.s32.totalorder %s40, 0
      %p429 = por %p427, %p428
      %s431 = sadd.s32 %s430, 1
      %p434 = scmp.eq.s32.totalorder %s34, 1
      %p435 = scmp.ne.s32.totalorder %s430, %s432
      %p436 = scmp.eq.s32.totalorder %s34, 0
      %p437 = por %p435, %p436
      %p438 = scmp.ne.s32.totalorder %s430, %s432
      %p439 = scmp.eq.s32.totalorder %s39, 1
      %p440 = por %p438, %p439
      %p441 = scmp.ne.s32.totalorder %s432, %s433
      %p442 = scmp.eq.s32.totalorder %s39, 0
      %p443 = por %p441, %p442
      %p444 = scmp.ne.s32.totalorder %s432, %s433
      %p445 = scmp.eq.s32.totalorder %s40, 1
      %p446 = por %p444, %p445
      %p448 = scmp.ne.s32.totalorder %s433, %s447
      %p449 = scmp.eq.s32.totalorder %s40, 0
      %p450 = por %p448, %p449
      %s452 = sadd.s32 %s451, 1
      %p455 = scmp.eq.s32.totalorder %s34, 1
      %p456 = scmp.ne.s32.totalorder %s451, %s453
      %p457 = scmp.eq.s32.totalorder %s34, 0
      %p458 = por %p456, %p457
      %p459 = scmp.ne.s32.totalorder %s451, %s453
      %p460 = scmp.eq.s32.totalorder %s39, 1
      %p461 = por %p459, %p460
      %p462 = scmp.ne.s32.totalorder %s453, %s454
      %p463 = scmp.eq.s32.totalorder %s39, 0
      %p464 = por %p462, %p463
      %p465 = scmp.ne.s32.totalorder %s453, %s454
      %p466 = scmp.eq.s32.totalorder %s40, 1
      %p467 = por %p465, %p466
      %p469 = scmp.ne.s32.totalorder %s454, %s468
      %p470 = scmp.eq.s32.totalorder %s40, 0
      %p471 = por %p469, %p470
      %s473 = sadd.s32 %s472, 1
      %p476 = scmp.eq.s32.totalorder %s34, 1
      %p477 = scmp.ne.s32.totalorder %s472, %s474
      %p478 = scmp.eq.s32.totalorder %s34, 0
      %p479 = por %p477, %p478
      %p480 = scmp.ne.s32.totalorder %s472, %s474
      %p481 = scmp.eq.s32.totalorder %s39, 1
      %p482 = por %p480, %p481
      %p483 = scmp.ne.s32.totalorder %s474, %s475
      %p484 = scmp.eq.s32.totalorder %s39, 0
      %p485 = por %p483, %p484
      %p486 = scmp.ne.s32.totalorder %s474, %s475
      %p487 = scmp.eq.s32.totalorder %s40, 1
      %p488 = por %p486, %p487
      %p490 = scmp.ne.s32.totalorder %s475, %s489
      %p491 = scmp.eq.s32.totalorder %s40, 0
      %p492 = por %p490, %p491
      %s493 = ssub.s32 %s34, %s41
      %p494 = scmp.eq.s32.totalorder %s493, 0
      %s496 = sadd.s32 %s495, 1
      %s497 = scalar_select %p494, %s495, %s496
      %p500 = pneg %p494
      %p501 = scmp.eq.s32.totalorder %s34, 1
      %p502 = por %p500, %p501
      %p503 = scmp.ne.s32.totalorder %s495, %s498
      %p504 = scmp.eq.s32.totalorder %s34, 0
      %p505 = por %p503, %p504
      %p506 = scmp.ne.s32.totalorder %s495, %s498
      %p507 = scmp.eq.s32.totalorder %s39, 1
      %p508 = por %p506, %p507
      %p509 = scmp.ne.s32.totalorder %s498, %s499
      %p510 = scmp.eq.s32.totalorder %s39, 0
      %p511 = por %p509, %p510
      %p512 = scmp.ne.s32.totalorder %s498, %s499
      %p513 = scmp.eq.s32.totalorder %s40, 1
      %p514 = por %p512, %p513
      %p516 = scmp.ne.s32.totalorder %s499, %s515
      %p517 = scmp.eq.s32.totalorder %s40, 0
      %p518 = por %p516, %p517
      %p519 = scmp.le.s32.totalorder 1, %s34
      %p520 = scmp.lt.s32.totalorder %s34, 3
      %p521 = pnand %p519, %p520
      %p522 = pneg %p521
      // Predicated region
      $region9: #{language_model_forward.1} parent=5 // pred_check
        _
      $region10: #{language_model_forward.1} parent=5 // pred_check_branch
        %524 = sbr.rel (%p521) target = $region12
      $region11: #{language_model_forward.1} parent=5 // pred_region
        %s525 = ssub.s32 %s34, 1
        // Predicated region
        $region13: #{language_model_forward.1} parent=11 // pred_check
          %p526 = pneg %p107
        $region14: #{language_model_forward.1} parent=11 // pred_check_branch
          %528 = sbr.rel (%p526) target = $region16
        $region15: #{language_model_forward.1} parent=11 // pred_region
          _
        $region16: #{language_model_forward.1} parent=11 // pred_fallthru
          _
        // Predicated region
        $region17: #{language_model_forward.1} parent=11 // pred_check
          %p529 = pneg %p128
        $region18: #{language_model_forward.1} parent=11 // pred_check_branch
          %531 = sbr.rel (%p529) target = $region20
        $region19: #{language_model_forward.1} parent=11 // pred_region
          _
        $region20: #{language_model_forward.1} parent=11 // pred_fallthru
          _
        // Predicated region
        $region21: #{language_model_forward.1} parent=11 // pred_check
          %p532 = pneg %p149
        $region22: #{language_model_forward.1} parent=11 // pred_check_branch
          %534 = sbr.rel (%p532) target = $region24
        $region23: #{language_model_forward.1} parent=11 // pred_region
          %536 = vsyncadd [#allocation3], 0
          %s537 = sshll.u32 %s4, 4
          %s538 = int_to_ptr.hbm [resolvable:$true] %s537
          %s539 = sshll.u32 [#allocation2], 4
          %s540 = int_to_ptr.vmem [resolvable:$true] %s539
          %545 = dma.hbm_to_vmem [thread:$0]  %s538, 2048, %s540, [#allocation3], 128, 128, 8
        $region24: #{language_model_forward.1} parent=11 // pred_fallthru
          _
        // Predicated region
        $region25: #{language_model_forward.1} parent=11 // pred_check
          %p546 = pneg %p170
        $region26: #{language_model_forward.1} parent=11 // pred_check_branch
          %548 = sbr.rel (%p546) target = $region28
        $region27: #{language_model_forward.1} parent=11 // pred_region
          %550 = vsyncadd [#allocation6], 0
          %s551 = sshll.u32 %s5, 4
          %s552 = int_to_ptr.hbm [resolvable:$true] %s551
          %s553 = sshll.u32 [#allocation5], 4
          %s554 = int_to_ptr.vmem [resolvable:$true] %s553
          %559 = dma.hbm_to_vmem [thread:$0]  %s552, 4096, %s554, [#allocation6], 128, 128, 8
        $region28: #{language_model_forward.1} parent=11 // pred_fallthru
          _
        // Predicated region
        $region29: #{language_model_forward.1} parent=11 // pred_check
          %p560 = pneg %p191
        $region30: #{language_model_forward.1} parent=11 // pred_check_branch
          %562 = sbr.rel (%p560) target = $region32
        $region31: #{language_model_forward.1} parent=11 // pred_region
          %564 = vsyncadd [#allocation6], 0
          %s565 = sshll.u32 %s6, 4
          %s566 = int_to_ptr.hbm [resolvable:$true] %s565
          %s567 = sshll.u32 [#allocation7], 4
          %s568 = int_to_ptr.vmem [resolvable:$true] %s567
          %573 = dma.hbm_to_vmem [thread:$0]  %s566, 4096, %s568, [#allocation6], 128, 128, 8
        $region32: #{language_model_forward.1} parent=11 // pred_fallthru
          _
        // Predicated region
        $region33: #{language_model_forward.1} parent=11 // pred_check
          %p574 = pneg %p212
        $region34: #{language_model_forward.1} parent=11 // pred_check_branch
          %576 = sbr.rel (%p574) target = $region36
        $region35: #{language_model_forward.1} parent=11 // pred_region
          %578 = vsyncadd [#allocation9], 0
          %s579 = sshll.u32 %s7, 4
          %s580 = int_to_ptr.hbm [resolvable:$true] %s579
          %s581 = sshll.u32 [#allocation8], 4
          %s582 = int_to_ptr.vmem [resolvable:$true] %s581
          %587 = dma.hbm_to_vmem [thread:$0]  %s580, 4096, %s582, [#allocation9], 128, 128, 8
        $region36: #{language_model_forward.1} parent=11 // pred_fallthru
          _
        // Predicated region
        $region37: #{language_model_forward.1} parent=11 // pred_check
          %p588 = pneg %p233
        $region38: #{language_model_forward.1} parent=11 // pred_check_branch
          %590 = sbr.rel (%p588) target = $region40
        $region39: #{language_model_forward.1} parent=11 // pred_region
          _
        $region40: #{language_model_forward.1} parent=11 // pred_fallthru
          _
        // Predicated region
        $region41: #{language_model_forward.1} parent=11 // pred_check
          %p591 = pneg %p254
        $region42: #{language_model_forward.1} parent=11 // pred_check_branch
          %593 = sbr.rel (%p591) target = $region44
        $region43: #{language_model_forward.1} parent=11 // pred_region
          %595 = vsyncadd [#allocation9], 0
          %s596 = sshll.u32 %s9, 4
          %s597 = int_to_ptr.hbm [resolvable:$true] %s596
          %s598 = sshll.u32 [#allocation10], 4
          %s599 = int_to_ptr.vmem [resolvable:$true] %s598
          %604 = dma.hbm_to_vmem [thread:$0]  %s597, 16384, %s599, [#allocation9], 512, 512, 32
        $region44: #{language_model_forward.1} parent=11 // pred_fallthru
          _
        // Predicated region
        $region45: #{language_model_forward.1} parent=11 // pred_check
          %p605 = pneg %p275
        $region46: #{language_model_forward.1} parent=11 // pred_check_branch
          %607 = sbr.rel (%p605) target = $region48
        $region47: #{language_model_forward.1} parent=11 // pred_region
          _
        $region48: #{language_model_forward.1} parent=11 // pred_fallthru
          _
        // Predicated region
        $region49: #{language_model_forward.1} parent=11 // pred_check
          %p608 = pneg %p296
        $region50: #{language_model_forward.1} parent=11 // pred_check_branch
          %610 = sbr.rel (%p608) target = $region52
        $region51: #{language_model_forward.1} parent=11 // pred_region
          %612 = vsyncadd [#allocation12], 0
          %s613 = sshll.u32 %s11, 4
          %s614 = int_to_ptr.hbm [resolvable:$true] %s613
          %s615 = sshll.u32 [#allocation11], 4
          %s616 = int_to_ptr.vmem [resolvable:$true] %s615
          %621 = dma.hbm_to_vmem [thread:$0]  %s614, 16384, %s616, [#allocation12], 128, 128, 8
        $region52: #{language_model_forward.1} parent=11 // pred_fallthru
          _
        // Predicated region
        $region53: #{language_model_forward.1} parent=11 // pred_check
          %p622 = pneg %p317
        $region54: #{language_model_forward.1} parent=11 // pred_check_branch
          %624 = sbr.rel (%p622) target = $region56
        $region55: #{language_model_forward.1} parent=11 // pred_region
          _
        $region56: #{language_model_forward.1} parent=11 // pred_fallthru
          _
        // Predicated region
        $region57: #{language_model_forward.1} parent=11 // pred_check
          %p625 = pneg %p338
        $region58: #{language_model_forward.1} parent=11 // pred_check_branch
          %627 = sbr.rel (%p625) target = $region60
        $region59: #{language_model_forward.1} parent=11 // pred_region
          _
        $region60: #{language_model_forward.1} parent=11 // pred_fallthru
          _
        // Predicated region
        $region61: #{language_model_forward.1} parent=11 // pred_check
          %p628 = pneg %p359
        $region62: #{language_model_forward.1} parent=11 // pred_check_branch
          %630 = sbr.rel (%p628) target = $region64
        $region63: #{language_model_forward.1} parent=11 // pred_region
          _
        $region64: #{language_model_forward.1} parent=11 // pred_fallthru
          _
        // Predicated region
        $region65: #{language_model_forward.1} parent=11 // pred_check
          %p631 = pneg %p380
        $region66: #{language_model_forward.1} parent=11 // pred_check_branch
          %633 = sbr.rel (%p631) target = $region68
        $region67: #{language_model_forward.1} parent=11 // pred_region
          _
        $region68: #{language_model_forward.1} parent=11 // pred_fallthru
          _
        // Predicated region
        $region69: #{language_model_forward.1} parent=11 // pred_check
          %p634 = pneg %p401
        $region70: #{language_model_forward.1} parent=11 // pred_check_branch
          %636 = sbr.rel (%p634) target = $region72
        $region71: #{language_model_forward.1} parent=11 // pred_region
          _
        $region72: #{language_model_forward.1} parent=11 // pred_fallthru
          _
        // Predicated region
        $region73: #{language_model_forward.1} parent=11 // pred_check
          %p637 = pneg %p422
        $region74: #{language_model_forward.1} parent=11 // pred_check_branch
          %639 = sbr.rel (%p637) target = $region76
        $region75: #{language_model_forward.1} parent=11 // pred_region
          _
        $region76: #{language_model_forward.1} parent=11 // pred_fallthru
          _
        // Predicated region
        $region77: #{language_model_forward.1} parent=11 // pred_check
          %p640 = pneg %p443
        $region78: #{language_model_forward.1} parent=11 // pred_check_branch
          %642 = sbr.rel (%p640) target = $region80
        $region79: #{language_model_forward.1} parent=11 // pred_region
          _
        $region80: #{language_model_forward.1} parent=11 // pred_fallthru
          _
        // Predicated region
        $region81: #{language_model_forward.1} parent=11 // pred_check
          %p643 = pneg %p464
        $region82: #{language_model_forward.1} parent=11 // pred_check_branch
          %645 = sbr.rel (%p643) target = $region84
        $region83: #{language_model_forward.1} parent=11 // pred_region
          _
        $region84: #{language_model_forward.1} parent=11 // pred_fallthru
          _
        // Predicated region
        $region85: #{language_model_forward.1} parent=11 // pred_check
          %p646 = pneg %p485
        $region86: #{language_model_forward.1} parent=11 // pred_check_branch
          %648 = sbr.rel (%p646) target = $region88
        $region87: #{language_model_forward.1} parent=11 // pred_region
          _
        $region88: #{language_model_forward.1} parent=11 // pred_fallthru
          _
      $region12: #{language_model_forward.1} parent=5 // pred_fallthru
        _
      %p649 = scmp.lt.s32.totalorder %s34, 2
      // Predicated region
      $region89: #{language_model_forward.1} parent=5 // pred_check
        %p650 = pneg %p649
      $region90: #{language_model_forward.1} parent=5 // pred_check_branch
        %652 = sbr.rel (%p650) target = $region92
      $region91: #{language_model_forward.1} parent=5 // pred_region
        // Predicated region
        $region93: #{language_model_forward.1} parent=91 // pred_check
          %p653 = pneg %p54
        $region94: #{language_model_forward.1} parent=91 // pred_check_branch
          %655 = sbr.rel (%p653) target = $region96
        $region95: #{language_model_forward.1} parent=91 // pred_region
          %p656 = scmp.lt.s32.totalorder %s34, 1
          %s657 = scalar_select %p656, %s34, 1
          %s658 = smul.addr %s657, 8
          %s659 = scalar_lea.vmem %s0, %s658
        $region96: #{language_model_forward.1} parent=91 // pred_fallthru
          _
        // Predicated region
        $region97: #{language_model_forward.1} parent=91 // pred_check
          %p660 = pneg %p80
        $region98: #{language_model_forward.1} parent=91 // pred_check_branch
          %662 = sbr.rel (%p660) target = $region100
        $region99: #{language_model_forward.1} parent=91 // pred_region
          %p663 = scmp.lt.s32.totalorder %s34, 1
          %s664 = scalar_select %p663, %s34, 1
          %s665 = scalar_lea.vmem %s1, %s664
        $region100: #{language_model_forward.1} parent=91 // pred_fallthru
          _
      $region92: #{language_model_forward.1} parent=5 // pred_fallthru
        _
      %p666 = scmp.le.s32.totalorder 1, %s34
      %p667 = scmp.lt.s32.totalorder %s34, 3
      %p668 = pnand %p666, %p667
      %p669 = pneg %p668
      // Predicated region
      $region101: #{language_model_forward.1} parent=5 // pred_check
        _
      $region102: #{language_model_forward.1} parent=5 // pred_check_branch
        %671 = sbr.rel (%p668) target = $region104
      $region103: #{language_model_forward.1} parent=5 // pred_region
        %s672 = ssub.s32 %s34, 1
        // Predicated region
        $region105: #{language_model_forward.1} parent=103 // pred_check
          %p673 = pneg %p149
        $region106: #{language_model_forward.1} parent=103 // pred_check_branch
          %675 = sbr.rel (%p673) target = $region108
        $region107: #{language_model_forward.1} parent=103 // pred_region
          %677 = dma.done [#allocation3], 2048
        $region108: #{language_model_forward.1} parent=103 // pred_fallthru
          _
        // Predicated region
        $region109: #{language_model_forward.1} parent=103 // pred_check
          %p678 = pneg %p170
        $region110: #{language_model_forward.1} parent=103 // pred_check_branch
          %680 = sbr.rel (%p678) target = $region112
        $region111: #{language_model_forward.1} parent=103 // pred_region
          %682 = dma.done [#allocation6], 4096
        $region112: #{language_model_forward.1} parent=103 // pred_fallthru
          _
        // Predicated region
        $region113: #{language_model_forward.1} parent=103 // pred_check
          %p683 = pneg %p191
        $region114: #{language_model_forward.1} parent=103 // pred_check_branch
          %685 = sbr.rel (%p683) target = $region116
        $region115: #{language_model_forward.1} parent=103 // pred_region
          %687 = dma.done [#allocation6], 4096
        $region116: #{language_model_forward.1} parent=103 // pred_fallthru
          _
        // Predicated region
        $region117: #{language_model_forward.1} parent=103 // pred_check
          %p688 = pneg %p212
        $region118: #{language_model_forward.1} parent=103 // pred_check_branch
          %690 = sbr.rel (%p688) target = $region120
        $region119: #{language_model_forward.1} parent=103 // pred_region
          %692 = dma.done [#allocation9], 4096
        $region120: #{language_model_forward.1} parent=103 // pred_fallthru
          _
        // Predicated region
        $region121: #{language_model_forward.1} parent=103 // pred_check
          %p693 = pneg %p254
        $region122: #{language_model_forward.1} parent=103 // pred_check_branch
          %695 = sbr.rel (%p693) target = $region124
        $region123: #{language_model_forward.1} parent=103 // pred_region
          %697 = dma.done [#allocation9], 16384
        $region124: #{language_model_forward.1} parent=103 // pred_fallthru
          _
        // Predicated region
        $region125: #{language_model_forward.1} parent=103 // pred_check
          %p698 = pneg %p296
        $region126: #{language_model_forward.1} parent=103 // pred_check_branch
          %700 = sbr.rel (%p698) target = $region128
        $region127: #{language_model_forward.1} parent=103 // pred_region
          %702 = dma.done [#allocation12], 16384
        $region128: #{language_model_forward.1} parent=103 // pred_fallthru
          _
        %p703 = scmp.lt.s32.totalorder %s39, 1
        %s704 = scalar_select %p703, %s39, 1
        %s705 = smul.addr %s704, 8
        %s706 = scalar_lea.vmem %s0, %s705
        %p707 = pneg %p60
        %p708 = pneg %p57
        %p709 = scmp.lt.s32.totalorder %s39, 1
        %s710 = scalar_select %p709, %s39, 1
        %s711 = scalar_lea.vmem %s1, %s710
        %p712 = pneg %p86
        %p713 = pneg %p83
        %p714 = pneg %p107
        %p715 = pneg %p104
        %p716 = pneg %p128
        %p717 = pneg %p125
        %p718 = pneg %p149
        %p719 = pneg %p146
        %p720 = pneg %p170
        %p721 = pneg %p167
        %p722 = pneg %p191
        %p723 = pneg %p188
        %p724 = pneg %p212
        %p725 = pneg %p209
        %p726 = pneg %p233
        %p727 = pneg %p230
        %p728 = pneg %p254
        %p729 = pneg %p251
        %p730 = pneg %p275
        %p731 = pneg %p272
        %p732 = pneg %p296
        %p733 = pneg %p293
        %p734 = pneg %p317
        %p735 = pneg %p314
        %p736 = pneg %p338
        %p737 = pneg %p335
        %p738 = pneg %p359
        %p739 = pneg %p356
        %p740 = pneg %p380
        %p741 = pneg %p377
        %p742 = pneg %p401
        %p743 = pneg %p398
        %p744 = pneg %p422
        %p745 = pneg %p419
        %p746 = pneg %p443
        %p747 = pneg %p440
        %p748 = pneg %p464
        %p749 = pneg %p461
        %p750 = pneg %p485
        %p751 = pneg %p482
        %p752 = pneg %p511
        %p753 = pneg %p508
        %s754 = sand.u32 %s498, 1
        %s755 = scalar_lea.sflag [#allocation4], %s754
        %s756 = sand.u32 %s498, 1
        %s757 = smul.addr %s756, 8
        %s758 = scalar_lea.vmem [#allocation13], %s757
        %p759 = scmp.lt.s32.totalorder %s39, 1
        %s760 = scalar_select %p759, %s39, 1
        %s761 = smul.addr %s760, 8
        %s762 = scalar_lea.vmem %s0, %s761
        %p763 = scmp.lt.s32.totalorder %s39, 1
        %s764 = scalar_select %p763, %s39, 1
        %s765 = scalar_lea.vmem %s1, %s764
        %v766 = vld [vmem:[%s762] sm:$0xff]
        %v767 = vlaneseq
        %v768 = vshrl.u32 %v767, 7
        %v769 = vlaneseq
        %v770 = vand.u32 %v769, 127
        %vm771 = vcmp.le.s32.totalorder %v770, %v768
        %v772 = vsel %vm771, 0.0, -inf
        %v773 = vld [vmem:[%s765] sm:$0x1]
        %v775 = vperm.slane %v773, 0
        %v777 = vadd.f32 %v772, %v775
        %v778 = vld [vmem:[%s2] sm:$0xff]
        %v779 = vld [vmem:[%s3] sm:$0xff]
        %v780 = vld [vmem:[#allocation2] sm:$0xff]
        %v781 = vld [vmem:[#allocation2 + $0x8] sm:$0xff]
        %v782 = vld [vmem:[#allocation2 + $0x10] sm:$0xff]
        %v783 = vld [vmem:[#allocation2 + $0x18] sm:$0xff]
        %v784 = vld [vmem:[#allocation2 + $0x20] sm:$0xff]
        %v785 = vld [vmem:[#allocation2 + $0x28] sm:$0xff]
        %v786 = vld [vmem:[#allocation2 + $0x30] sm:$0xff]
        %v787 = vld [vmem:[#allocation2 + $0x38] sm:$0xff]
        %v788 = vld [vmem:[#allocation2 + $0x40] sm:$0xff]
        %v789 = vld [vmem:[#allocation2 + $0x48] sm:$0xff]
        %v790 = vld [vmem:[#allocation2 + $0x50] sm:$0xff]
        %v791 = vld [vmem:[#allocation2 + $0x58] sm:$0xff]
        %v792 = vld [vmem:[#allocation2 + $0x60] sm:$0xff]
        %v793 = vld [vmem:[#allocation2 + $0x68] sm:$0xff]
        %v794 = vld [vmem:[#allocation2 + $0x70] sm:$0xff]
        %v795 = vld [vmem:[#allocation2 + $0x78] sm:$0xff]
        %v796 = vld [vmem:[%s13] sm:$0x1]
        %v797 = vld [vmem:[%s14] sm:$0x1]
        %798 = vadd.xlane.f32.xlu0 %v766
        %v799 = vpop.xlane.xlu0 %798
        %v800 = vrcp.pop 128.0
        %v801 = vmul.f32 128.0, %v800
        %v802 = vsub.f32 1.0, %v801
        %v803 = vmul.f32 %v800, %v802
        %v804 = vadd.f32 %v800, %v803
        %vm805 = vweird.f32 %v800
        %v806 = vsel %vm805, %v800, %v804
        %v807 = vmul.f32 %v799, %v806
        %v808 = vsub.f32 %v766, %v807
        %v809 = vmul.f32 %v808, %v808
        %810 = vadd.xlane.f32.xlu0 %v809
        %v811 = vpop.xlane.xlu0 %810
        %v812 = vmul.f32 %v811, %v806
        %v813 = vadd.f32 %v812, 1e-05
        %v814 = vrsqrt.pop %v813
        %v815 = vmul.f32 %v814, %v813
        %v816 = vmul.f32 %v815, %v814
        %v817 = vmul.f32 0.5, %v816
        %v818 = vsub.f32 1.5, %v817
        %v819 = vmul.f32 %v814, %v818
        %vm820 = vweird.f32 %v813
        %vm821 = vweird.f32 %v814
        %vm822 = vmor %vm820, %vm821
        %v823 = vsel %vm822, %v814, %v819
        %v824 = vmul.f32 %v808, %v823
        %v826 = vperm.slane %v796, 0
        %v828 = vmul.f32 %v824, %v826
        %v830 = vperm.slane %v797, 0
        %v832 = vadd.f32 %v828, %v830
        %v833 = vld [vmem:[#allocation5] sm:$0xff]
        %v834 = vld [vmem:[#allocation5 + $0x8] sm:$0xff]
        %v835 = vld [vmem:[#allocation5 + $0x10] sm:$0xff]
        %v836 = vld [vmem:[#allocation5 + $0x18] sm:$0xff]
        %v837 = vld [vmem:[#allocation5 + $0x20] sm:$0xff]
        %v838 = vld [vmem:[#allocation5 + $0x28] sm:$0xff]
        %v839 = vld [vmem:[#allocation5 + $0x30] sm:$0xff]
        %v840 = vld [vmem:[#allocation5 + $0x38] sm:$0xff]
        %v841 = vld [vmem:[#allocation5 + $0x40] sm:$0xff]
        %v842 = vld [vmem:[#allocation5 + $0x48] sm:$0xff]
        %v843 = vld [vmem:[#allocation5 + $0x50] sm:$0xff]
        %v844 = vld [vmem:[#allocation5 + $0x58] sm:$0xff]
        %v845 = vld [vmem:[#allocation5 + $0x60] sm:$0xff]
        %v846 = vld [vmem:[#allocation5 + $0x68] sm:$0xff]
        %v847 = vld [vmem:[#allocation5 + $0x70] sm:$0xff]
        %v848 = vld [vmem:[#allocation5 + $0x78] sm:$0xff]
        %849 = vmatpush.msra.mxu0 %v848
        %850 = vmatpush.msra.mxu0 %v847
        %851 = vmatpush.msra.mxu0 %v846
        %852 = vmatpush.msra.mxu0 %v845
        %853 = vmatpush.msra.mxu0 %v844
        %854 = vmatpush.msra.mxu0 %v843
        %855 = vmatpush.msra.mxu0 %v842
        %856 = vmatpush.msra.mxu0 %v841
        %857 = vmatpush.msra.mxu0 %v840
        %858 = vmatpush.msra.mxu0 %v839
        %859 = vmatpush.msra.mxu0 %v838
        %860 = vmatpush.msra.mxu0 %v837
        %861 = vmatpush.msra.mxu0 %v836
        %862 = vmatpush.msra.mxu0 %v835
        %863 = vmatpush.msra.mxu0 %v834
        %864 = vmatpush.msra.mxu0 %v833
        %865 = vmatmul.f32.gmra.mxu0 %v832
        %v866 = vpop.f32.mrf.mxu0
        %v867 = vadd.f32 0.0, %v866
        %868 = vdwg.mxu0
        %v869 = vld [vmem:[#allocation7] sm:$0xff]
        %v870 = vld [vmem:[#allocation7 + $0x8] sm:$0xff]
        %v871 = vld [vmem:[#allocation7 + $0x10] sm:$0xff]
        %v872 = vld [vmem:[#allocation7 + $0x18] sm:$0xff]
        %v873 = vld [vmem:[#allocation7 + $0x20] sm:$0xff]
        %v874 = vld [vmem:[#allocation7 + $0x28] sm:$0xff]
        %v875 = vld [vmem:[#allocation7 + $0x30] sm:$0xff]
        %v876 = vld [vmem:[#allocation7 + $0x38] sm:$0xff]
        %v877 = vld [vmem:[#allocation7 + $0x40] sm:$0xff]
        %v878 = vld [vmem:[#allocation7 + $0x48] sm:$0xff]
        %v879 = vld [vmem:[#allocation7 + $0x50] sm:$0xff]
        %v880 = vld [vmem:[#allocation7 + $0x58] sm:$0xff]
        %v881 = vld [vmem:[#allocation7 + $0x60] sm:$0xff]
        %v882 = vld [vmem:[#allocation7 + $0x68] sm:$0xff]
        %v883 = vld [vmem:[#allocation7 + $0x70] sm:$0xff]
        %v884 = vld [vmem:[#allocation7 + $0x78] sm:$0xff]
        %885 = vmatpush.msra.mxu0 %v884
        %886 = vmatpush.msra.mxu0 %v883
        %887 = vmatpush.msra.mxu0 %v882
        %888 = vmatpush.msra.mxu0 %v881
        %889 = vmatpush.msra.mxu0 %v880
        %890 = vmatpush.msra.mxu0 %v879
        %891 = vmatpush.msra.mxu0 %v878
        %892 = vmatpush.msra.mxu0 %v877
        %893 = vmatpush.msra.mxu0 %v876
        %894 = vmatpush.msra.mxu0 %v875
        %895 = vmatpush.msra.mxu0 %v874
        %896 = vmatpush.msra.mxu0 %v873
        %897 = vmatpush.msra.mxu0 %v872
        %898 = vmatpush.msra.mxu0 %v871
        %899 = vmatpush.msra.mxu0 %v870
        %900 = vmatpush.msra.mxu0 %v869
        %901 = vmatmul.f32.gmra.mxu0 %v832
        %v902 = vpop.f32.mrf.mxu0
        %v903 = vadd.f32 0.0, %v902
        %904 = vdwg.mxu0
        %v905 = vmul.f32 %v867, %v778
        %906 = vmatpush.msra.mxu0 %v795
        %907 = vmatpush.msra.mxu0 %v794
        %908 = vmatpush.msra.mxu0 %v793
        %909 = vmatpush.msra.mxu0 %v792
        %910 = vmatpush.msra.mxu0 %v791
        %911 = vmatpush.msra.mxu0 %v790
        %912 = vmatpush.msra.mxu0 %v789
        %913 = vmatpush.msra.mxu0 %v788
        %914 = vmatpush.msra.mxu0 %v787
        %915 = vmatpush.msra.mxu0 %v786
        %916 = vmatpush.msra.mxu0 %v785
        %917 = vmatpush.msra.mxu0 %v784
        %918 = vmatpush.msra.mxu0 %v783
        %919 = vmatpush.msra.mxu0 %v782
        %920 = vmatpush.msra.mxu0 %v781
        %921 = vmatpush.msra.mxu0 %v780
        %922 = vmatmul.f32.gmra.mxu0 %v867
        %v923 = vpop.f32.mrf.mxu0
        %v924 = vadd.f32 0.0, %v923
        %925 = vdwg.mxu0
        %v926 = vmul.f32 %v924, %v779
        %v927 = vadd.f32 %v905, %v926
        %v928 = vld [vmem:[#allocation8] sm:$0xff]
        %v929 = vld [vmem:[#allocation8 + $0x8] sm:$0xff]
        %v930 = vld [vmem:[#allocation8 + $0x10] sm:$0xff]
        %v931 = vld [vmem:[#allocation8 + $0x18] sm:$0xff]
        %v932 = vld [vmem:[#allocation8 + $0x20] sm:$0xff]
        %v933 = vld [vmem:[#allocation8 + $0x28] sm:$0xff]
        %v934 = vld [vmem:[#allocation8 + $0x30] sm:$0xff]
        %v935 = vld [vmem:[#allocation8 + $0x38] sm:$0xff]
        %v936 = vld [vmem:[#allocation8 + $0x40] sm:$0xff]
        %v937 = vld [vmem:[#allocation8 + $0x48] sm:$0xff]
        %v938 = vld [vmem:[#allocation8 + $0x50] sm:$0xff]
        %v939 = vld [vmem:[#allocation8 + $0x58] sm:$0xff]
        %v940 = vld [vmem:[#allocation8 + $0x60] sm:$0xff]
        %v941 = vld [vmem:[#allocation8 + $0x68] sm:$0xff]
        %v942 = vld [vmem:[#allocation8 + $0x70] sm:$0xff]
        %v943 = vld [vmem:[#allocation8 + $0x78] sm:$0xff]
        %vm944 = vcmask 261120
        %v946 = vsel %vm944, %v927, 0
        %948 = vmatpush.xpose.msra.mxu0 0.0
        %949 = vmatpush.xpose.msra.mxu0 0.0
        %950 = vmatpush.xpose.msra.mxu0 0.0
        %951 = vmatpush.xpose.msra.mxu0 0.0
        %952 = vmatpush.xpose.msra.mxu0 0.0
        %953 = vmatpush.xpose.msra.mxu0 0.0
        %954 = vmatpush.xpose.msra.mxu0 0.0
        %955 = vmatpush.xpose.msra.mxu0 0.0
        %956 = vmatpush.xpose.msra.mxu0 0.0
        %957 = vmatpush.xpose.msra.mxu0 0.0
        %958 = vmatpush.xpose.msra.mxu0 0.0
        %959 = vmatpush.xpose.msra.mxu0 0.0
        %960 = vmatpush.xpose.msra.mxu0 0.0
        %961 = vmatpush.xpose.msra.mxu0 0.0
        %962 = vmatpush.xpose.msra.mxu0 0.0
        %963 = vmatpush.xpose.msra.mxu0 %v946
        %964 = vmatmul.f32.gmra.mxu0 %v946
        %v965 = vpop.f32.mrf.mxu0
        %v966 = vadd.f32 0.0, %v965
        %967 = vdwg.mxu0
        %v968 = vmul.f32 %v966, 0.088388346
        %v969 = vadd.f32 %v968, %v777
        %vm970 = vcmask 64512
        %v971 = vsel %vm970, %v969, -inf
        %972 = vmax.xlane.f32.xlu0 %v971
        %v973 = vpop.xlane.xlu0 %972
        %v974 = vsub.f32 %v969, %v973
        %v975 = vmul.f32 %v974, 1.442695
        %v976 = vpow.pop %v975
        %v977 = vsel %vm970, %v976, 0.0
        %978 = vadd.xlane.f32.xlu0 %v977
        %v979 = vpop.xlane.xlu0 %978
        %v980 = vrcp.pop %v979
        %v981 = vmul.f32 %v976, %v980
        %v983 = vsel %vm970, %v981, 0
        %985 = vmatpush.msra.mxu0 0.0
        %986 = vmatpush.msra.mxu0 0.0
        %987 = vmatpush.msra.mxu0 0.0
        %988 = vmatpush.msra.mxu0 0.0
        %989 = vmatpush.msra.mxu0 0.0
        %990 = vmatpush.msra.mxu0 0.0
        %991 = vmatpush.msra.mxu0 0.0
        %992 = vmatpush.msra.mxu0 0.0
        %993 = vmatpush.msra.mxu0 0.0
        %994 = vmatpush.msra.mxu0 0.0
        %995 = vmatpush.msra.mxu0 0.0
        %996 = vmatpush.msra.mxu0 0.0
        %997 = vmatpush.msra.mxu0 0.0
        %998 = vmatpush.msra.mxu0 0.0
        %999 = vmatpush.msra.mxu0 0.0
        %1000 = vmatpush.msra.mxu0 %v903
        %1001 = vmatmul.f32.gmra.mxu0 %v983
        %v1002 = vpop.f32.mrf.mxu0
        %v1003 = vadd.f32 0.0, %v1002
        %1004 = vdwg.mxu0
        %1005 = vrot.lane.b32.xlu0 %v927, 96
        %v1006 = vpop.permute.xlu0 %1005
        %v1007 = vsel %vm944, %v1006, 0
        %1009 = vmatpush.xpose.msra.mxu0 0.0
        %1010 = vmatpush.xpose.msra.mxu0 0.0
        %1011 = vmatpush.xpose.msra.mxu0 0.0
        %1012 = vmatpush.xpose.msra.mxu0 0.0
        %1013 = vmatpush.xpose.msra.mxu0 0.0
        %1014 = vmatpush.xpose.msra.mxu0 0.0
        %1015 = vmatpush.xpose.msra.mxu0 0.0
        %1016 = vmatpush.xpose.msra.mxu0 0.0
        %1017 = vmatpush.xpose.msra.mxu0 0.0
        %1018 = vmatpush.xpose.msra.mxu0 0.0
        %1019 = vmatpush.xpose.msra.mxu0 0.0
        %1020 = vmatpush.xpose.msra.mxu0 0.0
        %1021 = vmatpush.xpose.msra.mxu0 0.0
        %1022 = vmatpush.xpose.msra.mxu0 0.0
        %1023 = vmatpush.xpose.msra.mxu0 0.0
        %1024 = vmatpush.xpose.msra.mxu0 %v1007
        %1025 = vmatmul.f32.gmra.mxu0 %v1007
        %v1026 = vpop.f32.mrf.mxu0
        %v1027 = vadd.f32 0.0, %v1026
        %1028 = vdwg.mxu0
        %v1029 = vmul.f32 %v1027, 0.088388346
        %v1030 = vadd.f32 %v1029, %v777
        %v1031 = vsel %vm970, %v1030, -inf
        %1032 = vmax.xlane.f32.xlu0 %v1031
        %v1033 = vpop.xlane.xlu0 %1032
        %v1034 = vsub.f32 %v1030, %v1033
        %v1035 = vmul.f32 %v1034, 1.442695
        %v1036 = vpow.pop %v1035
        %v1037 = vsel %vm970, %v1036, 0.0
        %1038 = vadd.xlane.f32.xlu0 %v1037
        %v1039 = vpop.xlane.xlu0 %1038
        %v1040 = vrcp.pop %v1039
        %v1041 = vmul.f32 %v1036, %v1040
        %1043 = vrot.lane.b32.xlu0 %v903, 96
        %v1044 = vpop.permute.xlu0 %1043
        %v1047 = vsel %vm970, %v1041, 0
        %1049 = vmatpush.msra.mxu0 0.0
        %1050 = vmatpush.msra.mxu0 0.0
        %1051 = vmatpush.msra.mxu0 0.0
        %1052 = vmatpush.msra.mxu0 0.0
        %1053 = vmatpush.msra.mxu0 0.0
        %1054 = vmatpush.msra.mxu0 0.0
        %1055 = vmatpush.msra.mxu0 0.0
        %1056 = vmatpush.msra.mxu0 0.0
        %1057 = vmatpush.msra.mxu0 0.0
        %1058 = vmatpush.msra.mxu0 0.0
        %1059 = vmatpush.msra.mxu0 0.0
        %1060 = vmatpush.msra.mxu0 0.0
        %1061 = vmatpush.msra.mxu0 0.0
        %1062 = vmatpush.msra.mxu0 0.0
        %1063 = vmatpush.msra.mxu0 0.0
        %1064 = vmatpush.msra.mxu0 %v1044
        %1065 = vmatmul.f32.gmra.mxu0 %v1047
        %v1066 = vpop.f32.mrf.mxu0
        %v1067 = vadd.f32 0.0, %v1066
        %1068 = vdwg.mxu0
        %v1070 = vsel %vm944, %v1067, 0
        %1072 = vmatpush.msra.mxu0 0.0
        %1073 = vmatpush.msra.mxu0 0.0
        %1074 = vmatpush.msra.mxu0 0.0
        %1075 = vmatpush.msra.mxu0 0.0
        %1076 = vmatpush.msra.mxu0 0.0
        %1077 = vmatpush.msra.mxu0 0.0
        %1078 = vmatpush.msra.mxu0 0.0
        %1079 = vmatpush.msra.mxu0 0.0
        %1080 = vmatpush.msra.mxu0 0.0
        %1081 = vmatpush.msra.mxu0 0.0
        %1082 = vmatpush.msra.mxu0 0.0
        %1083 = vmatpush.msra.mxu0 0.0
        %1084 = vmatpush.msra.mxu0 %v935
        %1085 = vmatpush.msra.mxu0 %v934
        %1086 = vmatpush.msra.mxu0 %v933
        %1087 = vmatpush.msra.mxu0 %v932
        %1088 = vmatmul.f32.gmra.mxu0 %v1070
        %v1089 = vpop.f32.mrf.mxu0
        %v1090 = vadd.f32 0.0, %v1089
        %1091 = vdwg.mxu0
        %v1093 = vsel %vm944, %v1003, 0
        %1095 = vmatpush.msra.mxu0 0.0
        %1096 = vmatpush.msra.mxu0 0.0
        %1097 = vmatpush.msra.mxu0 0.0
        %1098 = vmatpush.msra.mxu0 0.0
        %1099 = vmatpush.msra.mxu0 0.0
        %1100 = vmatpush.msra.mxu0 0.0
        %1101 = vmatpush.msra.mxu0 0.0
        %1102 = vmatpush.msra.mxu0 0.0
        %1103 = vmatpush.msra.mxu0 0.0
        %1104 = vmatpush.msra.mxu0 0.0
        %1105 = vmatpush.msra.mxu0 0.0
        %1106 = vmatpush.msra.mxu0 0.0
        %1107 = vmatpush.msra.mxu0 %v931
        %1108 = vmatpush.msra.mxu0 %v930
        %1109 = vmatpush.msra.mxu0 %v929
        %1110 = vmatpush.msra.mxu0 %v928
        %1111 = vmatmul.f32.gmra.mxu0 %v1093
        %v1112 = vpop.f32.mrf.mxu0
        %v1113 = vadd.f32 %v1090, %v1112
        %1114 = vdwg.mxu0
        %1115 = vrot.lane.b32.xlu0 %v927, 64
        %v1116 = vpop.permute.xlu0 %1115
        %v1117 = vsel %vm944, %v1116, 0
        %1119 = vmatpush.xpose.msra.mxu0 0.0
        %1120 = vmatpush.xpose.msra.mxu0 0.0
        %1121 = vmatpush.xpose.msra.mxu0 0.0
        %1122 = vmatpush.xpose.msra.mxu0 0.0
        %1123 = vmatpush.xpose.msra.mxu0 0.0
        %1124 = vmatpush.xpose.msra.mxu0 0.0
        %1125 = vmatpush.xpose.msra.mxu0 0.0
        %1126 = vmatpush.xpose.msra.mxu0 0.0
        %1127 = vmatpush.xpose.msra.mxu0 0.0
        %1128 = vmatpush.xpose.msra.mxu0 0.0
        %1129 = vmatpush.xpose.msra.mxu0 0.0
        %1130 = vmatpush.xpose.msra.mxu0 0.0
        %1131 = vmatpush.xpose.msra.mxu0 0.0
        %1132 = vmatpush.xpose.msra.mxu0 0.0
        %1133 = vmatpush.xpose.msra.mxu0 0.0
        %1134 = vmatpush.xpose.msra.mxu0 %v1117
        %1135 = vmatmul.f32.gmra.mxu0 %v1117
        %v1136 = vpop.f32.mrf.mxu0
        %v1137 = vadd.f32 0.0, %v1136
        %1138 = vdwg.mxu0
        %v1139 = vmul.f32 %v1137, 0.088388346
        %v1140 = vadd.f32 %v1139, %v777
        %v1141 = vsel %vm970, %v1140, -inf
        %1142 = vmax.xlane.f32.xlu0 %v1141
        %v1143 = vpop.xlane.xlu0 %1142
        %v1144 = vsub.f32 %v1140, %v1143
        %v1145 = vmul.f32 %v1144, 1.442695
        %v1146 = vpow.pop %v1145
        %v1147 = vsel %vm970, %v1146, 0.0
        %1148 = vadd.xlane.f32.xlu0 %v1147
        %v1149 = vpop.xlane.xlu0 %1148
        %v1150 = vrcp.pop %v1149
        %v1151 = vmul.f32 %v1146, %v1150
        %1152 = vrot.lane.b32.xlu0 %v903, 64
        %v1153 = vpop.permute.xlu0 %1152
        %v1156 = vsel %vm970, %v1151, 0
        %1158 = vmatpush.msra.mxu0 0.0
        %1159 = vmatpush.msra.mxu0 0.0
        %1160 = vmatpush.msra.mxu0 0.0
        %1161 = vmatpush.msra.mxu0 0.0
        %1162 = vmatpush.msra.mxu0 0.0
        %1163 = vmatpush.msra.mxu0 0.0
        %1164 = vmatpush.msra.mxu0 0.0
        %1165 = vmatpush.msra.mxu0 0.0
        %1166 = vmatpush.msra.mxu0 0.0
        %1167 = vmatpush.msra.mxu0 0.0
        %1168 = vmatpush.msra.mxu0 0.0
        %1169 = vmatpush.msra.mxu0 0.0
        %1170 = vmatpush.msra.mxu0 0.0
        %1171 = vmatpush.msra.mxu0 0.0
        %1172 = vmatpush.msra.mxu0 0.0
        %1173 = vmatpush.msra.mxu0 %v1153
        %1174 = vmatmul.f32.gmra.mxu0 %v1156
        %v1175 = vpop.f32.mrf.mxu0
        %v1176 = vadd.f32 0.0, %v1175
        %1177 = vdwg.mxu0
        %v1179 = vsel %vm944, %v1176, 0
        %1181 = vmatpush.msra.mxu0 0.0
        %1182 = vmatpush.msra.mxu0 0.0
        %1183 = vmatpush.msra.mxu0 0.0
        %1184 = vmatpush.msra.mxu0 0.0
        %1185 = vmatpush.msra.mxu0 0.0
        %1186 = vmatpush.msra.mxu0 0.0
        %1187 = vmatpush.msra.mxu0 0.0
        %1188 = vmatpush.msra.mxu0 0.0
        %1189 = vmatpush.msra.mxu0 0.0
        %1190 = vmatpush.msra.mxu0 0.0
        %1191 = vmatpush.msra.mxu0 0.0
        %1192 = vmatpush.msra.mxu0 0.0
        %1193 = vmatpush.msra.mxu0 %v939
        %1194 = vmatpush.msra.mxu0 %v938
        %1195 = vmatpush.msra.mxu0 %v937
        %1196 = vmatpush.msra.mxu0 %v936
        %1197 = vmatmul.f32.gmra.mxu0 %v1179
        %v1198 = vpop.f32.mrf.mxu0
        %v1199 = vadd.f32 0.0, %v1198
        %1200 = vdwg.mxu0
        %v1201 = vadd.f32 %v1113, %v1199
        %1202 = vrot.lane.b32.xlu0 %v927, 32
        %v1203 = vpop.permute.xlu0 %1202
        %v1204 = vsel %vm944, %v1203, 0
        %1206 = vmatpush.xpose.msra.mxu0 0.0
        %1207 = vmatpush.xpose.msra.mxu0 0.0
        %1208 = vmatpush.xpose.msra.mxu0 0.0
        %1209 = vmatpush.xpose.msra.mxu0 0.0
        %1210 = vmatpush.xpose.msra.mxu0 0.0
        %1211 = vmatpush.xpose.msra.mxu0 0.0
        %1212 = vmatpush.xpose.msra.mxu0 0.0
        %1213 = vmatpush.xpose.msra.mxu0 0.0
        %1214 = vmatpush.xpose.msra.mxu0 0.0
        %1215 = vmatpush.xpose.msra.mxu0 0.0
        %1216 = vmatpush.xpose.msra.mxu0 0.0
        %1217 = vmatpush.xpose.msra.mxu0 0.0
        %1218 = vmatpush.xpose.msra.mxu0 0.0
        %1219 = vmatpush.xpose.msra.mxu0 0.0
        %1220 = vmatpush.xpose.msra.mxu0 0.0
        %1221 = vmatpush.xpose.msra.mxu0 %v1204
        %1222 = vmatmul.f32.gmra.mxu0 %v1204
        %v1223 = vpop.f32.mrf.mxu0
        %v1224 = vadd.f32 0.0, %v1223
        %1225 = vdwg.mxu0
        %v1226 = vmul.f32 %v1224, 0.088388346
        %v1227 = vadd.f32 %v1226, %v777
        %v1228 = vsel %vm970, %v1227, -inf
        %1229 = vmax.xlane.f32.xlu0 %v1228
        %v1230 = vpop.xlane.xlu0 %1229
        %v1231 = vsub.f32 %v1227, %v1230
        %v1232 = vmul.f32 %v1231, 1.442695
        %v1233 = vpow.pop %v1232
        %v1234 = vsel %vm970, %v1233, 0.0
        %1235 = vadd.xlane.f32.xlu0 %v1234
        %v1236 = vpop.xlane.xlu0 %1235
        %v1237 = vrcp.pop %v1236
        %v1238 = vmul.f32 %v1233, %v1237
        %1239 = vrot.lane.b32.xlu0 %v903, 32
        %v1240 = vpop.permute.xlu0 %1239
        %v1243 = vsel %vm970, %v1238, 0
        %1245 = vmatpush.msra.mxu0 0.0
        %1246 = vmatpush.msra.mxu0 0.0
        %1247 = vmatpush.msra.mxu0 0.0
        %1248 = vmatpush.msra.mxu0 0.0
        %1249 = vmatpush.msra.mxu0 0.0
        %1250 = vmatpush.msra.mxu0 0.0
        %1251 = vmatpush.msra.mxu0 0.0
        %1252 = vmatpush.msra.mxu0 0.0
        %1253 = vmatpush.msra.mxu0 0.0
        %1254 = vmatpush.msra.mxu0 0.0
        %1255 = vmatpush.msra.mxu0 0.0
        %1256 = vmatpush.msra.mxu0 0.0
        %1257 = vmatpush.msra.mxu0 0.0
        %1258 = vmatpush.msra.mxu0 0.0
        %1259 = vmatpush.msra.mxu0 0.0
        %1260 = vmatpush.msra.mxu0 %v1240
        %1261 = vmatmul.f32.gmra.mxu0 %v1243
        %v1262 = vpop.f32.mrf.mxu0
        %v1263 = vadd.f32 0.0, %v1262
        %1264 = vdwg.mxu0
        %v1266 = vsel %vm944, %v1263, 0
        %1268 = vmatpush.msra.mxu0 0.0
        %1269 = vmatpush.msra.mxu0 0.0
        %1270 = vmatpush.msra.mxu0 0.0
        %1271 = vmatpush.msra.mxu0 0.0
        %1272 = vmatpush.msra.mxu0 0.0
        %1273 = vmatpush.msra.mxu0 0.0
        %1274 = vmatpush.msra.mxu0 0.0
        %1275 = vmatpush.msra.mxu0 0.0
        %1276 = vmatpush.msra.mxu0 0.0
        %1277 = vmatpush.msra.mxu0 0.0
        %1278 = vmatpush.msra.mxu0 0.0
        %1279 = vmatpush.msra.mxu0 0.0
        %1280 = vmatpush.msra.mxu0 %v943
        %1281 = vmatpush.msra.mxu0 %v942
        %1282 = vmatpush.msra.mxu0 %v941
        %1283 = vmatpush.msra.mxu0 %v940
        %1284 = vmatmul.f32.gmra.mxu0 %v1266
        %v1285 = vpop.f32.mrf.mxu0
        %v1286 = vadd.f32 0.0, %v1285
        %1287 = vdwg.mxu0
        %v1288 = vadd.f32 %v1201, %v1286
        %v1289 = vadd.f32 %v766, %v1288
        %v1290 = vld [vmem:[%s8] sm:$0x1]
        %v1292 = vperm.slane %v1290, 0
        %v1294 = vadd.f32 %v1289, %v1292
        %v1295 = vld [vmem:[%s15] sm:$0x1]
        %v1296 = vld [vmem:[%s16] sm:$0x1]
        %1297 = vadd.xlane.f32.xlu0 %v1294
        %v1298 = vpop.xlane.xlu0 %1297
        %v1299 = vmul.f32 %v1298, %v806
        %v1300 = vsub.f32 %v1294, %v1299
        %v1301 = vmul.f32 %v1300, %v1300
        %1302 = vadd.xlane.f32.xlu0 %v1301
        %v1303 = vpop.xlane.xlu0 %1302
        %v1304 = vmul.f32 %v1303, %v806
        %v1305 = vadd.f32 %v1304, 1e-05
        %v1306 = vrsqrt.pop %v1305
        %v1307 = vmul.f32 %v1306, %v1305
        %v1308 = vmul.f32 %v1307, %v1306
        %v1309 = vmul.f32 0.5, %v1308
        %v1310 = vsub.f32 1.5, %v1309
        %v1311 = vmul.f32 %v1306, %v1310
        %vm1312 = vweird.f32 %v1305
        %vm1313 = vweird.f32 %v1306
        %vm1314 = vmor %vm1312, %vm1313
        %v1315 = vsel %vm1314, %v1306, %v1311
        %v1316 = vmul.f32 %v1300, %v1315
        %v1318 = vperm.slane %v1295, 0
        %v1320 = vmul.f32 %v1316, %v1318
        %v1322 = vperm.slane %v1296, 0
        %v1324 = vadd.f32 %v1320, %v1322
        %v1325 = vld [vmem:[#allocation10] sm:$0xff]
        %v1326 = vld [vmem:[#allocation10 + $0x8] sm:$0xff]
        %v1327 = vld [vmem:[#allocation10 + $0x10] sm:$0xff]
        %v1328 = vld [vmem:[#allocation10 + $0x18] sm:$0xff]
        %v1329 = vld [vmem:[#allocation10 + $0x20] sm:$0xff]
        %v1330 = vld [vmem:[#allocation10 + $0x28] sm:$0xff]
        %v1331 = vld [vmem:[#allocation10 + $0x30] sm:$0xff]
        %v1332 = vld [vmem:[#allocation10 + $0x38] sm:$0xff]
        %v1333 = vld [vmem:[#allocation10 + $0x40] sm:$0xff]
        %v1334 = vld [vmem:[#allocation10 + $0x48] sm:$0xff]
        %v1335 = vld [vmem:[#allocation10 + $0x50] sm:$0xff]
        %v1336 = vld [vmem:[#allocation10 + $0x58] sm:$0xff]
        %v1337 = vld [vmem:[#allocation10 + $0x60] sm:$0xff]
        %v1338 = vld [vmem:[#allocation10 + $0x68] sm:$0xff]
        %v1339 = vld [vmem:[#allocation10 + $0x70] sm:$0xff]
        %v1340 = vld [vmem:[#allocation10 + $0x78] sm:$0xff]
        %v1341 = vld [vmem:[#allocation10 + $0x80] sm:$0xff]
        %v1342 = vld [vmem:[#allocation10 + $0x88] sm:$0xff]
        %v1343 = vld [vmem:[#allocation10 + $0x90] sm:$0xff]
        %v1344 = vld [vmem:[#allocation10 + $0x98] sm:$0xff]
        %v1345 = vld [vmem:[#allocation10 + $0xa0] sm:$0xff]
        %v1346 = vld [vmem:[#allocation10 + $0xa8] sm:$0xff]
        %v1347 = vld [vmem:[#allocation10 + $0xb0] sm:$0xff]
        %v1348 = vld [vmem:[#allocation10 + $0xb8] sm:$0xff]
        %v1349 = vld [vmem:[#allocation10 + $0xc0] sm:$0xff]
        %v1350 = vld [vmem:[#allocation10 + $0xc8] sm:$0xff]
        %v1351 = vld [vmem:[#allocation10 + $0xd0] sm:$0xff]
        %v1352 = vld [vmem:[#allocation10 + $0xd8] sm:$0xff]
        %v1353 = vld [vmem:[#allocation10 + $0xe0] sm:$0xff]
        %v1354 = vld [vmem:[#allocation10 + $0xe8] sm:$0xff]
        %v1355 = vld [vmem:[#allocation10 + $0xf0] sm:$0xff]
        %v1356 = vld [vmem:[#allocation10 + $0xf8] sm:$0xff]
        %v1357 = vld [vmem:[#allocation10 + $0x100] sm:$0xff]
        %v1358 = vld [vmem:[#allocation10 + $0x108] sm:$0xff]
        %v1359 = vld [vmem:[#allocation10 + $0x110] sm:$0xff]
        %v1360 = vld [vmem:[#allocation10 + $0x118] sm:$0xff]
        %v1361 = vld [vmem:[#allocation10 + $0x120] sm:$0xff]
        %v1362 = vld [vmem:[#allocation10 + $0x128] sm:$0xff]
        %v1363 = vld [vmem:[#allocation10 + $0x130] sm:$0xff]
        %v1364 = vld [vmem:[#allocation10 + $0x138] sm:$0xff]
        %v1365 = vld [vmem:[#allocation10 + $0x140] sm:$0xff]
        %v1366 = vld [vmem:[#allocation10 + $0x148] sm:$0xff]
        %v1367 = vld [vmem:[#allocation10 + $0x150] sm:$0xff]
        %v1368 = vld [vmem:[#allocation10 + $0x158] sm:$0xff]
        %v1369 = vld [vmem:[#allocation10 + $0x160] sm:$0xff]
        %v1370 = vld [vmem:[#allocation10 + $0x168] sm:$0xff]
        %v1371 = vld [vmem:[#allocation10 + $0x170] sm:$0xff]
        %v1372 = vld [vmem:[#allocation10 + $0x178] sm:$0xff]
        %v1373 = vld [vmem:[#allocation10 + $0x180] sm:$0xff]
        %v1374 = vld [vmem:[#allocation10 + $0x188] sm:$0xff]
        %v1375 = vld [vmem:[#allocation10 + $0x190] sm:$0xff]
        %v1376 = vld [vmem:[#allocation10 + $0x198] sm:$0xff]
        %v1377 = vld [vmem:[#allocation10 + $0x1a0] sm:$0xff]
        %v1378 = vld [vmem:[#allocation10 + $0x1a8] sm:$0xff]
        %v1379 = vld [vmem:[#allocation10 + $0x1b0] sm:$0xff]
        %v1380 = vld [vmem:[#allocation10 + $0x1b8] sm:$0xff]
        %v1381 = vld [vmem:[#allocation10 + $0x1c0] sm:$0xff]
        %v1382 = vld [vmem:[#allocation10 + $0x1c8] sm:$0xff]
        %v1383 = vld [vmem:[#allocation10 + $0x1d0] sm:$0xff]
        %v1384 = vld [vmem:[#allocation10 + $0x1d8] sm:$0xff]
        %v1385 = vld [vmem:[#allocation10 + $0x1e0] sm:$0xff]
        %v1386 = vld [vmem:[#allocation10 + $0x1e8] sm:$0xff]
        %v1387 = vld [vmem:[#allocation10 + $0x1f0] sm:$0xff]
        %v1388 = vld [vmem:[#allocation10 + $0x1f8] sm:$0xff]
        %v1389 = vld [vmem:[%s10] sm:$0xf]
        %v1391 = vperm.slane %v1389, 0
        %v1392 = vperm.slane %v1389, 1
        %v1393 = vperm.slane %v1389, 2
        %v1394 = vperm.slane %v1389, 3
        %1399 = vmatpush.msra.mxu0 %v1385
        %1400 = vmatpush.msra.mxu0 %v1381
        %1401 = vmatpush.msra.mxu0 %v1377
        %1402 = vmatpush.msra.mxu0 %v1373
        %1403 = vmatpush.msra.mxu0 %v1369
        %1404 = vmatpush.msra.mxu0 %v1365
        %1405 = vmatpush.msra.mxu0 %v1361
        %1406 = vmatpush.msra.mxu0 %v1357
        %1407 = vmatpush.msra.mxu0 %v1353
        %1408 = vmatpush.msra.mxu0 %v1349
        %1409 = vmatpush.msra.mxu0 %v1345
        %1410 = vmatpush.msra.mxu0 %v1341
        %1411 = vmatpush.msra.mxu0 %v1337
        %1412 = vmatpush.msra.mxu0 %v1333
        %1413 = vmatpush.msra.mxu0 %v1329
        %1414 = vmatpush.msra.mxu0 %v1325
        %1415 = vmatmul.f32.gmra.mxu0 %v1324
        %v1416 = vpop.f32.mrf.mxu0
        %v1417 = vadd.f32 %v1391, %v1416
        %1418 = vdwg.mxu0
        %1419 = vmatpush.msra.mxu0 %v1386
        %1420 = vmatpush.msra.mxu0 %v1382
        %1421 = vmatpush.msra.mxu0 %v1378
        %1422 = vmatpush.msra.mxu0 %v1374
        %1423 = vmatpush.msra.mxu0 %v1370
        %1424 = vmatpush.msra.mxu0 %v1366
        %1425 = vmatpush.msra.mxu0 %v1362
        %1426 = vmatpush.msra.mxu0 %v1358
        %1427 = vmatpush.msra.mxu0 %v1354
        %1428 = vmatpush.msra.mxu0 %v1350
        %1429 = vmatpush.msra.mxu0 %v1346
        %1430 = vmatpush.msra.mxu0 %v1342
        %1431 = vmatpush.msra.mxu0 %v1338
        %1432 = vmatpush.msra.mxu0 %v1334
        %1433 = vmatpush.msra.mxu0 %v1330
        %1434 = vmatpush.msra.mxu0 %v1326
        %1435 = vmatmul.f32.gmra.mxu0 %v1324
        %v1436 = vpop.f32.mrf.mxu0
        %v1437 = vadd.f32 %v1392, %v1436
        %1438 = vdwg.mxu0
        %1439 = vmatpush.msra.mxu0 %v1387
        %1440 = vmatpush.msra.mxu0 %v1383
        %1441 = vmatpush.msra.mxu0 %v1379
        %1442 = vmatpush.msra.mxu0 %v1375
        %1443 = vmatpush.msra.mxu0 %v1371
        %1444 = vmatpush.msra.mxu0 %v1367
        %1445 = vmatpush.msra.mxu0 %v1363
        %1446 = vmatpush.msra.mxu0 %v1359
        %1447 = vmatpush.msra.mxu0 %v1355
        %1448 = vmatpush.msra.mxu0 %v1351
        %1449 = vmatpush.msra.mxu0 %v1347
        %1450 = vmatpush.msra.mxu0 %v1343
        %1451 = vmatpush.msra.mxu0 %v1339
        %1452 = vmatpush.msra.mxu0 %v1335
        %1453 = vmatpush.msra.mxu0 %v1331
        %1454 = vmatpush.msra.mxu0 %v1327
        %1455 = vmatmul.f32.gmra.mxu0 %v1324
        %v1456 = vpop.f32.mrf.mxu0
        %v1457 = vadd.f32 %v1393, %v1456
        %1458 = vdwg.mxu0
        %1459 = vmatpush.msra.mxu0 %v1388
        %1460 = vmatpush.msra.mxu0 %v1384
        %1461 = vmatpush.msra.mxu0 %v1380
        %1462 = vmatpush.msra.mxu0 %v1376
        %1463 = vmatpush.msra.mxu0 %v1372
        %1464 = vmatpush.msra.mxu0 %v1368
        %1465 = vmatpush.msra.mxu0 %v1364
        %1466 = vmatpush.msra.mxu0 %v1360
        %1467 = vmatpush.msra.mxu0 %v1356
        %1468 = vmatpush.msra.mxu0 %v1352
        %1469 = vmatpush.msra.mxu0 %v1348
        %1470 = vmatpush.msra.mxu0 %v1344
        %1471 = vmatpush.msra.mxu0 %v1340
        %1472 = vmatpush.msra.mxu0 %v1336
        %1473 = vmatpush.msra.mxu0 %v1332
        %1474 = vmatpush.msra.mxu0 %v1328
        %1475 = vmatmul.f32.gmra.mxu0 %v1324
        %v1476 = vpop.f32.mrf.mxu0
        %v1477 = vadd.f32 %v1394, %v1476
        %1478 = vdwg.mxu0
        %v1479 = vmax.f32 %v1417, 0.0
        %v1480 = vmax.f32 %v1437, 0.0
        %v1481 = vmax.f32 %v1457, 0.0
        %v1482 = vmax.f32 %v1477, 0.0
        %v1483 = vld [vmem:[#allocation11] sm:$0xff]
        %v1484 = vld [vmem:[#allocation11 + $0x8] sm:$0xff]
        %v1485 = vld [vmem:[#allocation11 + $0x10] sm:$0xff]
        %v1486 = vld [vmem:[#allocation11 + $0x18] sm:$0xff]
        %v1487 = vld [vmem:[#allocation11 + $0x20] sm:$0xff]
        %v1488 = vld [vmem:[#allocation11 + $0x28] sm:$0xff]
        %v1489 = vld [vmem:[#allocation11 + $0x30] sm:$0xff]
        %v1490 = vld [vmem:[#allocation11 + $0x38] sm:$0xff]
        %v1491 = vld [vmem:[#allocation11 + $0x40] sm:$0xff]
        %v1492 = vld [vmem:[#allocation11 + $0x48] sm:$0xff]
        %v1493 = vld [vmem:[#allocation11 + $0x50] sm:$0xff]
        %v1494 = vld [vmem:[#allocation11 + $0x58] sm:$0xff]
        %v1495 = vld [vmem:[#allocation11 + $0x60] sm:$0xff]
        %v1496 = vld [vmem:[#allocation11 + $0x68] sm:$0xff]
        %v1497 = vld [vmem:[#allocation11 + $0x70] sm:$0xff]
        %v1498 = vld [vmem:[#allocation11 + $0x78] sm:$0xff]
        %v1499 = vld [vmem:[#allocation11 + $0x80] sm:$0xff]
        %v1500 = vld [vmem:[#allocation11 + $0x88] sm:$0xff]
        %v1501 = vld [vmem:[#allocation11 + $0x90] sm:$0xff]
        %v1502 = vld [vmem:[#allocation11 + $0x98] sm:$0xff]
        %v1503 = vld [vmem:[#allocation11 + $0xa0] sm:$0xff]
        %v1504 = vld [vmem:[#allocation11 + $0xa8] sm:$0xff]
        %v1505 = vld [vmem:[#allocation11 + $0xb0] sm:$0xff]
        %v1506 = vld [vmem:[#allocation11 + $0xb8] sm:$0xff]
        %v1507 = vld [vmem:[#allocation11 + $0xc0] sm:$0xff]
        %v1508 = vld [vmem:[#allocation11 + $0xc8] sm:$0xff]
        %v1509 = vld [vmem:[#allocation11 + $0xd0] sm:$0xff]
        %v1510 = vld [vmem:[#allocation11 + $0xd8] sm:$0xff]
        %v1511 = vld [vmem:[#allocation11 + $0xe0] sm:$0xff]
        %v1512 = vld [vmem:[#allocation11 + $0xe8] sm:$0xff]
        %v1513 = vld [vmem:[#allocation11 + $0xf0] sm:$0xff]
        %v1514 = vld [vmem:[#allocation11 + $0xf8] sm:$0xff]
        %v1515 = vld [vmem:[#allocation11 + $0x100] sm:$0xff]
        %v1516 = vld [vmem:[#allocation11 + $0x108] sm:$0xff]
        %v1517 = vld [vmem:[#allocation11 + $0x110] sm:$0xff]
        %v1518 = vld [vmem:[#allocation11 + $0x118] sm:$0xff]
        %v1519 = vld [vmem:[#allocation11 + $0x120] sm:$0xff]
        %v1520 = vld [vmem:[#allocation11 + $0x128] sm:$0xff]
        %v1521 = vld [vmem:[#allocation11 + $0x130] sm:$0xff]
        %v1522 = vld [vmem:[#allocation11 + $0x138] sm:$0xff]
        %v1523 = vld [vmem:[#allocation11 + $0x140] sm:$0xff]
        %v1524 = vld [vmem:[#allocation11 + $0x148] sm:$0xff]
        %v1525 = vld [vmem:[#allocation11 + $0x150] sm:$0xff]
        %v1526 = vld [vmem:[#allocation11 + $0x158] sm:$0xff]
        %v1527 = vld [vmem:[#allocation11 + $0x160] sm:$0xff]
        %v1528 = vld [vmem:[#allocation11 + $0x168] sm:$0xff]
        %v1529 = vld [vmem:[#allocation11 + $0x170] sm:$0xff]
        %v1530 = vld [vmem:[#allocation11 + $0x178] sm:$0xff]
        %v1531 = vld [vmem:[#allocation11 + $0x180] sm:$0xff]
        %v1532 = vld [vmem:[#allocation11 + $0x188] sm:$0xff]
        %v1533 = vld [vmem:[#allocation11 + $0x190] sm:$0xff]
        %v1534 = vld [vmem:[#allocation11 + $0x198] sm:$0xff]
        %v1535 = vld [vmem:[#allocation11 + $0x1a0] sm:$0xff]
        %v1536 = vld [vmem:[#allocation11 + $0x1a8] sm:$0xff]
        %v1537 = vld [vmem:[#allocation11 + $0x1b0] sm:$0xff]
        %v1538 = vld [vmem:[#allocation11 + $0x1b8] sm:$0xff]
        %v1539 = vld [vmem:[#allocation11 + $0x1c0] sm:$0xff]
        %v1540 = vld [vmem:[#allocation11 + $0x1c8] sm:$0xff]
        %v1541 = vld [vmem:[#allocation11 + $0x1d0] sm:$0xff]
        %v1542 = vld [vmem:[#allocation11 + $0x1d8] sm:$0xff]
        %v1543 = vld [vmem:[#allocation11 + $0x1e0] sm:$0xff]
        %v1544 = vld [vmem:[#allocation11 + $0x1e8] sm:$0xff]
        %v1545 = vld [vmem:[#allocation11 + $0x1f0] sm:$0xff]
        %v1546 = vld [vmem:[#allocation11 + $0x1f8] sm:$0xff]
        %1547 = vmatpush.msra.mxu0 %v1498
        %1548 = vmatpush.msra.mxu0 %v1497
        %1549 = vmatpush.msra.mxu0 %v1496
        %1550 = vmatpush.msra.mxu0 %v1495
        %1551 = vmatpush.msra.mxu0 %v1494
        %1552 = vmatpush.msra.mxu0 %v1493
        %1553 = vmatpush.msra.mxu0 %v1492
        %1554 = vmatpush.msra.mxu0 %v1491
        %1555 = vmatpush.msra.mxu0 %v1490
        %1556 = vmatpush.msra.mxu0 %v1489
        %1557 = vmatpush.msra.mxu0 %v1488
        %1558 = vmatpush.msra.mxu0 %v1487
        %1559 = vmatpush.msra.mxu0 %v1486
        %1560 = vmatpush.msra.mxu0 %v1485
        %1561 = vmatpush.msra.mxu0 %v1484
        %1562 = vmatpush.msra.mxu0 %v1483
        %1563 = vmatmul.f32.gmra.mxu0 %v1479
        %v1564 = vpop.f32.mrf.mxu0
        %v1565 = vadd.f32 0.0, %v1564
        %1566 = vdwg.mxu0
        %1567 = vmatpush.msra.mxu0 %v1514
        %1568 = vmatpush.msra.mxu0 %v1513
        %1569 = vmatpush.msra.mxu0 %v1512
        %1570 = vmatpush.msra.mxu0 %v1511
        %1571 = vmatpush.msra.mxu0 %v1510
        %1572 = vmatpush.msra.mxu0 %v1509
        %1573 = vmatpush.msra.mxu0 %v1508
        %1574 = vmatpush.msra.mxu0 %v1507
        %1575 = vmatpush.msra.mxu0 %v1506
        %1576 = vmatpush.msra.mxu0 %v1505
        %1577 = vmatpush.msra.mxu0 %v1504
        %1578 = vmatpush.msra.mxu0 %v1503
        %1579 = vmatpush.msra.mxu0 %v1502
        %1580 = vmatpush.msra.mxu0 %v1501
        %1581 = vmatpush.msra.mxu0 %v1500
        %1582 = vmatpush.msra.mxu0 %v1499
        %1583 = vmatmul.f32.gmra.mxu0 %v1480
        %v1584 = vpop.f32.mrf.mxu0
        %v1585 = vadd.f32 %v1565, %v1584
        %1586 = vdwg.mxu0
        %1587 = vmatpush.msra.mxu0 %v1530
        %1588 = vmatpush.msra.mxu0 %v1529
        %1589 = vmatpush.msra.mxu0 %v1528
        %1590 = vmatpush.msra.mxu0 %v1527
        %1591 = vmatpush.msra.mxu0 %v1526
        %1592 = vmatpush.msra.mxu0 %v1525
        %1593 = vmatpush.msra.mxu0 %v1524
        %1594 = vmatpush.msra.mxu0 %v1523
        %1595 = vmatpush.msra.mxu0 %v1522
        %1596 = vmatpush.msra.mxu0 %v1521
        %1597 = vmatpush.msra.mxu0 %v1520
        %1598 = vmatpush.msra.mxu0 %v1519
        %1599 = vmatpush.msra.mxu0 %v1518
        %1600 = vmatpush.msra.mxu0 %v1517
        %1601 = vmatpush.msra.mxu0 %v1516
        %1602 = vmatpush.msra.mxu0 %v1515
        %1603 = vmatmul.f32.gmra.mxu0 %v1481
        %v1604 = vpop.f32.mrf.mxu0
        %v1605 = vadd.f32 %v1585, %v1604
        %1606 = vdwg.mxu0
        %1607 = vmatpush.msra.mxu0 %v1546
        %1608 = vmatpush.msra.mxu0 %v1545
        %1609 = vmatpush.msra.mxu0 %v1544
        %1610 = vmatpush.msra.mxu0 %v1543
        %1611 = vmatpush.msra.mxu0 %v1542
        %1612 = vmatpush.msra.mxu0 %v1541
        %1613 = vmatpush.msra.mxu0 %v1540
        %1614 = vmatpush.msra.mxu0 %v1539
        %1615 = vmatpush.msra.mxu0 %v1538
        %1616 = vmatpush.msra.mxu0 %v1537
        %1617 = vmatpush.msra.mxu0 %v1536
        %1618 = vmatpush.msra.mxu0 %v1535
        %1619 = vmatpush.msra.mxu0 %v1534
        %1620 = vmatpush.msra.mxu0 %v1533
        %1621 = vmatpush.msra.mxu0 %v1532
        %1622 = vmatpush.msra.mxu0 %v1531
        %1623 = vmatmul.f32.gmra.mxu0 %v1482
        %v1624 = vpop.f32.mrf.mxu0
        %v1625 = vadd.f32 %v1605, %v1624
        %1626 = vdwg.mxu0
        %v1627 = vadd.f32 %v1294, %v1625
        %v1628 = vld [vmem:[%s12] sm:$0x1]
        %v1630 = vperm.slane %v1628, 0
        %v1632 = vadd.f32 %v1627, %v1630
        %s1633 = scalar_lea.vmem %s13, 1
        %v1634 = vld [vmem:[%s1633] sm:$0x1]
        %s1635 = scalar_lea.vmem %s14, 1
        %v1636 = vld [vmem:[%s1635] sm:$0x1]
        %1637 = vadd.xlane.f32.xlu0 %v1632
        %v1638 = vpop.xlane.xlu0 %1637
        %v1639 = vmul.f32 %v1638, %v806
        %v1640 = vsub.f32 %v1632, %v1639
        %v1641 = vmul.f32 %v1640, %v1640
        %1642 = vadd.xlane.f32.xlu0 %v1641
        %v1643 = vpop.xlane.xlu0 %1642
        %v1644 = vmul.f32 %v1643, %v806
        %v1645 = vadd.f32 %v1644, 1e-05
        %v1646 = vrsqrt.pop %v1645
        %v1647 = vmul.f32 %v1646, %v1645
        %v1648 = vmul.f32 %v1647, %v1646
        %v1649 = vmul.f32 0.5, %v1648
        %v1650 = vsub.f32 1.5, %v1649
        %v1651 = vmul.f32 %v1646, %v1650
        %vm1652 = vweird.f32 %v1645
        %vm1653 = vweird.f32 %v1646
        %vm1654 = vmor %vm1652, %vm1653
        %v1655 = vsel %vm1654, %v1646, %v1651
        %v1656 = vmul.f32 %v1640, %v1655
        %v1658 = vperm.slane %v1634, 0
        %v1660 = vmul.f32 %v1656, %v1658
        %v1662 = vperm.slane %v1636, 0
        %v1664 = vadd.f32 %v1660, %v1662
        %s1665 = scalar_lea.vmem [#allocation5], 128
        %v1666 = vld [vmem:[%s1665] sm:$0xff]
        %v1667 = vld [vmem:[%s1665 + $0x8] sm:$0xff]
        %v1668 = vld [vmem:[%s1665 + $0x10] sm:$0xff]
        %v1669 = vld [vmem:[%s1665 + $0x18] sm:$0xff]
        %v1670 = vld [vmem:[%s1665 + $0x20] sm:$0xff]
        %v1671 = vld [vmem:[%s1665 + $0x28] sm:$0xff]
        %v1672 = vld [vmem:[%s1665 + $0x30] sm:$0xff]
        %v1673 = vld [vmem:[%s1665 + $0x38] sm:$0xff]
        %v1674 = vld [vmem:[%s1665 + $0x40] sm:$0xff]
        %v1675 = vld [vmem:[%s1665 + $0x48] sm:$0xff]
        %v1676 = vld [vmem:[%s1665 + $0x50] sm:$0xff]
        %v1677 = vld [vmem:[%s1665 + $0x58] sm:$0xff]
        %v1678 = vld [vmem:[%s1665 + $0x60] sm:$0xff]
        %v1679 = vld [vmem:[%s1665 + $0x68] sm:$0xff]
        %v1680 = vld [vmem:[%s1665 + $0x70] sm:$0xff]
        %v1681 = vld [vmem:[%s1665 + $0x78] sm:$0xff]
        %1682 = vmatpush.msra.mxu0 %v1681
        %1683 = vmatpush.msra.mxu0 %v1680
        %1684 = vmatpush.msra.mxu0 %v1679
        %1685 = vmatpush.msra.mxu0 %v1678
        %1686 = vmatpush.msra.mxu0 %v1677
        %1687 = vmatpush.msra.mxu0 %v1676
        %1688 = vmatpush.msra.mxu0 %v1675
        %1689 = vmatpush.msra.mxu0 %v1674
        %1690 = vmatpush.msra.mxu0 %v1673
        %1691 = vmatpush.msra.mxu0 %v1672
        %1692 = vmatpush.msra.mxu0 %v1671
        %1693 = vmatpush.msra.mxu0 %v1670
        %1694 = vmatpush.msra.mxu0 %v1669
        %1695 = vmatpush.msra.mxu0 %v1668
        %1696 = vmatpush.msra.mxu0 %v1667
        %1697 = vmatpush.msra.mxu0 %v1666
        %1698 = vmatmul.f32.gmra.mxu0 %v1664
        %v1699 = vpop.f32.mrf.mxu0
        %v1700 = vadd.f32 0.0, %v1699
        %1701 = vdwg.mxu0
        %s1702 = scalar_lea.vmem [#allocation7], 128
        %v1703 = vld [vmem:[%s1702] sm:$0xff]
        %v1704 = vld [vmem:[%s1702 + $0x8] sm:$0xff]
        %v1705 = vld [vmem:[%s1702 + $0x10] sm:$0xff]
        %v1706 = vld [vmem:[%s1702 + $0x18] sm:$0xff]
        %v1707 = vld [vmem:[%s1702 + $0x20] sm:$0xff]
        %v1708 = vld [vmem:[%s1702 + $0x28] sm:$0xff]
        %v1709 = vld [vmem:[%s1702 + $0x30] sm:$0xff]
        %v1710 = vld [vmem:[%s1702 + $0x38] sm:$0xff]
        %v1711 = vld [vmem:[%s1702 + $0x40] sm:$0xff]
        %v1712 = vld [vmem:[%s1702 + $0x48] sm:$0xff]
        %v1713 = vld [vmem:[%s1702 + $0x50] sm:$0xff]
        %v1714 = vld [vmem:[%s1702 + $0x58] sm:$0xff]
        %v1715 = vld [vmem:[%s1702 + $0x60] sm:$0xff]
        %v1716 = vld [vmem:[%s1702 + $0x68] sm:$0xff]
        %v1717 = vld [vmem:[%s1702 + $0x70] sm:$0xff]
        %v1718 = vld [vmem:[%s1702 + $0x78] sm:$0xff]
        %1719 = vmatpush.msra.mxu0 %v1718
        %1720 = vmatpush.msra.mxu0 %v1717
        %1721 = vmatpush.msra.mxu0 %v1716
        %1722 = vmatpush.msra.mxu0 %v1715
        %1723 = vmatpush.msra.mxu0 %v1714
        %1724 = vmatpush.msra.mxu0 %v1713
        %1725 = vmatpush.msra.mxu0 %v1712
        %1726 = vmatpush.msra.mxu0 %v1711
        %1727 = vmatpush.msra.mxu0 %v1710
        %1728 = vmatpush.msra.mxu0 %v1709
        %1729 = vmatpush.msra.mxu0 %v1708
        %1730 = vmatpush.msra.mxu0 %v1707
        %1731 = vmatpush.msra.mxu0 %v1706
        %1732 = vmatpush.msra.mxu0 %v1705
        %1733 = vmatpush.msra.mxu0 %v1704
        %1734 = vmatpush.msra.mxu0 %v1703
        %1735 = vmatmul.f32.gmra.mxu0 %v1664
        %v1736 = vpop.f32.mrf.mxu0
        %v1737 = vadd.f32 0.0, %v1736
        %1738 = vdwg.mxu0
        %v1739 = vmul.f32 %v1700, %v778
        %1740 = vmatpush.msra.mxu0 %v795
        %1741 = vmatpush.msra.mxu0 %v794
        %1742 = vmatpush.msra.mxu0 %v793
        %1743 = vmatpush.msra.mxu0 %v792
        %1744 = vmatpush.msra.mxu0 %v791
        %1745 = vmatpush.msra.mxu0 %v790
        %1746 = vmatpush.msra.mxu0 %v789
        %1747 = vmatpush.msra.mxu0 %v788
        %1748 = vmatpush.msra.mxu0 %v787
        %1749 = vmatpush.msra.mxu0 %v786
        %1750 = vmatpush.msra.mxu0 %v785
        %1751 = vmatpush.msra.mxu0 %v784
        %1752 = vmatpush.msra.mxu0 %v783
        %1753 = vmatpush.msra.mxu0 %v782
        %1754 = vmatpush.msra.mxu0 %v781
        %1755 = vmatpush.msra.mxu0 %v780
        %1756 = vmatmul.f32.gmra.mxu0 %v1700
        %v1757 = vpop.f32.mrf.mxu0
        %v1758 = vadd.f32 0.0, %v1757
        %1759 = vdwg.mxu0
        %v1760 = vmul.f32 %v1758, %v779
        %v1761 = vadd.f32 %v1739, %v1760
        %s1762 = scalar_lea.vmem [#allocation8], 128
        %v1763 = vld [vmem:[%s1762] sm:$0xff]
        %v1764 = vld [vmem:[%s1762 + $0x8] sm:$0xff]
        %v1765 = vld [vmem:[%s1762 + $0x10] sm:$0xff]
        %v1766 = vld [vmem:[%s1762 + $0x18] sm:$0xff]
        %v1767 = vld [vmem:[%s1762 + $0x20] sm:$0xff]
        %v1768 = vld [vmem:[%s1762 + $0x28] sm:$0xff]
        %v1769 = vld [vmem:[%s1762 + $0x30] sm:$0xff]
        %v1770 = vld [vmem:[%s1762 + $0x38] sm:$0xff]
        %v1771 = vld [vmem:[%s1762 + $0x40] sm:$0xff]
        %v1772 = vld [vmem:[%s1762 + $0x48] sm:$0xff]
        %v1773 = vld [vmem:[%s1762 + $0x50] sm:$0xff]
        %v1774 = vld [vmem:[%s1762 + $0x58] sm:$0xff]
        %v1775 = vld [vmem:[%s1762 + $0x60] sm:$0xff]
        %v1776 = vld [vmem:[%s1762 + $0x68] sm:$0xff]
        %v1777 = vld [vmem:[%s1762 + $0x70] sm:$0xff]
        %v1778 = vld [vmem:[%s1762 + $0x78] sm:$0xff]
        %v1780 = vsel %vm944, %v1761, 0
        %1782 = vmatpush.xpose.msra.mxu0 0.0
        %1783 = vmatpush.xpose.msra.mxu0 0.0
        %1784 = vmatpush.xpose.msra.mxu0 0.0
        %1785 = vmatpush.xpose.msra.mxu0 0.0
        %1786 = vmatpush.xpose.msra.mxu0 0.0
        %1787 = vmatpush.xpose.msra.mxu0 0.0
        %1788 = vmatpush.xpose.msra.mxu0 0.0
        %1789 = vmatpush.xpose.msra.mxu0 0.0
        %1790 = vmatpush.xpose.msra.mxu0 0.0
        %1791 = vmatpush.xpose.msra.mxu0 0.0
        %1792 = vmatpush.xpose.msra.mxu0 0.0
        %1793 = vmatpush.xpose.msra.mxu0 0.0
        %1794 = vmatpush.xpose.msra.mxu0 0.0
        %1795 = vmatpush.xpose.msra.mxu0 0.0
        %1796 = vmatpush.xpose.msra.mxu0 0.0
        %1797 = vmatpush.xpose.msra.mxu0 %v1780
        %1798 = vmatmul.f32.gmra.mxu0 %v1780
        %v1799 = vpop.f32.mrf.mxu0
        %v1800 = vadd.f32 0.0, %v1799
        %1801 = vdwg.mxu0
        %v1802 = vmul.f32 %v1800, 0.088388346
        %v1803 = vadd.f32 %v1802, %v777
        %v1804 = vsel %vm970, %v1803, -inf
        %1805 = vmax.xlane.f32.xlu0 %v1804
        %v1806 = vpop.xlane.xlu0 %1805
        %v1807 = vsub.f32 %v1803, %v1806
        %v1808 = vmul.f32 %v1807, 1.442695
        %v1809 = vpow.pop %v1808
        %v1810 = vsel %vm970, %v1809, 0.0
        %1811 = vadd.xlane.f32.xlu0 %v1810
        %v1812 = vpop.xlane.xlu0 %1811
        %v1813 = vrcp.pop %v1812
        %v1814 = vmul.f32 %v1809, %v1813
        %v1816 = vsel %vm970, %v1814, 0
        %1818 = vmatpush.msra.mxu0 0.0
        %1819 = vmatpush.msra.mxu0 0.0
        %1820 = vmatpush.msra.mxu0 0.0
        %1821 = vmatpush.msra.mxu0 0.0
        %1822 = vmatpush.msra.mxu0 0.0
        %1823 = vmatpush.msra.mxu0 0.0
        %1824 = vmatpush.msra.mxu0 0.0
        %1825 = vmatpush.msra.mxu0 0.0
        %1826 = vmatpush.msra.mxu0 0.0
        %1827 = vmatpush.msra.mxu0 0.0
        %1828 = vmatpush.msra.mxu0 0.0
        %1829 = vmatpush.msra.mxu0 0.0
        %1830 = vmatpush.msra.mxu0 0.0
        %1831 = vmatpush.msra.mxu0 0.0
        %1832 = vmatpush.msra.mxu0 0.0
        %1833 = vmatpush.msra.mxu0 %v1737
        %1834 = vmatmul.f32.gmra.mxu0 %v1816
        %v1835 = vpop.f32.mrf.mxu0
        %v1836 = vadd.f32 0.0, %v1835
        %1837 = vdwg.mxu0
        %1838 = vrot.lane.b32.xlu0 %v1761, 96
        %v1839 = vpop.permute.xlu0 %1838
        %v1840 = vsel %vm944, %v1839, 0
        %1842 = vmatpush.xpose.msra.mxu0 0.0
        %1843 = vmatpush.xpose.msra.mxu0 0.0
        %1844 = vmatpush.xpose.msra.mxu0 0.0
        %1845 = vmatpush.xpose.msra.mxu0 0.0
        %1846 = vmatpush.xpose.msra.mxu0 0.0
        %1847 = vmatpush.xpose.msra.mxu0 0.0
        %1848 = vmatpush.xpose.msra.mxu0 0.0
        %1849 = vmatpush.xpose.msra.mxu0 0.0
        %1850 = vmatpush.xpose.msra.mxu0 0.0
        %1851 = vmatpush.xpose.msra.mxu0 0.0
        %1852 = vmatpush.xpose.msra.mxu0 0.0
        %1853 = vmatpush.xpose.msra.mxu0 0.0
        %1854 = vmatpush.xpose.msra.mxu0 0.0
        %1855 = vmatpush.xpose.msra.mxu0 0.0
        %1856 = vmatpush.xpose.msra.mxu0 0.0
        %1857 = vmatpush.xpose.msra.mxu0 %v1840
        %1858 = vmatmul.f32.gmra.mxu0 %v1840
        %v1859 = vpop.f32.mrf.mxu0
        %v1860 = vadd.f32 0.0, %v1859
        %1861 = vdwg.mxu0
        %v1862 = vmul.f32 %v1860, 0.088388346
        %v1863 = vadd.f32 %v1862, %v777
        %v1864 = vsel %vm970, %v1863, -inf
        %1865 = vmax.xlane.f32.xlu0 %v1864
        %v1866 = vpop.xlane.xlu0 %1865
        %v1867 = vsub.f32 %v1863, %v1866
        %v1868 = vmul.f32 %v1867, 1.442695
        %v1869 = vpow.pop %v1868
        %v1870 = vsel %vm970, %v1869, 0.0
        %1871 = vadd.xlane.f32.xlu0 %v1870
        %v1872 = vpop.xlane.xlu0 %1871
        %v1873 = vrcp.pop %v1872
        %v1874 = vmul.f32 %v1869, %v1873
        %1876 = vrot.lane.b32.xlu0 %v1737, 96
        %v1877 = vpop.permute.xlu0 %1876
        %v1880 = vsel %vm970, %v1874, 0
        %1882 = vmatpush.msra.mxu0 0.0
        %1883 = vmatpush.msra.mxu0 0.0
        %1884 = vmatpush.msra.mxu0 0.0
        %1885 = vmatpush.msra.mxu0 0.0
        %1886 = vmatpush.msra.mxu0 0.0
        %1887 = vmatpush.msra.mxu0 0.0
        %1888 = vmatpush.msra.mxu0 0.0
        %1889 = vmatpush.msra.mxu0 0.0
        %1890 = vmatpush.msra.mxu0 0.0
        %1891 = vmatpush.msra.mxu0 0.0
        %1892 = vmatpush.msra.mxu0 0.0
        %1893 = vmatpush.msra.mxu0 0.0
        %1894 = vmatpush.msra.mxu0 0.0
        %1895 = vmatpush.msra.mxu0 0.0
        %1896 = vmatpush.msra.mxu0 0.0
        %1897 = vmatpush.msra.mxu0 %v1877
        %1898 = vmatmul.f32.gmra.mxu0 %v1880
        %v1899 = vpop.f32.mrf.mxu0
        %v1900 = vadd.f32 0.0, %v1899
        %1901 = vdwg.mxu0
        %v1903 = vsel %vm944, %v1900, 0
        %1905 = vmatpush.msra.mxu0 0.0
        %1906 = vmatpush.msra.mxu0 0.0
        %1907 = vmatpush.msra.mxu0 0.0
        %1908 = vmatpush.msra.mxu0 0.0
        %1909 = vmatpush.msra.mxu0 0.0
        %1910 = vmatpush.msra.mxu0 0.0
        %1911 = vmatpush.msra.mxu0 0.0
        %1912 = vmatpush.msra.mxu0 0.0
        %1913 = vmatpush.msra.mxu0 0.0
        %1914 = vmatpush.msra.mxu0 0.0
        %1915 = vmatpush.msra.mxu0 0.0
        %1916 = vmatpush.msra.mxu0 0.0
        %1917 = vmatpush.msra.mxu0 %v1770
        %1918 = vmatpush.msra.mxu0 %v1769
        %1919 = vmatpush.msra.mxu0 %v1768
        %1920 = vmatpush.msra.mxu0 %v1767
        %1921 = vmatmul.f32.gmra.mxu0 %v1903
        %v1922 = vpop.f32.mrf.mxu0
        %v1923 = vadd.f32 0.0, %v1922
        %1924 = vdwg.mxu0
        %v1926 = vsel %vm944, %v1836, 0
        %1928 = vmatpush.msra.mxu0 0.0
        %1929 = vmatpush.msra.mxu0 0.0
        %1930 = vmatpush.msra.mxu0 0.0
        %1931 = vmatpush.msra.mxu0 0.0
        %1932 = vmatpush.msra.mxu0 0.0
        %1933 = vmatpush.msra.mxu0 0.0
        %1934 = vmatpush.msra.mxu0 0.0
        %1935 = vmatpush.msra.mxu0 0.0
        %1936 = vmatpush.msra.mxu0 0.0
        %1937 = vmatpush.msra.mxu0 0.0
        %1938 = vmatpush.msra.mxu0 0.0
        %1939 = vmatpush.msra.mxu0 0.0
        %1940 = vmatpush.msra.mxu0 %v1766
        %1941 = vmatpush.msra.mxu0 %v1765
        %1942 = vmatpush.msra.mxu0 %v1764
        %1943 = vmatpush.msra.mxu0 %v1763
        %1944 = vmatmul.f32.gmra.mxu0 %v1926
        %v1945 = vpop.f32.mrf.mxu0
        %v1946 = vadd.f32 %v1923, %v1945
        %1947 = vdwg.mxu0
        %1948 = vrot.lane.b32.xlu0 %v1761, 64
        %v1949 = vpop.permute.xlu0 %1948
        %v1950 = vsel %vm944, %v1949, 0
        %1952 = vmatpush.xpose.msra.mxu0 0.0
        %1953 = vmatpush.xpose.msra.mxu0 0.0
        %1954 = vmatpush.xpose.msra.mxu0 0.0
        %1955 = vmatpush.xpose.msra.mxu0 0.0
        %1956 = vmatpush.xpose.msra.mxu0 0.0
        %1957 = vmatpush.xpose.msra.mxu0 0.0
        %1958 = vmatpush.xpose.msra.mxu0 0.0
        %1959 = vmatpush.xpose.msra.mxu0 0.0
        %1960 = vmatpush.xpose.msra.mxu0 0.0
        %1961 = vmatpush.xpose.msra.mxu0 0.0
        %1962 = vmatpush.xpose.msra.mxu0 0.0
        %1963 = vmatpush.xpose.msra.mxu0 0.0
        %1964 = vmatpush.xpose.msra.mxu0 0.0
        %1965 = vmatpush.xpose.msra.mxu0 0.0
        %1966 = vmatpush.xpose.msra.mxu0 0.0
        %1967 = vmatpush.xpose.msra.mxu0 %v1950
        %1968 = vmatmul.f32.gmra.mxu0 %v1950
        %v1969 = vpop.f32.mrf.mxu0
        %v1970 = vadd.f32 0.0, %v1969
        %1971 = vdwg.mxu0
        %v1972 = vmul.f32 %v1970, 0.088388346
        %v1973 = vadd.f32 %v1972, %v777
        %v1974 = vsel %vm970, %v1973, -inf
        %1975 = vmax.xlane.f32.xlu0 %v1974
        %v1976 = vpop.xlane.xlu0 %1975
        %v1977 = vsub.f32 %v1973, %v1976
        %v1978 = vmul.f32 %v1977, 1.442695
        %v1979 = vpow.pop %v1978
        %v1980 = vsel %vm970, %v1979, 0.0
        %1981 = vadd.xlane.f32.xlu0 %v1980
        %v1982 = vpop.xlane.xlu0 %1981
        %v1983 = vrcp.pop %v1982
        %v1984 = vmul.f32 %v1979, %v1983
        %1985 = vrot.lane.b32.xlu0 %v1737, 64
        %v1986 = vpop.permute.xlu0 %1985
        %v1989 = vsel %vm970, %v1984, 0
        %1991 = vmatpush.msra.mxu0 0.0
        %1992 = vmatpush.msra.mxu0 0.0
        %1993 = vmatpush.msra.mxu0 0.0
        %1994 = vmatpush.msra.mxu0 0.0
        %1995 = vmatpush.msra.mxu0 0.0
        %1996 = vmatpush.msra.mxu0 0.0
        %1997 = vmatpush.msra.mxu0 0.0
        %1998 = vmatpush.msra.mxu0 0.0
        %1999 = vmatpush.msra.mxu0 0.0
        %2000 = vmatpush.msra.mxu0 0.0
        %2001 = vmatpush.msra.mxu0 0.0
        %2002 = vmatpush.msra.mxu0 0.0
        %2003 = vmatpush.msra.mxu0 0.0
        %2004 = vmatpush.msra.mxu0 0.0
        %2005 = vmatpush.msra.mxu0 0.0
        %2006 = vmatpush.msra.mxu0 %v1986
        %2007 = vmatmul.f32.gmra.mxu0 %v1989
        %v2008 = vpop.f32.mrf.mxu0
        %v2009 = vadd.f32 0.0, %v2008
        %2010 = vdwg.mxu0
        %v2012 = vsel %vm944, %v2009, 0
        %2014 = vmatpush.msra.mxu0 0.0
        %2015 = vmatpush.msra.mxu0 0.0
        %2016 = vmatpush.msra.mxu0 0.0
        %2017 = vmatpush.msra.mxu0 0.0
        %2018 = vmatpush.msra.mxu0 0.0
        %2019 = vmatpush.msra.mxu0 0.0
        %2020 = vmatpush.msra.mxu0 0.0
        %2021 = vmatpush.msra.mxu0 0.0
        %2022 = vmatpush.msra.mxu0 0.0
        %2023 = vmatpush.msra.mxu0 0.0
        %2024 = vmatpush.msra.mxu0 0.0
        %2025 = vmatpush.msra.mxu0 0.0
        %2026 = vmatpush.msra.mxu0 %v1774
        %2027 = vmatpush.msra.mxu0 %v1773
        %2028 = vmatpush.msra.mxu0 %v1772
        %2029 = vmatpush.msra.mxu0 %v1771
        %2030 = vmatmul.f32.gmra.mxu0 %v2012
        %v2031 = vpop.f32.mrf.mxu0
        %v2032 = vadd.f32 0.0, %v2031
        %2033 = vdwg.mxu0
        %v2034 = vadd.f32 %v1946, %v2032
        %2035 = vrot.lane.b32.xlu0 %v1761, 32
        %v2036 = vpop.permute.xlu0 %2035
        %v2037 = vsel %vm944, %v2036, 0
        %2039 = vmatpush.xpose.msra.mxu0 0.0
        %2040 = vmatpush.xpose.msra.mxu0 0.0
        %2041 = vmatpush.xpose.msra.mxu0 0.0
        %2042 = vmatpush.xpose.msra.mxu0 0.0
        %2043 = vmatpush.xpose.msra.mxu0 0.0
        %2044 = vmatpush.xpose.msra.mxu0 0.0
        %2045 = vmatpush.xpose.msra.mxu0 0.0
        %2046 = vmatpush.xpose.msra.mxu0 0.0
        %2047 = vmatpush.xpose.msra.mxu0 0.0
        %2048 = vmatpush.xpose.msra.mxu0 0.0
        %2049 = vmatpush.xpose.msra.mxu0 0.0
        %2050 = vmatpush.xpose.msra.mxu0 0.0
        %2051 = vmatpush.xpose.msra.mxu0 0.0
        %2052 = vmatpush.xpose.msra.mxu0 0.0
        %2053 = vmatpush.xpose.msra.mxu0 0.0
        %2054 = vmatpush.xpose.msra.mxu0 %v2037
        %2055 = vmatmul.f32.gmra.mxu0 %v2037
        %v2056 = vpop.f32.mrf.mxu0
        %v2057 = vadd.f32 0.0, %v2056
        %2058 = vdwg.mxu0
        %v2059 = vmul.f32 %v2057, 0.088388346
        %v2060 = vadd.f32 %v2059, %v777
        %v2061 = vsel %vm970, %v2060, -inf
        %2062 = vmax.xlane.f32.xlu0 %v2061
        %v2063 = vpop.xlane.xlu0 %2062
        %v2064 = vsub.f32 %v2060, %v2063
        %v2065 = vmul.f32 %v2064, 1.442695
        %v2066 = vpow.pop %v2065
        %v2067 = vsel %vm970, %v2066, 0.0
        %2068 = vadd.xlane.f32.xlu0 %v2067
        %v2069 = vpop.xlane.xlu0 %2068
        %v2070 = vrcp.pop %v2069
        %v2071 = vmul.f32 %v2066, %v2070
        %2072 = vrot.lane.b32.xlu0 %v1737, 32
        %v2073 = vpop.permute.xlu0 %2072
        %v2076 = vsel %vm970, %v2071, 0
        %2078 = vmatpush.msra.mxu0 0.0
        %2079 = vmatpush.msra.mxu0 0.0
        %2080 = vmatpush.msra.mxu0 0.0
        %2081 = vmatpush.msra.mxu0 0.0
        %2082 = vmatpush.msra.mxu0 0.0
        %2083 = vmatpush.msra.mxu0 0.0
        %2084 = vmatpush.msra.mxu0 0.0
        %2085 = vmatpush.msra.mxu0 0.0
        %2086 = vmatpush.msra.mxu0 0.0
        %2087 = vmatpush.msra.mxu0 0.0
        %2088 = vmatpush.msra.mxu0 0.0
        %2089 = vmatpush.msra.mxu0 0.0
        %2090 = vmatpush.msra.mxu0 0.0
        %2091 = vmatpush.msra.mxu0 0.0
        %2092 = vmatpush.msra.mxu0 0.0
        %2093 = vmatpush.msra.mxu0 %v2073
        %2094 = vmatmul.f32.gmra.mxu0 %v2076
        %v2095 = vpop.f32.mrf.mxu0
        %v2096 = vadd.f32 0.0, %v2095
        %2097 = vdwg.mxu0
        %v2099 = vsel %vm944, %v2096, 0
        %2101 = vmatpush.msra.mxu0 0.0
        %2102 = vmatpush.msra.mxu0 0.0
        %2103 = vmatpush.msra.mxu0 0.0
        %2104 = vmatpush.msra.mxu0 0.0
        %2105 = vmatpush.msra.mxu0 0.0
        %2106 = vmatpush.msra.mxu0 0.0
        %2107 = vmatpush.msra.mxu0 0.0
        %2108 = vmatpush.msra.mxu0 0.0
        %2109 = vmatpush.msra.mxu0 0.0
        %2110 = vmatpush.msra.mxu0 0.0
        %2111 = vmatpush.msra.mxu0 0.0
        %2112 = vmatpush.msra.mxu0 0.0
        %2113 = vmatpush.msra.mxu0 %v1778
        %2114 = vmatpush.msra.mxu0 %v1777
        %2115 = vmatpush.msra.mxu0 %v1776
        %2116 = vmatpush.msra.mxu0 %v1775
        %2117 = vmatmul.f32.gmra.mxu0 %v2099
        %v2118 = vpop.f32.mrf.mxu0
        %v2119 = vadd.f32 0.0, %v2118
        %2120 = vdwg.mxu0
        %v2121 = vadd.f32 %v2034, %v2119
        %v2122 = vadd.f32 %v1632, %v2121
        %s2123 = scalar_lea.vmem %s8, 1
        %v2124 = vld [vmem:[%s2123] sm:$0x1]
        %v2126 = vperm.slane %v2124, 0
        %v2128 = vadd.f32 %v2122, %v2126
        %s2129 = scalar_lea.vmem %s15, 1
        %v2130 = vld [vmem:[%s2129] sm:$0x1]
        %s2131 = scalar_lea.vmem %s16, 1
        %v2132 = vld [vmem:[%s2131] sm:$0x1]
        %2133 = vadd.xlane.f32.xlu0 %v2128
        %v2134 = vpop.xlane.xlu0 %2133
        %v2135 = vmul.f32 %v2134, %v806
        %v2136 = vsub.f32 %v2128, %v2135
        %v2137 = vmul.f32 %v2136, %v2136
        %2138 = vadd.xlane.f32.xlu0 %v2137
        %v2139 = vpop.xlane.xlu0 %2138
        %v2140 = vmul.f32 %v2139, %v806
        %v2141 = vadd.f32 %v2140, 1e-05
        %v2142 = vrsqrt.pop %v2141
        %v2143 = vmul.f32 %v2142, %v2141
        %v2144 = vmul.f32 %v2143, %v2142
        %v2145 = vmul.f32 0.5, %v2144
        %v2146 = vsub.f32 1.5, %v2145
        %v2147 = vmul.f32 %v2142, %v2146
        %vm2148 = vweird.f32 %v2141
        %vm2149 = vweird.f32 %v2142
        %vm2150 = vmor %vm2148, %vm2149
        %v2151 = vsel %vm2150, %v2142, %v2147
        %v2152 = vmul.f32 %v2136, %v2151
        %v2154 = vperm.slane %v2130, 0
        %v2156 = vmul.f32 %v2152, %v2154
        %v2158 = vperm.slane %v2132, 0
        %v2160 = vadd.f32 %v2156, %v2158
        %s2161 = scalar_lea.vmem [#allocation10], 512
        %v2162 = vld [vmem:[%s2161] sm:$0xff]
        %v2163 = vld [vmem:[%s2161 + $0x8] sm:$0xff]
        %v2164 = vld [vmem:[%s2161 + $0x10] sm:$0xff]
        %v2165 = vld [vmem:[%s2161 + $0x18] sm:$0xff]
        %v2166 = vld [vmem:[%s2161 + $0x20] sm:$0xff]
        %v2167 = vld [vmem:[%s2161 + $0x28] sm:$0xff]
        %v2168 = vld [vmem:[%s2161 + $0x30] sm:$0xff]
        %v2169 = vld [vmem:[%s2161 + $0x38] sm:$0xff]
        %v2170 = vld [vmem:[%s2161 + $0x40] sm:$0xff]
        %v2171 = vld [vmem:[%s2161 + $0x48] sm:$0xff]
        %v2172 = vld [vmem:[%s2161 + $0x50] sm:$0xff]
        %v2173 = vld [vmem:[%s2161 + $0x58] sm:$0xff]
        %v2174 = vld [vmem:[%s2161 + $0x60] sm:$0xff]
        %v2175 = vld [vmem:[%s2161 + $0x68] sm:$0xff]
        %v2176 = vld [vmem:[%s2161 + $0x70] sm:$0xff]
        %v2177 = vld [vmem:[%s2161 + $0x78] sm:$0xff]
        %v2178 = vld [vmem:[%s2161 + $0x80] sm:$0xff]
        %v2179 = vld [vmem:[%s2161 + $0x88] sm:$0xff]
        %v2180 = vld [vmem:[%s2161 + $0x90] sm:$0xff]
        %v2181 = vld [vmem:[%s2161 + $0x98] sm:$0xff]
        %v2182 = vld [vmem:[%s2161 + $0xa0] sm:$0xff]
        %v2183 = vld [vmem:[%s2161 + $0xa8] sm:$0xff]
        %v2184 = vld [vmem:[%s2161 + $0xb0] sm:$0xff]
        %v2185 = vld [vmem:[%s2161 + $0xb8] sm:$0xff]
        %v2186 = vld [vmem:[%s2161 + $0xc0] sm:$0xff]
        %v2187 = vld [vmem:[%s2161 + $0xc8] sm:$0xff]
        %v2188 = vld [vmem:[%s2161 + $0xd0] sm:$0xff]
        %v2189 = vld [vmem:[%s2161 + $0xd8] sm:$0xff]
        %v2190 = vld [vmem:[%s2161 + $0xe0] sm:$0xff]
        %v2191 = vld [vmem:[%s2161 + $0xe8] sm:$0xff]
        %v2192 = vld [vmem:[%s2161 + $0xf0] sm:$0xff]
        %v2193 = vld [vmem:[%s2161 + $0xf8] sm:$0xff]
        %v2194 = vld [vmem:[%s2161 + $0x100] sm:$0xff]
        %v2195 = vld [vmem:[%s2161 + $0x108] sm:$0xff]
        %v2196 = vld [vmem:[%s2161 + $0x110] sm:$0xff]
        %v2197 = vld [vmem:[%s2161 + $0x118] sm:$0xff]
        %v2198 = vld [vmem:[%s2161 + $0x120] sm:$0xff]
        %v2199 = vld [vmem:[%s2161 + $0x128] sm:$0xff]
        %v2200 = vld [vmem:[%s2161 + $0x130] sm:$0xff]
        %v2201 = vld [vmem:[%s2161 + $0x138] sm:$0xff]
        %v2202 = vld [vmem:[%s2161 + $0x140] sm:$0xff]
        %v2203 = vld [vmem:[%s2161 + $0x148] sm:$0xff]
        %v2204 = vld [vmem:[%s2161 + $0x150] sm:$0xff]
        %v2205 = vld [vmem:[%s2161 + $0x158] sm:$0xff]
        %v2206 = vld [vmem:[%s2161 + $0x160] sm:$0xff]
        %v2207 = vld [vmem:[%s2161 + $0x168] sm:$0xff]
        %v2208 = vld [vmem:[%s2161 + $0x170] sm:$0xff]
        %v2209 = vld [vmem:[%s2161 + $0x178] sm:$0xff]
        %v2210 = vld [vmem:[%s2161 + $0x180] sm:$0xff]
        %v2211 = vld [vmem:[%s2161 + $0x188] sm:$0xff]
        %v2212 = vld [vmem:[%s2161 + $0x190] sm:$0xff]
        %v2213 = vld [vmem:[%s2161 + $0x198] sm:$0xff]
        %v2214 = vld [vmem:[%s2161 + $0x1a0] sm:$0xff]
        %v2215 = vld [vmem:[%s2161 + $0x1a8] sm:$0xff]
        %v2216 = vld [vmem:[%s2161 + $0x1b0] sm:$0xff]
        %v2217 = vld [vmem:[%s2161 + $0x1b8] sm:$0xff]
        %v2218 = vld [vmem:[%s2161 + $0x1c0] sm:$0xff]
        %v2219 = vld [vmem:[%s2161 + $0x1c8] sm:$0xff]
        %v2220 = vld [vmem:[%s2161 + $0x1d0] sm:$0xff]
        %v2221 = vld [vmem:[%s2161 + $0x1d8] sm:$0xff]
        %v2222 = vld [vmem:[%s2161 + $0x1e0] sm:$0xff]
        %v2223 = vld [vmem:[%s2161 + $0x1e8] sm:$0xff]
        %v2224 = vld [vmem:[%s2161 + $0x1f0] sm:$0xff]
        %v2225 = vld [vmem:[%s2161 + $0x1f8] sm:$0xff]
        %s2226 = scalar_lea.vmem %s10, 4
        %v2227 = vld [vmem:[%s2226] sm:$0xf]
        %v2229 = vperm.slane %v2227, 0
        %v2230 = vperm.slane %v2227, 1
        %v2231 = vperm.slane %v2227, 2
        %v2232 = vperm.slane %v2227, 3
        %2237 = vmatpush.msra.mxu0 %v2222
        %2238 = vmatpush.msra.mxu0 %v2218
        %2239 = vmatpush.msra.mxu0 %v2214
        %2240 = vmatpush.msra.mxu0 %v2210
        %2241 = vmatpush.msra.mxu0 %v2206
        %2242 = vmatpush.msra.mxu0 %v2202
        %2243 = vmatpush.msra.mxu0 %v2198
        %2244 = vmatpush.msra.mxu0 %v2194
        %2245 = vmatpush.msra.mxu0 %v2190
        %2246 = vmatpush.msra.mxu0 %v2186
        %2247 = vmatpush.msra.mxu0 %v2182
        %2248 = vmatpush.msra.mxu0 %v2178
        %2249 = vmatpush.msra.mxu0 %v2174
        %2250 = vmatpush.msra.mxu0 %v2170
        %2251 = vmatpush.msra.mxu0 %v2166
        %2252 = vmatpush.msra.mxu0 %v2162
        %2253 = vmatmul.f32.gmra.mxu0 %v2160
        %v2254 = vpop.f32.mrf.mxu0
        %v2255 = vadd.f32 %v2229, %v2254
        %2256 = vdwg.mxu0
        %2257 = vmatpush.msra.mxu0 %v2223
        %2258 = vmatpush.msra.mxu0 %v2219
        %2259 = vmatpush.msra.mxu0 %v2215
        %2260 = vmatpush.msra.mxu0 %v2211
        %2261 = vmatpush.msra.mxu0 %v2207
        %2262 = vmatpush.msra.mxu0 %v2203
        %2263 = vmatpush.msra.mxu0 %v2199
        %2264 = vmatpush.msra.mxu0 %v2195
        %2265 = vmatpush.msra.mxu0 %v2191
        %2266 = vmatpush.msra.mxu0 %v2187
        %2267 = vmatpush.msra.mxu0 %v2183
        %2268 = vmatpush.msra.mxu0 %v2179
        %2269 = vmatpush.msra.mxu0 %v2175
        %2270 = vmatpush.msra.mxu0 %v2171
        %2271 = vmatpush.msra.mxu0 %v2167
        %2272 = vmatpush.msra.mxu0 %v2163
        %2273 = vmatmul.f32.gmra.mxu0 %v2160
        %v2274 = vpop.f32.mrf.mxu0
        %v2275 = vadd.f32 %v2230, %v2274
        %2276 = vdwg.mxu0
        %2277 = vmatpush.msra.mxu0 %v2224
        %2278 = vmatpush.msra.mxu0 %v2220
        %2279 = vmatpush.msra.mxu0 %v2216
        %2280 = vmatpush.msra.mxu0 %v2212
        %2281 = vmatpush.msra.mxu0 %v2208
        %2282 = vmatpush.msra.mxu0 %v2204
        %2283 = vmatpush.msra.mxu0 %v2200
        %2284 = vmatpush.msra.mxu0 %v2196
        %2285 = vmatpush.msra.mxu0 %v2192
        %2286 = vmatpush.msra.mxu0 %v2188
        %2287 = vmatpush.msra.mxu0 %v2184
        %2288 = vmatpush.msra.mxu0 %v2180
        %2289 = vmatpush.msra.mxu0 %v2176
        %2290 = vmatpush.msra.mxu0 %v2172
        %2291 = vmatpush.msra.mxu0 %v2168
        %2292 = vmatpush.msra.mxu0 %v2164
        %2293 = vmatmul.f32.gmra.mxu0 %v2160
        %v2294 = vpop.f32.mrf.mxu0
        %v2295 = vadd.f32 %v2231, %v2294
        %2296 = vdwg.mxu0
        %2297 = vmatpush.msra.mxu0 %v2225
        %2298 = vmatpush.msra.mxu0 %v2221
        %2299 = vmatpush.msra.mxu0 %v2217
        %2300 = vmatpush.msra.mxu0 %v2213
        %2301 = vmatpush.msra.mxu0 %v2209
        %2302 = vmatpush.msra.mxu0 %v2205
        %2303 = vmatpush.msra.mxu0 %v2201
        %2304 = vmatpush.msra.mxu0 %v2197
        %2305 = vmatpush.msra.mxu0 %v2193
        %2306 = vmatpush.msra.mxu0 %v2189
        %2307 = vmatpush.msra.mxu0 %v2185
        %2308 = vmatpush.msra.mxu0 %v2181
        %2309 = vmatpush.msra.mxu0 %v2177
        %2310 = vmatpush.msra.mxu0 %v2173
        %2311 = vmatpush.msra.mxu0 %v2169
        %2312 = vmatpush.msra.mxu0 %v2165
        %2313 = vmatmul.f32.gmra.mxu0 %v2160
        %v2314 = vpop.f32.mrf.mxu0
        %v2315 = vadd.f32 %v2232, %v2314
        %2316 = vdwg.mxu0
        %v2317 = vmax.f32 %v2255, 0.0
        %v2318 = vmax.f32 %v2275, 0.0
        %v2319 = vmax.f32 %v2295, 0.0
        %v2320 = vmax.f32 %v2315, 0.0
        %s2321 = scalar_lea.vmem [#allocation11], 512
        %v2322 = vld [vmem:[%s2321] sm:$0xff]
        %v2323 = vld [vmem:[%s2321 + $0x8] sm:$0xff]
        %v2324 = vld [vmem:[%s2321 + $0x10] sm:$0xff]
        %v2325 = vld [vmem:[%s2321 + $0x18] sm:$0xff]
        %v2326 = vld [vmem:[%s2321 + $0x20] sm:$0xff]
        %v2327 = vld [vmem:[%s2321 + $0x28] sm:$0xff]
        %v2328 = vld [vmem:[%s2321 + $0x30] sm:$0xff]
        %v2329 = vld [vmem:[%s2321 + $0x38] sm:$0xff]
        %v2330 = vld [vmem:[%s2321 + $0x40] sm:$0xff]
        %v2331 = vld [vmem:[%s2321 + $0x48] sm:$0xff]
        %v2332 = vld [vmem:[%s2321 + $0x50] sm:$0xff]
        %v2333 = vld [vmem:[%s2321 + $0x58] sm:$0xff]
        %v2334 = vld [vmem:[%s2321 + $0x60] sm:$0xff]
        %v2335 = vld [vmem:[%s2321 + $0x68] sm:$0xff]
        %v2336 = vld [vmem:[%s2321 + $0x70] sm:$0xff]
        %v2337 = vld [vmem:[%s2321 + $0x78] sm:$0xff]
        %v2338 = vld [vmem:[%s2321 + $0x80] sm:$0xff]
        %v2339 = vld [vmem:[%s2321 + $0x88] sm:$0xff]
        %v2340 = vld [vmem:[%s2321 + $0x90] sm:$0xff]
        %v2341 = vld [vmem:[%s2321 + $0x98] sm:$0xff]
        %v2342 = vld [vmem:[%s2321 + $0xa0] sm:$0xff]
        %v2343 = vld [vmem:[%s2321 + $0xa8] sm:$0xff]
        %v2344 = vld [vmem:[%s2321 + $0xb0] sm:$0xff]
        %v2345 = vld [vmem:[%s2321 + $0xb8] sm:$0xff]
        %v2346 = vld [vmem:[%s2321 + $0xc0] sm:$0xff]
        %v2347 = vld [vmem:[%s2321 + $0xc8] sm:$0xff]
        %v2348 = vld [vmem:[%s2321 + $0xd0] sm:$0xff]
        %v2349 = vld [vmem:[%s2321 + $0xd8] sm:$0xff]
        %v2350 = vld [vmem:[%s2321 + $0xe0] sm:$0xff]
        %v2351 = vld [vmem:[%s2321 + $0xe8] sm:$0xff]
        %v2352 = vld [vmem:[%s2321 + $0xf0] sm:$0xff]
        %v2353 = vld [vmem:[%s2321 + $0xf8] sm:$0xff]
        %v2354 = vld [vmem:[%s2321 + $0x100] sm:$0xff]
        %v2355 = vld [vmem:[%s2321 + $0x108] sm:$0xff]
        %v2356 = vld [vmem:[%s2321 + $0x110] sm:$0xff]
        %v2357 = vld [vmem:[%s2321 + $0x118] sm:$0xff]
        %v2358 = vld [vmem:[%s2321 + $0x120] sm:$0xff]
        %v2359 = vld [vmem:[%s2321 + $0x128] sm:$0xff]
        %v2360 = vld [vmem:[%s2321 + $0x130] sm:$0xff]
        %v2361 = vld [vmem:[%s2321 + $0x138] sm:$0xff]
        %v2362 = vld [vmem:[%s2321 + $0x140] sm:$0xff]
        %v2363 = vld [vmem:[%s2321 + $0x148] sm:$0xff]
        %v2364 = vld [vmem:[%s2321 + $0x150] sm:$0xff]
        %v2365 = vld [vmem:[%s2321 + $0x158] sm:$0xff]
        %v2366 = vld [vmem:[%s2321 + $0x160] sm:$0xff]
        %v2367 = vld [vmem:[%s2321 + $0x168] sm:$0xff]
        %v2368 = vld [vmem:[%s2321 + $0x170] sm:$0xff]
        %v2369 = vld [vmem:[%s2321 + $0x178] sm:$0xff]
        %v2370 = vld [vmem:[%s2321 + $0x180] sm:$0xff]
        %v2371 = vld [vmem:[%s2321 + $0x188] sm:$0xff]
        %v2372 = vld [vmem:[%s2321 + $0x190] sm:$0xff]
        %v2373 = vld [vmem:[%s2321 + $0x198] sm:$0xff]
        %v2374 = vld [vmem:[%s2321 + $0x1a0] sm:$0xff]
        %v2375 = vld [vmem:[%s2321 + $0x1a8] sm:$0xff]
        %v2376 = vld [vmem:[%s2321 + $0x1b0] sm:$0xff]
        %v2377 = vld [vmem:[%s2321 + $0x1b8] sm:$0xff]
        %v2378 = vld [vmem:[%s2321 + $0x1c0] sm:$0xff]
        %v2379 = vld [vmem:[%s2321 + $0x1c8] sm:$0xff]
        %v2380 = vld [vmem:[%s2321 + $0x1d0] sm:$0xff]
        %v2381 = vld [vmem:[%s2321 + $0x1d8] sm:$0xff]
        %v2382 = vld [vmem:[%s2321 + $0x1e0] sm:$0xff]
        %v2383 = vld [vmem:[%s2321 + $0x1e8] sm:$0xff]
        %v2384 = vld [vmem:[%s2321 + $0x1f0] sm:$0xff]
        %v2385 = vld [vmem:[%s2321 + $0x1f8] sm:$0xff]
        %2386 = vmatpush.msra.mxu0 %v2337
        %2387 = vmatpush.msra.mxu0 %v2336
        %2388 = vmatpush.msra.mxu0 %v2335
        %2389 = vmatpush.msra.mxu0 %v2334
        %2390 = vmatpush.msra.mxu0 %v2333
        %2391 = vmatpush.msra.mxu0 %v2332
        %2392 = vmatpush.msra.mxu0 %v2331
        %2393 = vmatpush.msra.mxu0 %v2330
        %2394 = vmatpush.msra.mxu0 %v2329
        %2395 = vmatpush.msra.mxu0 %v2328
        %2396 = vmatpush.msra.mxu0 %v2327
        %2397 = vmatpush.msra.mxu0 %v2326
        %2398 = vmatpush.msra.mxu0 %v2325
        %2399 = vmatpush.msra.mxu0 %v2324
        %2400 = vmatpush.msra.mxu0 %v2323
        %2401 = vmatpush.msra.mxu0 %v2322
        %2402 = vmatmul.f32.gmra.mxu0 %v2317
        %v2403 = vpop.f32.mrf.mxu0
        %v2404 = vadd.f32 0.0, %v2403
        %2405 = vdwg.mxu0
        %2406 = vmatpush.msra.mxu0 %v2353
        %2407 = vmatpush.msra.mxu0 %v2352
        %2408 = vmatpush.msra.mxu0 %v2351
        %2409 = vmatpush.msra.mxu0 %v2350
        %2410 = vmatpush.msra.mxu0 %v2349
        %2411 = vmatpush.msra.mxu0 %v2348
        %2412 = vmatpush.msra.mxu0 %v2347
        %2413 = vmatpush.msra.mxu0 %v2346
        %2414 = vmatpush.msra.mxu0 %v2345
        %2415 = vmatpush.msra.mxu0 %v2344
        %2416 = vmatpush.msra.mxu0 %v2343
        %2417 = vmatpush.msra.mxu0 %v2342
        %2418 = vmatpush.msra.mxu0 %v2341
        %2419 = vmatpush.msra.mxu0 %v2340
        %2420 = vmatpush.msra.mxu0 %v2339
        %2421 = vmatpush.msra.mxu0 %v2338
        %2422 = vmatmul.f32.gmra.mxu0 %v2318
        %v2423 = vpop.f32.mrf.mxu0
        %v2424 = vadd.f32 %v2404, %v2423
        %2425 = vdwg.mxu0
        %2426 = vmatpush.msra.mxu0 %v2369
        %2427 = vmatpush.msra.mxu0 %v2368
        %2428 = vmatpush.msra.mxu0 %v2367
        %2429 = vmatpush.msra.mxu0 %v2366
        %2430 = vmatpush.msra.mxu0 %v2365
        %2431 = vmatpush.msra.mxu0 %v2364
        %2432 = vmatpush.msra.mxu0 %v2363
        %2433 = vmatpush.msra.mxu0 %v2362
        %2434 = vmatpush.msra.mxu0 %v2361
        %2435 = vmatpush.msra.mxu0 %v2360
        %2436 = vmatpush.msra.mxu0 %v2359
        %2437 = vmatpush.msra.mxu0 %v2358
        %2438 = vmatpush.msra.mxu0 %v2357
        %2439 = vmatpush.msra.mxu0 %v2356
        %2440 = vmatpush.msra.mxu0 %v2355
        %2441 = vmatpush.msra.mxu0 %v2354
        %2442 = vmatmul.f32.gmra.mxu0 %v2319
        %v2443 = vpop.f32.mrf.mxu0
        %v2444 = vadd.f32 %v2424, %v2443
        %2445 = vdwg.mxu0
        %2446 = vmatpush.msra.mxu0 %v2385
        %2447 = vmatpush.msra.mxu0 %v2384
        %2448 = vmatpush.msra.mxu0 %v2383
        %2449 = vmatpush.msra.mxu0 %v2382
        %2450 = vmatpush.msra.mxu0 %v2381
        %2451 = vmatpush.msra.mxu0 %v2380
        %2452 = vmatpush.msra.mxu0 %v2379
        %2453 = vmatpush.msra.mxu0 %v2378
        %2454 = vmatpush.msra.mxu0 %v2377
        %2455 = vmatpush.msra.mxu0 %v2376
        %2456 = vmatpush.msra.mxu0 %v2375
        %2457 = vmatpush.msra.mxu0 %v2374
        %2458 = vmatpush.msra.mxu0 %v2373
        %2459 = vmatpush.msra.mxu0 %v2372
        %2460 = vmatpush.msra.mxu0 %v2371
        %2461 = vmatpush.msra.mxu0 %v2370
        %2462 = vmatmul.f32.gmra.mxu0 %v2320
        %v2463 = vpop.f32.mrf.mxu0
        %v2464 = vadd.f32 %v2444, %v2463
        %2465 = vdwg.mxu0
        %v2466 = vadd.f32 %v2128, %v2464
        %s2467 = scalar_lea.vmem %s12, 1
        %v2468 = vld [vmem:[%s2467] sm:$0x1]
        %v2470 = vperm.slane %v2468, 0
        %v2472 = vadd.f32 %v2466, %v2470
        %v2473 = vld [vmem:[%s17] sm:$0x1]
        %v2474 = vld [vmem:[%s18] sm:$0x1]
        %2475 = vadd.xlane.f32.xlu0 %v2472
        %v2476 = vpop.xlane.xlu0 %2475
        %v2477 = vmul.f32 %v2476, %v806
        %v2478 = vsub.f32 %v2472, %v2477
        %v2479 = vmul.f32 %v2478, %v2478
        %2480 = vadd.xlane.f32.xlu0 %v2479
        %v2481 = vpop.xlane.xlu0 %2480
        %v2482 = vmul.f32 %v2481, %v806
        %v2483 = vadd.f32 %v2482, 1e-05
        %v2484 = vrsqrt.pop %v2483
        %v2485 = vmul.f32 %v2484, %v2483
        %v2486 = vmul.f32 %v2485, %v2484
        %v2487 = vmul.f32 0.5, %v2486
        %v2488 = vsub.f32 1.5, %v2487
        %v2489 = vmul.f32 %v2484, %v2488
        %vm2490 = vweird.f32 %v2483
        %vm2491 = vweird.f32 %v2484
        %vm2492 = vmor %vm2490, %vm2491
        %v2493 = vsel %vm2492, %v2484, %v2489
        %v2494 = vmul.f32 %v2478, %v2493
        %v2496 = vperm.slane %v2473, 0
        %v2498 = vmul.f32 %v2494, %v2496
        %v2500 = vperm.slane %v2474, 0
        %v2502 = vadd.f32 %v2498, %v2500
        %v2503 = vld [vmem:[%s19] sm:$0xff]
        %v2504 = vld [vmem:[%s19 + $0x8] sm:$0xff]
        %v2505 = vld [vmem:[%s19 + $0x10] sm:$0xff]
        %v2506 = vld [vmem:[%s19 + $0x18] sm:$0xff]
        %v2507 = vld [vmem:[%s19 + $0x20] sm:$0xff]
        %v2508 = vld [vmem:[%s19 + $0x28] sm:$0xff]
        %v2509 = vld [vmem:[%s19 + $0x30] sm:$0xff]
        %v2510 = vld [vmem:[%s19 + $0x38] sm:$0xff]
        %v2511 = vld [vmem:[%s19 + $0x40] sm:$0xff]
        %v2512 = vld [vmem:[%s19 + $0x48] sm:$0xff]
        %v2513 = vld [vmem:[%s19 + $0x50] sm:$0xff]
        %v2514 = vld [vmem:[%s19 + $0x58] sm:$0xff]
        %v2515 = vld [vmem:[%s19 + $0x60] sm:$0xff]
        %v2516 = vld [vmem:[%s19 + $0x68] sm:$0xff]
        %v2517 = vld [vmem:[%s19 + $0x70] sm:$0xff]
        %v2518 = vld [vmem:[%s19 + $0x78] sm:$0xff]
        %v2519 = vld [vmem:[%s20] sm:$0x1]
        %v2521 = vperm.slane %v2519, 0
        %2523 = vmatpush.msra.mxu0 %v2518
        %2524 = vmatpush.msra.mxu0 %v2517
        %2525 = vmatpush.msra.mxu0 %v2516
        %2526 = vmatpush.msra.mxu0 %v2515
        %2527 = vmatpush.msra.mxu0 %v2514
        %2528 = vmatpush.msra.mxu0 %v2513
        %2529 = vmatpush.msra.mxu0 %v2512
        %2530 = vmatpush.msra.mxu0 %v2511
        %2531 = vmatpush.msra.mxu0 %v2510
        %2532 = vmatpush.msra.mxu0 %v2509
        %2533 = vmatpush.msra.mxu0 %v2508
        %2534 = vmatpush.msra.mxu0 %v2507
        %2535 = vmatpush.msra.mxu0 %v2506
        %2536 = vmatpush.msra.mxu0 %v2505
        %2537 = vmatpush.msra.mxu0 %v2504
        %2538 = vmatpush.msra.mxu0 %v2503
        %2539 = vmatmul.f32.gmra.mxu0 %v2502
        %v2540 = vpop.f32.mrf.mxu0
        %v2541 = vadd.f32 %v2521, %v2540
        %2542 = vdwg.mxu0
        %2543 = vst [vmem:[%s758] sm:$0xff] %v2541
        %s2544 = sand.u32 %s498, 1
        %s2545 = scalar_lea.sflag [#allocation4], %s2544
        %s2546 = sand.u32 %s498, 1
        %s2547 = smul.addr %s2546, 8
        %s2548 = scalar_lea.vmem [#allocation13], %s2547
        // Predicated region
        $region129: #{language_model_forward.1} parent=103 // pred_check
          %p2549 = pneg %p508
        $region130: #{language_model_forward.1} parent=103 // pred_check_branch
          %2551 = sbr.rel (%p2549) target = $region132
        $region131: #{language_model_forward.1} parent=103 // pred_region
          %2553 = vsyncadd %s2545, 0
          %s2554 = smul.addr %s39, 8
          %s2555 = scalar_lea.hbm %s21, %s2554
          %s2557 = sshll.u32 %s2548, 4
          %s2558 = int_to_ptr.vmem [resolvable:$true] %s2557
          %s2559 = sshll.u32 %s2555, 4
          %s2560 = int_to_ptr.hbm [resolvable:$true] %s2559
          %2562 = dma.vmem_to_hbm [thread:$0]  %s2558, 128, %s2560, %s2545
        $region132: #{language_model_forward.1} parent=103 // pred_fallthru
          _
      $region104: #{language_model_forward.1} parent=5 // pred_fallthru
        _
      %p2563 = scmp.le.s32.totalorder 2, %s34
      // Predicated region
      $region133: #{language_model_forward.1} parent=5 // pred_check
        %p2564 = pneg %p2563
      $region134: #{language_model_forward.1} parent=5 // pred_check_branch
        %2566 = sbr.rel (%p2564) target = $region136
      $region135: #{language_model_forward.1} parent=5 // pred_region
        %s2567 = ssub.s32 %s34, 2
        // Predicated region
        $region137: #{language_model_forward.1} parent=135 // pred_check
          %p2568 = pneg %p514
        $region138: #{language_model_forward.1} parent=135 // pred_check_branch
          %2570 = sbr.rel (%p2568) target = $region140
        $region139: #{language_model_forward.1} parent=135 // pred_region
          %s2571 = sand.u32 %s499, 1
          %s2572 = scalar_lea.sflag [#allocation4], %s2571
          %s2573 = sand.u32 %s499, 1
          %s2574 = smul.addr %s2573, 8
          %s2575 = scalar_lea.vmem [#allocation13], %s2574
          %2577 = dma.done %s2572, 128
        $region140: #{language_model_forward.1} parent=135 // pred_fallthru
          _
      $region136: #{language_model_forward.1} parent=5 // pred_fallthru
        _
    $region6: #{language_model_forward.1} parent=1 // loop_footer
      %s38 = sadd.s32 1, %s34
    $region7: #{language_model_forward.1} parent=1 // loop_footer_branch
      %33 = sbr.rel target = $region3
    $region8: #{language_model_forward.1} parent=1 // loop_exit
      _
    %2578 = vsyncpa [#allocation3], 1
    %s2579 = scalar_lea.sflag [#allocation3], 1
    %2580 = vsyncpa %s2579, 1
    %2581 = vsyncpa [#allocation6], 1
    %2582 = vsyncpa [#allocation9], 1
    %2583 = vsyncpa [#allocation12], 1
    %2584 = vsyncpa [#allocation4], 1
    %s2585 = scalar_lea.sflag [#allocation4], 1
    %2586 = vsyncpa %s2585, 1

</llo_original>
